<compile_context>
chip_gen: v5e
topology: v5e:2x2
jax: 0.10.0
libtpu: 0.0.40
codegen_flags: <defaults>
</compile_context>

<pallas_src>
import functools

import jax
import jax.numpy as jnp
import numpy as np
from jax.experimental import pallas as pl
from jax.experimental.pallas import tpu as pltpu

LANE = 128
SUBLANE = 8


def _round_up(x, m):
    return (x + m - 1) // m * m


def _vmem_capacity_bytes():
    """Physical VMEM per core; falls back to the smallest current part (v7x)."""
    try:
        info = pltpu.get_tpu_info()
        cap = getattr(info, "vmem_capacity_bytes", None)
        if cap:
            return int(cap)
    except Exception:
        pass
    return 64 * 1024 * 1024


def _fused_dwconv_kernel(x_ref, w_ref, b_ref, o_ref, *, TH, W, pad, segments,
                         resident):
    """One (batch, H-tile) grid step of the fused multi-scale depthwise conv.

    x_ref: (rows, Wp, C) spatially padded rows available to this step
           resident=True : rows = Hp  (whole padded image, VMEM-resident per b)
           resident=False: rows = TH + 2*pad (halo'd tile only)
    w_ref: (K, K, C) f32  fused per-channel taps (small-k groups centred in the
                          Kmax window, zeros elsewhere; channels lane-padded)
    b_ref: (1, C)   f32  fused per-channel bias
    o_ref: (TH, W, C)    output H-tile

    `segments` is a static tuple of (c_lo, c_hi, d_max): the 128-lane channel
    chunk [c_lo, c_hi) only has non-zero taps inside its (2*d_max+1)^2 window,
    so the unrolled tap loop skips the structurally-zero FMAs of the Kmax
    fusion.
    """
    if resident:
        base = pl.multiple_of(pl.program_id(1) * TH, TH)
    else:
        base = 0

    for (lo, hi, dmax) in segments:
        cs = hi - lo
        # Bias-initialised f32 accumulator kept as a value chain (vregs, not a
        # VMEM scratch) and stored exactly once per chunk.
        acc = jnp.broadcast_to(b_ref[0, lo:hi], (TH, W, cs))
        for i in range(pad - dmax, pad + dmax + 1):
            # One aligned load per kernel row: full padded width (sublane
            # aligned) and a lane-aligned channel chunk.  The j-shifts below
            # are in-register slices of this slab, so the old 49 unaligned
            # per-tap VMEM loads disappear.
            rows = x_ref[pl.ds(base + i, TH), :, lo:hi].astype(jnp.float32)
            for j in range(pad - dmax, pad + dmax + 1):
                acc = acc + rows[:, j:j + W, :] * w_ref[i, j, lo:hi]
        o_ref[:, :, lo:hi] = acc.astype(o_ref.dtype)


def fused_depthwise_conv2d(x, w_kkc, bias_1c, *, H, W, Wp, K, pad, TH, segments,
                           tiled, out_dtype, vmem_limit):
    """Run the fused multi-scale depthwise conv.

    tiled=False: x is (B, Hp, Wp, C); the padded image of one batch element is
                 VMEM-resident across its H-tiles (index map ignores t).
    tiled=True:  x is (B, n_th, TH+2*pad, Wp, C); each grid step only receives
                 its own halo'd row block (bounded VMEM footprint — needed on
                 v7x for large images).
    """
    C = w_kkc.shape[-1]
    assert H % TH == 0
    if tiled:
        B, n_th, rows, _, _ = x.shape
        x_spec = pl.BlockSpec((None, None, rows, Wp, C),
                              lambda b, t: (b, t, 0, 0, 0))
        dims = ("parallel", "parallel")
    else:
        B, Hp, _, _ = x.shape
        n_th = H // TH
        x_spec = pl.BlockSpec((None, Hp, Wp, C), lambda b, t: (b, 0, 0, 0))
        # Resident image: when B >= 2, expose only the batch axis to the
        # megacore partitioner so both v7x cores don't re-DMA the same image.
        dims = ("parallel", "arbitrary") if B >= 2 else ("parallel", "parallel")

    kernel = functools.partial(_fused_dwconv_kernel, TH=TH, W=W, pad=pad,
                               segments=tuple(segments), resident=not tiled)
    return pl.pallas_call(
        kernel,
        out_shape=jax.ShapeDtypeStruct((B, H, W, C), out_dtype),
        grid=(B, n_th),
        in_specs=[
            x_spec,
            pl.BlockSpec((K, K, C), lambda b, t: (0, 0, 0)),
            pl.BlockSpec((1, C), lambda b, t: (0, 0)),
        ],
        out_specs=pl.BlockSpec((None, TH, W, C), lambda b, t: (b, t, 0, 0)),
        compiler_params=pltpu.CompilerParams(
            dimension_semantics=dims,
            vmem_limit_bytes=int(vmem_limit),
        ),
    )(x, w_kkc, bias_1c)


class MultiScaleDWConvPallas:
    """JAX/Pallas equivalent of the PyTorch MultiScaleDWConv module."""

    def __init__(self, dim, h, w, scale=(1, 3, 5, 7), key=None,
                 dtype=jnp.float32, stream_dtype=None):
        assert all(k % 2 == 1 for k in scale), \
            "'same' padding arithmetic requires odd kernel sizes"
        self.dim = dim
        self.h = h
        self.w = w
        self.scale = tuple(scale)
        self.dtype = dtype
        # Activation streaming dtype: bf16 recommended on v6e/v7x (halves HBM
        # traffic / resident VMEM, accumulation stays f32); keep f32 on v5e
        # (no bf16 VPU) and for bit-exact f32 reference checks.
        self.stream_dtype = dtype if stream_dtype is None else stream_dtype

        n = len(scale)
        self.channels = []
        for i in range(n):
            c = dim - dim // n * (n - 1) if i == 0 else dim // n
            self.channels.append(c)

        self.kmax = max(self.scale)
        self.pad = self.kmax // 2
        self.cpad = _round_up(max(dim, LANE), LANE)

        if key is None:
            key = jax.random.PRNGKey(42)

        # Per-group parameters (torch OIHW layout, used by the XLA reference).
        self.group_weights = []   # (C_g, 1, K_g, K_g)
        self.group_biases = []    # (C_g,)
        for c, k in zip(self.channels, self.scale):
            key, wk, bk = jax.random.split(key, 3)
            bound = 1.0 / np.sqrt(k * k)          # depthwise: fan_in = 1 * k * k
            wg = jax.random.uniform(wk, (c, 1, k, k), dtype=jnp.float32,
                                    minval=-bound, maxval=bound)
            bg = jax.random.uniform(bk, (c,), dtype=jnp.float32,
                                    minval=-bound, maxval=bound)
            self.group_weights.append(wg.astype(dtype))
            self.group_biases.append(bg.astype(dtype))

        # Fused, lane-padded parameters for the Pallas kernel, stored in f32
        # up front (no per-tap casts in the kernel): every group's KxK taps
        # centred inside a Kmax x Kmax window, channels concatenated in split
        # order and zero-padded to a lane multiple.
        wf = np.zeros((self.kmax, self.kmax, self.cpad), dtype=np.float32)
        bf = np.zeros((1, self.cpad), dtype=np.float32)
        starts = []
        c0 = 0
        for c, k, wg, bg in zip(self.channels, self.scale,
                                self.group_weights, self.group_biases):
            starts.append(c0)
            off = (self.kmax - k) // 2
            w_kkc = np.transpose(np.asarray(wg, dtype=np.float32)[:, 0], (1, 2, 0))
            wf[off:off + k, off:off + k, c0:c0 + c] = w_kkc
            bf[0, c0:c0 + c] = np.asarray(bg, dtype=np.float32)
            c0 += c
        self.fused_w = jnp.asarray(wf)            # f32
        self.fused_b = jnp.asarray(bf)            # f32

        # Static zero-tap structure: ring d (Chebyshev distance from the
        # window centre) only has non-zero weights for channels of groups with
        # kernel >= 2d+1.  Per 128-lane chunk, precompute the largest ring it
        # needs; channels below a ring's (lane-rounded) first qualifying group
        # have zero weights there, so skipping those taps is exact.
        c_lo = []
        for d in range(self.pad + 1):
            need = 2 * d + 1
            qual = [s for s, k in zip(starts, self.scale) if k >= need]
            c_lo.append(min(qual) if qual else self.cpad)
        c_lo_lane = [(c // LANE) * LANE for c in c_lo]
        segments = []
        for lo in range(0, self.cpad, LANE):
            hi = min(lo + LANE, self.cpad)
            dmax = max(d for d in range(self.pad + 1) if c_lo_lane[d] <= lo)
            segments.append((lo, hi, dmax))
        self.segments = tuple(segments)

    # ------------------------------------------------------------------ #

    def _plan(self, H, W, Hp, Wp, xbytes, obytes, th_max, force_tiled):
        """Pick (halo-tiled?, TH, vmem_limit) against a per-chip VMEM budget.

        The budget counts the double-buffered input block (dominant term), the
        double-buffered output block and the weights, derived from the actual
        chip's VMEM capacity with headroom for compiler scratch.
        """
        cap = _vmem_capacity_bytes()
        budget = int(cap * 0.6)
        cb = self.cpad
        fixed = 2 * (self.kmax * self.kmax + 1) * cb * 4   # weights + bias (x2)

        def footprint(th, tiled):
            rows_in = (th + 2 * self.pad) if tiled else Hp
            return (fixed
                    + 2 * rows_in * Wp * cb * xbytes        # input block (x2 buffers)
                    + 2 * th * W * cb * obytes)             # output block (x2 buffers)

        divisors = [d for d in range(1, H + 1) if H % d == 0]
        limit = H if th_max is None else max(1, min(H, int(th_max)))
        # Soft cap so each 128-lane chunk's f32 accumulator (TH*W*128*4 B)
        # stays register-resident instead of spilling to VMEM (v5e has a
        # single vector-store slot).
        soft = max(1, (64 * 1024) // max(1, W * LANE * 4))
        target = max(1, min(limit, soft))

        def pick(tiled):
            ok = [d for d in divisors
                  if d <= limit and footprint(d, tiled) <= budget]
            if not ok:
                return None
            under = [d for d in ok if d <= target]
            return max(under) if under else min(ok)

        tiled = bool(force_tiled)
        th = None if tiled else pick(False)
        if th is None:
            tiled = True
            th = pick(True) or 1

        # Headroom below the physical cap (do not pin to exactly 64 MiB on
        # v7x); this also raises the small scoped default on v5e/v6e.
        vmem_limit = int(cap * 0.8)
        return tiled, th, vmem_limit

    # ------------------------------------------------------------------ #

    def __call__(self, x_nchw, *, th_max=None, force_tiled=False):
        B, dim, H, W = x_nchw.shape
        assert dim == self.dim
        pad = self.pad
        Hp = H + 2 * pad
        Wp = _round_up(W + 2 * pad, SUBLANE)      # sublane-aligned padded width

        xbytes = np.dtype(self.stream_dtype).itemsize
        obytes = np.dtype(self.dtype).itemsize
        tiled, th, vmem_limit = self._plan(H, W, Hp, Wp, xbytes, obytes,
                                           th_max, force_tiled)

        # Single NCHW -> NHWC transpose + ONE fused pad for every group:
        # spatial halo for the largest kernel, width to a sublane multiple,
        # channels to a lane multiple (dense, unmasked vector loads/stores).
        # TODO(synk): if the surrounding network can run NHWC end-to-end, drop
        # these layout passes (and the final transpose); the halo could also
        # be produced in-kernel by masking edge taps on the border H-tiles.
        x = jnp.transpose(x_nchw, (0, 2, 3, 1)).astype(self.stream_dtype)
        x = jnp.pad(x, ((0, 0), (pad, pad),
                        (pad, Wp - W - pad), (0, self.cpad - dim)))

        if tiled:
            # Halo-tiled layout: each grid step only gets its own TH + K - 1
            # rows, bounding the VMEM footprint independently of the image
            # size (required on v7x's 64 MiB VMEM for large activations).
            n_th = H // th
            rows = th + 2 * pad
            x = jnp.stack([x[:, t * th: t * th + rows] for t in range(n_th)],
                          axis=1)                 # (B, n_th, rows, Wp, C)

        out = fused_depthwise_conv2d(
            x, self.fused_w, self.fused_b,
            H=H, W=W, Wp=Wp, K=self.kmax, pad=pad, TH=th,
            segments=self.segments, tiled=tiled,
            out_dtype=self.dtype, vmem_limit=vmem_limit)

        # Drop lane padding; single NHWC -> NCHW transpose.  No concat needed:
        # the fused kernel already emits channels in split order.
        return jnp.transpose(out[..., :dim], (0, 3, 1, 2))

    # Pure-JAX reference (XLA grouped conv) for correctness checking.
    def reference(self, x_nchw):
        outs = []
        start = 0
        for c, k, wg, bg in zip(self.channels, self.scale,
                                self.group_weights, self.group_biases):
            feat = x_nchw[:, start:start + c, :, :]
            start += c
            p = k // 2
            o = jax.lax.conv_general_dilated(
                feat, wg, window_strides=(1, 1), padding=[(p, p), (p, p)],
                dimension_numbers=("NCHW", "OIHW", "NCHW"),
                feature_group_count=c)
            outs.append(o + bg[None, :, None, None])
        return jnp.concatenate(outs, axis=1)


if __name__ == "__main__":
    # Primary check: small shapes, resident-image path (auto-planned).
    B, DIM, H, W = 2, 8, 16, 16
    x = jax.random.normal(jax.random.PRNGKey(0), (B, DIM, H, W),
                          dtype=jnp.float32)
    mod = MultiScaleDWConvPallas(DIM, H, W, scale=(1, 3, 5, 7),
                                 key=jax.random.PRNGKey(1))
    ref = jax.block_until_ready(mod.reference(x))

    out = jax.block_until_ready(mod(x))
    assert out.shape == (B, DIM, H, W)
    np.testing.assert_allclose(np.asarray(out), np.asarray(ref),
                               rtol=1e-5, atol=1e-5)

    # Halo-tiled fallback path (the v7x large-activation layout), forced here
    # so it is exercised even at small shapes: 2 H-tiles per batch element.
    out_t = jax.block_until_ready(mod(x, force_tiled=True, th_max=8))
    np.testing.assert_allclose(np.asarray(out_t), np.asarray(ref),
                               rtol=1e-5, atol=1e-5)

    # Multi-segment zero-tap elimination path: dim=192 gives two 128-lane
    # chunks with different tap windows (5x5 and 7x7) and non-lane-aligned
    # group boundaries, validating the per-chunk ring restriction.
    B2, DIM2 = 1, 192
    x2 = jax.random.normal(jax.random.PRNGKey(2), (B2, DIM2, H, W),
                           dtype=jnp.float32)
    mod2 = MultiScaleDWConvPallas(DIM2, H, W, key=jax.random.PRNGKey(3))
    out2 = jax.block_until_ready(mod2(x2))
    ref2 = jax.block_until_ready(mod2.reference(x2))
    np.testing.assert_allclose(np.asarray(out2), np.asarray(ref2),
                               rtol=1e-5, atol=1e-5)

    print("KERNEL_OK")
</pallas_src>

<mosaic_0001>
module attributes {stable_mosaic.version = 11 : i64} {
  func.func @_fused_dwconv_kernel(%arg0: i32, %arg1: i32, %arg2: memref<1x22x24x128xf32, #tpu.memory_space<vmem>>, %arg3: memref<7x7x128xf32, #tpu.memory_space<vmem>>, %arg4: memref<1x128xf32, #tpu.memory_space<vmem>>, %arg5: memref<1x8x16x128xf32, #tpu.memory_space<vmem>>) attributes {dimension_semantics = [#tpu.dimension_semantics<parallel>, #tpu.dimension_semantics<arbitrary>], iteration_bounds = array<i64: 2, 2>, scalar_prefetch = 0 : i64, scratch_operands = 0 : i64, tpu.core_type = #tpu.core_type<tc>, window_params = [{transform_indices = @transform_0, window_bounds = array<i64: 1, 22, 24, 128>}, {pipeline_mode = #tpu.pipeline_mode<synchronous>, transform_indices = @transform_1, window_bounds = array<i64: 7, 7, 128>}, {pipeline_mode = #tpu.pipeline_mode<synchronous>, transform_indices = @transform_2, window_bounds = array<i64: 1, 128>}, {transform_indices = @transform_3, window_bounds = array<i64: 1, 8, 16, 128>}]} {
    %c8_i32 = arith.constant 8 : i32
    %0 = arith.muli %arg1, %c8_i32 : i32
    %1 = tpu.assume_multiple %0, 8 : i32
    %c0 = arith.constant 0 : index
    %c0_0 = arith.constant 0 : index
    %2 = vector.load %arg4[%c0, %c0_0] : memref<1x128xf32, #tpu.memory_space<vmem>>, vector<1x128xf32>
    %3 = vector.shape_cast %2 : vector<1x128xf32> to vector<128xf32>
    %4 = vector.shape_cast %3 : vector<128xf32> to vector<1x1x128xf32>
    %5 = vector.broadcast %4 : vector<1x1x128xf32> to vector<8x16x128xf32>
    %c0_i32 = arith.constant 0 : i32
    %6 = arith.addi %1, %c0_i32 : i32
    %c0_1 = arith.constant 0 : index
    %7 = arith.index_cast %6 : i32 to index
    %c0_2 = arith.constant 0 : index
    %c0_3 = arith.constant 0 : index
    %8 = vector.load %arg2[%c0_1, %7, %c0_2, %c0_3] : memref<1x22x24x128xf32, #tpu.memory_space<vmem>>, vector<1x8x24x128xf32>
    %9 = vector.shape_cast %8 : vector<1x8x24x128xf32> to vector<8x24x128xf32>
    %10 = vector.extract_strided_slice %9 {offsets = [0, 0, 0], sizes = [8, 16, 128], strides = [1, 1, 1]} : vector<8x24x128xf32> to vector<8x16x128xf32>
    %c0_4 = arith.constant 0 : index
    %c0_5 = arith.constant 0 : index
    %c0_6 = arith.constant 0 : index
    %11 = vector.load %arg3[%c0_4, %c0_5, %c0_6] : memref<7x7x128xf32, #tpu.memory_space<vmem>>, vector<1x1x128xf32>
    %12 = vector.shape_cast %11 : vector<1x1x128xf32> to vector<128xf32>
    %13 = vector.shape_cast %12 : vector<128xf32> to vector<1x1x128xf32>
    %14 = vector.broadcast %13 : vector<1x1x128xf32> to vector<8x16x128xf32>
    %15 = arith.mulf %10, %14 : vector<8x16x128xf32>
    %16 = arith.addf %5, %15 : vector<8x16x128xf32>
    %17 = vector.extract_strided_slice %9 {offsets = [0, 1, 0], sizes = [8, 16, 128], strides = [1, 1, 1]} : vector<8x24x128xf32> to vector<8x16x128xf32>
    %c0_7 = arith.constant 0 : index
    %c1 = arith.constant 1 : index
    %c0_8 = arith.constant 0 : index
    %18 = vector.load %arg3[%c0_7, %c1, %c0_8] : memref<7x7x128xf32, #tpu.memory_space<vmem>>, vector<1x1x128xf32>
    %19 = vector.shape_cast %18 : vector<1x1x128xf32> to vector<128xf32>
    %20 = vector.shape_cast %19 : vector<128xf32> to vector<1x1x128xf32>
    %21 = vector.broadcast %20 : vector<1x1x128xf32> to vector<8x16x128xf32>
    %22 = arith.mulf %17, %21 : vector<8x16x128xf32>
    %23 = arith.addf %16, %22 : vector<8x16x128xf32>
    %24 = vector.extract_strided_slice %9 {offsets = [0, 2, 0], sizes = [8, 16, 128], strides = [1, 1, 1]} : vector<8x24x128xf32> to vector<8x16x128xf32>
    %c0_9 = arith.constant 0 : index
    %c2 = arith.constant 2 : index
    %c0_10 = arith.constant 0 : index
    %25 = vector.load %arg3[%c0_9, %c2, %c0_10] : memref<7x7x128xf32, #tpu.memory_space<vmem>>, vector<1x1x128xf32>
    %26 = vector.shape_cast %25 : vector<1x1x128xf32> to vector<128xf32>
    %27 = vector.shape_cast %26 : vector<128xf32> to vector<1x1x128xf32>
    %28 = vector.broadcast %27 : vector<1x1x128xf32> to vector<8x16x128xf32>
    %29 = arith.mulf %24, %28 : vector<8x16x128xf32>
    %30 = arith.addf %23, %29 : vector<8x16x128xf32>
    %31 = vector.extract_strided_slice %9 {offsets = [0, 3, 0], sizes = [8, 16, 128], strides = [1, 1, 1]} : vector<8x24x128xf32> to vector<8x16x128xf32>
    %c0_11 = arith.constant 0 : index
    %c3 = arith.constant 3 : index
    %c0_12 = arith.constant 0 : index
    %32 = vector.load %arg3[%c0_11, %c3, %c0_12] : memref<7x7x128xf32, #tpu.memory_space<vmem>>, vector<1x1x128xf32>
    %33 = vector.shape_cast %32 : vector<1x1x128xf32> to vector<128xf32>
    %34 = vector.shape_cast %33 : vector<128xf32> to vector<1x1x128xf32>
    %35 = vector.broadcast %34 : vector<1x1x128xf32> to vector<8x16x128xf32>
    %36 = arith.mulf %31, %35 : vector<8x16x128xf32>
    %37 = arith.addf %30, %36 : vector<8x16x128xf32>
    %38 = vector.extract_strided_slice %9 {offsets = [0, 4, 0], sizes = [8, 16, 128], strides = [1, 1, 1]} : vector<8x24x128xf32> to vector<8x16x128xf32>
    %c0_13 = arith.constant 0 : index
    %c4 = arith.constant 4 : index
    %c0_14 = arith.constant 0 : index
    %39 = vector.load %arg3[%c0_13, %c4, %c0_14] : memref<7x7x128xf32, #tpu.memory_space<vmem>>, vector<1x1x128xf32>
    %40 = vector.shape_cast %39 : vector<1x1x128xf32> to vector<128xf32>
    %41 = vector.shape_cast %40 : vector<128xf32> to vector<1x1x128xf32>
    %42 = vector.broadcast %41 : vector<1x1x128xf32> to vector<8x16x128xf32>
    %43 = arith.mulf %38, %42 : vector<8x16x128xf32>
    %44 = arith.addf %37, %43 : vector<8x16x128xf32>
    %45 = vector.extract_strided_slice %9 {offsets = [0, 5, 0], sizes = [8, 16, 128], strides = [1, 1, 1]} : vector<8x24x128xf32> to vector<8x16x128xf32>
    %c0_15 = arith.constant 0 : index
    %c5 = arith.constant 5 : index
    %c0_16 = arith.constant 0 : index
    %46 = vector.load %arg3[%c0_15, %c5, %c0_16] : memref<7x7x128xf32, #tpu.memory_space<vmem>>, vector<1x1x128xf32>
    %47 = vector.shape_cast %46 : vector<1x1x128xf32> to vector<128xf32>
    %48 = vector.shape_cast %47 : vector<128xf32> to vector<1x1x128xf32>
    %49 = vector.broadcast %48 : vector<1x1x128xf32> to vector<8x16x128xf32>
    %50 = arith.mulf %45, %49 : vector<8x16x128xf32>
    %51 = arith.addf %44, %50 : vector<8x16x128xf32>
    %52 = vector.extract_strided_slice %9 {offsets = [0, 6, 0], sizes = [8, 16, 128], strides = [1, 1, 1]} : vector<8x24x128xf32> to vector<8x16x128xf32>
    %c0_17 = arith.constant 0 : index
    %c6 = arith.constant 6 : index
    %c0_18 = arith.constant 0 : index
    %53 = vector.load %arg3[%c0_17, %c6, %c0_18] : memref<7x7x128xf32, #tpu.memory_space<vmem>>, vector<1x1x128xf32>
    %54 = vector.shape_cast %53 : vector<1x1x128xf32> to vector<128xf32>
    %55 = vector.shape_cast %54 : vector<128xf32> to vector<1x1x128xf32>
    %56 = vector.broadcast %55 : vector<1x1x128xf32> to vector<8x16x128xf32>
    %57 = arith.mulf %52, %56 : vector<8x16x128xf32>
    %58 = arith.addf %51, %57 : vector<8x16x128xf32>
    %c1_i32 = arith.constant 1 : i32
    %59 = arith.addi %1, %c1_i32 : i32
    %c0_19 = arith.constant 0 : index
    %60 = arith.index_cast %59 : i32 to index
    %c0_20 = arith.constant 0 : index
    %c0_21 = arith.constant 0 : index
    %61 = vector.load %arg2[%c0_19, %60, %c0_20, %c0_21] : memref<1x22x24x128xf32, #tpu.memory_space<vmem>>, vector<1x8x24x128xf32>
    %62 = vector.shape_cast %61 : vector<1x8x24x128xf32> to vector<8x24x128xf32>
    %63 = vector.extract_strided_slice %62 {offsets = [0, 0, 0], sizes = [8, 16, 128], strides = [1, 1, 1]} : vector<8x24x128xf32> to vector<8x16x128xf32>
    %c1_22 = arith.constant 1 : index
    %c0_23 = arith.constant 0 : index
    %c0_24 = arith.constant 0 : index
    %64 = vector.load %arg3[%c1_22, %c0_23, %c0_24] : memref<7x7x128xf32, #tpu.memory_space<vmem>>, vector<1x1x128xf32>
    %65 = vector.shape_cast %64 : vector<1x1x128xf32> to vector<128xf32>
    %66 = vector.shape_cast %65 : vector<128xf32> to vector<1x1x128xf32>
    %67 = vector.broadcast %66 : vector<1x1x128xf32> to vector<8x16x128xf32>
    %68 = arith.mulf %63, %67 : vector<8x16x128xf32>
    %69 = arith.addf %58, %68 : vector<8x16x128xf32>
    %70 = vector.extract_strided_slice %62 {offsets = [0, 1, 0], sizes = [8, 16, 128], strides = [1, 1, 1]} : vector<8x24x128xf32> to vector<8x16x128xf32>
    %c1_25 = arith.constant 1 : index
    %c1_26 = arith.constant 1 : index
    %c0_27 = arith.constant 0 : index
    %71 = vector.load %arg3[%c1_25, %c1_26, %c0_27] : memref<7x7x128xf32, #tpu.memory_space<vmem>>, vector<1x1x128xf32>
    %72 = vector.shape_cast %71 : vector<1x1x128xf32> to vector<128xf32>
    %73 = vector.shape_cast %72 : vector<128xf32> to vector<1x1x128xf32>
    %74 = vector.broadcast %73 : vector<1x1x128xf32> to vector<8x16x128xf32>
    %75 = arith.mulf %70, %74 : vector<8x16x128xf32>
    %76 = arith.addf %69, %75 : vector<8x16x128xf32>
    %77 = vector.extract_strided_slice %62 {offsets = [0, 2, 0], sizes = [8, 16, 128], strides = [1, 1, 1]} : vector<8x24x128xf32> to vector<8x16x128xf32>
    %c1_28 = arith.constant 1 : index
    %c2_29 = arith.constant 2 : index
    %c0_30 = arith.constant 0 : index
    %78 = vector.load %arg3[%c1_28, %c2_29, %c0_30] : memref<7x7x128xf32, #tpu.memory_space<vmem>>, vector<1x1x128xf32>
    %79 = vector.shape_cast %78 : vector<1x1x128xf32> to vector<128xf32>
    %80 = vector.shape_cast %79 : vector<128xf32> to vector<1x1x128xf32>
    %81 = vector.broadcast %80 : vector<1x1x128xf32> to vector<8x16x128xf32>
    %82 = arith.mulf %77, %81 : vector<8x16x128xf32>
    %83 = arith.addf %76, %82 : vector<8x16x128xf32>
    %84 = vector.extract_strided_slice %62 {offsets = [0, 3, 0], sizes = [8, 16, 128], strides = [1, 1, 1]} : vector<8x24x128xf32> to vector<8x16x128xf32>
    %c1_31 = arith.constant 1 : index
    %c3_32 = arith.constant 3 : index
    %c0_33 = arith.constant 0 : index
    %85 = vector.load %arg3[%c1_31, %c3_32, %c0_33] : memref<7x7x128xf32, #tpu.memory_space<vmem>>, vector<1x1x128xf32>
    %86 = vector.shape_cast %85 : vector<1x1x128xf32> to vector<128xf32>
    %87 = vector.shape_cast %86 : vector<128xf32> to vector<1x1x128xf32>
    %88 = vector.broadcast %87 : vector<1x1x128xf32> to vector<8x16x128xf32>
    %89 = arith.mulf %84, %88 : vector<8x16x128xf32>
    %90 = arith.addf %83, %89 : vector<8x16x128xf32>
    %91 = vector.extract_strided_slice %62 {offsets = [0, 4, 0], sizes = [8, 16, 128], strides = [1, 1, 1]} : vector<8x24x128xf32> to vector<8x16x128xf32>
    %c1_34 = arith.constant 1 : index
    %c4_35 = arith.constant 4 : index
    %c0_36 = arith.constant 0 : index
    %92 = vector.load %arg3[%c1_34, %c4_35, %c0_36] : memref<7x7x128xf32, #tpu.memory_space<vmem>>, vector<1x1x128xf32>
    %93 = vector.shape_cast %92 : vector<1x1x128xf32> to vector<128xf32>
    %94 = vector.shape_cast %93 : vector<128xf32> to vector<1x1x128xf32>
    %95 = vector.broadcast %94 : vector<1x1x128xf32> to vector<8x16x128xf32>
    %96 = arith.mulf %91, %95 : vector<8x16x128xf32>
    %97 = arith.addf %90, %96 : vector<8x16x128xf32>
    %98 = vector.extract_strided_slice %62 {offsets = [0, 5, 0], sizes = [8, 16, 128], strides = [1, 1, 1]} : vector<8x24x128xf32> to vector<8x16x128xf32>
    %c1_37 = arith.constant 1 : index
    %c5_38 = arith.constant 5 : index
    %c0_39 = arith.constant 0 : index
    %99 = vector.load %arg3[%c1_37, %c5_38, %c0_39] : memref<7x7x128xf32, #tpu.memory_space<vmem>>, vector<1x1x128xf32>
    %100 = vector.shape_cast %99 : vector<1x1x128xf32> to vector<128xf32>
    %101 = vector.shape_cast %100 : vector<128xf32> to vector<1x1x128xf32>
    %102 = vector.broadcast %101 : vector<1x1x128xf32> to vector<8x16x128xf32>
    %103 = arith.mulf %98, %102 : vector<8x16x128xf32>
    %104 = arith.addf %97, %103 : vector<8x16x128xf32>
    %105 = vector.extract_strided_slice %62 {offsets = [0, 6, 0], sizes = [8, 16, 128], strides = [1, 1, 1]} : vector<8x24x128xf32> to vector<8x16x128xf32>
    %c1_40 = arith.constant 1 : index
    %c6_41 = arith.constant 6 : index
    %c0_42 = arith.constant 0 : index
    %106 = vector.load %arg3[%c1_40, %c6_41, %c0_42] : memref<7x7x128xf32, #tpu.memory_space<vmem>>, vector<1x1x128xf32>
    %107 = vector.shape_cast %106 : vector<1x1x128xf32> to vector<128xf32>
    %108 = vector.shape_cast %107 : vector<128xf32> to vector<1x1x128xf32>
    %109 = vector.broadcast %108 : vector<1x1x128xf32> to vector<8x16x128xf32>
    %110 = arith.mulf %105, %109 : vector<8x16x128xf32>
    %111 = arith.addf %104, %110 : vector<8x16x128xf32>
    %c2_i32 = arith.constant 2 : i32
    %112 = arith.addi %1, %c2_i32 : i32
    %c0_43 = arith.constant 0 : index
    %113 = arith.index_cast %112 : i32 to index
    %c0_44 = arith.constant 0 : index
    %c0_45 = arith.constant 0 : index
    %114 = vector.load %arg2[%c0_43, %113, %c0_44, %c0_45] : memref<1x22x24x128xf32, #tpu.memory_space<vmem>>, vector<1x8x24x128xf32>
    %115 = vector.shape_cast %114 : vector<1x8x24x128xf32> to vector<8x24x128xf32>
    %116 = vector.extract_strided_slice %115 {offsets = [0, 0, 0], sizes = [8, 16, 128], strides = [1, 1, 1]} : vector<8x24x128xf32> to vector<8x16x128xf32>
    %c2_46 = arith.constant 2 : index
    %c0_47 = arith.constant 0 : index
    %c0_48 = arith.constant 0 : index
    %117 = vector.load %arg3[%c2_46, %c0_47, %c0_48] : memref<7x7x128xf32, #tpu.memory_space<vmem>>, vector<1x1x128xf32>
    %118 = vector.shape_cast %117 : vector<1x1x128xf32> to vector<128xf32>
    %119 = vector.shape_cast %118 : vector<128xf32> to vector<1x1x128xf32>
    %120 = vector.broadcast %119 : vector<1x1x128xf32> to vector<8x16x128xf32>
    %121 = arith.mulf %116, %120 : vector<8x16x128xf32>
    %122 = arith.addf %111, %121 : vector<8x16x128xf32>
    %123 = vector.extract_strided_slice %115 {offsets = [0, 1, 0], sizes = [8, 16, 128], strides = [1, 1, 1]} : vector<8x24x128xf32> to vector<8x16x128xf32>
    %c2_49 = arith.constant 2 : index
    %c1_50 = arith.constant 1 : index
    %c0_51 = arith.constant 0 : index
    %124 = vector.load %arg3[%c2_49, %c1_50, %c0_51] : memref<7x7x128xf32, #tpu.memory_space<vmem>>, vector<1x1x128xf32>
    %125 = vector.shape_cast %124 : vector<1x1x128xf32> to vector<128xf32>
    %126 = vector.shape_cast %125 : vector<128xf32> to vector<1x1x128xf32>
    %127 = vector.broadcast %126 : vector<1x1x128xf32> to vector<8x16x128xf32>
    %128 = arith.mulf %123, %127 : vector<8x16x128xf32>
    %129 = arith.addf %122, %128 : vector<8x16x128xf32>
    %130 = vector.extract_strided_slice %115 {offsets = [0, 2, 0], sizes = [8, 16, 128], strides = [1, 1, 1]} : vector<8x24x128xf32> to vector<8x16x128xf32>
    %c2_52 = arith.constant 2 : index
    %c2_53 = arith.constant 2 : index
    %c0_54 = arith.constant 0 : index
    %131 = vector.load %arg3[%c2_52, %c2_53, %c0_54] : memref<7x7x128xf32, #tpu.memory_space<vmem>>, vector<1x1x128xf32>
    %132 = vector.shape_cast %131 : vector<1x1x128xf32> to vector<128xf32>
    %133 = vector.shape_cast %132 : vector<128xf32> to vector<1x1x128xf32>
    %134 = vector.broadcast %133 : vector<1x1x128xf32> to vector<8x16x128xf32>
    %135 = arith.mulf %130, %134 : vector<8x16x128xf32>
    %136 = arith.addf %129, %135 : vector<8x16x128xf32>
    %137 = vector.extract_strided_slice %115 {offsets = [0, 3, 0], sizes = [8, 16, 128], strides = [1, 1, 1]} : vector<8x24x128xf32> to vector<8x16x128xf32>
    %c2_55 = arith.constant 2 : index
    %c3_56 = arith.constant 3 : index
    %c0_57 = arith.constant 0 : index
    %138 = vector.load %arg3[%c2_55, %c3_56, %c0_57] : memref<7x7x128xf32, #tpu.memory_space<vmem>>, vector<1x1x128xf32>
    %139 = vector.shape_cast %138 : vector<1x1x128xf32> to vector<128xf32>
    %140 = vector.shape_cast %139 : vector<128xf32> to vector<1x1x128xf32>
    %141 = vector.broadcast %140 : vector<1x1x128xf32> to vector<8x16x128xf32>
    %142 = arith.mulf %137, %141 : vector<8x16x128xf32>
    %143 = arith.addf %136, %142 : vector<8x16x128xf32>
    %144 = vector.extract_strided_slice %115 {offsets = [0, 4, 0], sizes = [8, 16, 128], strides = [1, 1, 1]} : vector<8x24x128xf32> to vector<8x16x128xf32>
    %c2_58 = arith.constant 2 : index
    %c4_59 = arith.constant 4 : index
    %c0_60 = arith.constant 0 : index
    %145 = vector.load %arg3[%c2_58, %c4_59, %c0_60] : memref<7x7x128xf32, #tpu.memory_space<vmem>>, vector<1x1x128xf32>
    %146 = vector.shape_cast %145 : vector<1x1x128xf32> to vector<128xf32>
    %147 = vector.shape_cast %146 : vector<128xf32> to vector<1x1x128xf32>
    %148 = vector.broadcast %147 : vector<1x1x128xf32> to vector<8x16x128xf32>
    %149 = arith.mulf %144, %148 : vector<8x16x128xf32>
    %150 = arith.addf %143, %149 : vector<8x16x128xf32>
    %151 = vector.extract_strided_slice %115 {offsets = [0, 5, 0], sizes = [8, 16, 128], strides = [1, 1, 1]} : vector<8x24x128xf32> to vector<8x16x128xf32>
    %c2_61 = arith.constant 2 : index
    %c5_62 = arith.constant 5 : index
    %c0_63 = arith.constant 0 : index
    %152 = vector.load %arg3[%c2_61, %c5_62, %c0_63] : memref<7x7x128xf32, #tpu.memory_space<vmem>>, vector<1x1x128xf32>
    %153 = vector.shape_cast %152 : vector<1x1x128xf32> to vector<128xf32>
    %154 = vector.shape_cast %153 : vector<128xf32> to vector<1x1x128xf32>
    %155 = vector.broadcast %154 : vector<1x1x128xf32> to vector<8x16x128xf32>
    %156 = arith.mulf %151, %155 : vector<8x16x128xf32>
    %157 = arith.addf %150, %156 : vector<8x16x128xf32>
    %158 = vector.extract_strided_slice %115 {offsets = [0, 6, 0], sizes = [8, 16, 128], strides = [1, 1, 1]} : vector<8x24x128xf32> to vector<8x16x128xf32>
    %c2_64 = arith.constant 2 : index
    %c6_65 = arith.constant 6 : index
    %c0_66 = arith.constant 0 : index
    %159 = vector.load %arg3[%c2_64, %c6_65, %c0_66] : memref<7x7x128xf32, #tpu.memory_space<vmem>>, vector<1x1x128xf32>
    %160 = vector.shape_cast %159 : vector<1x1x128xf32> to vector<128xf32>
    %161 = vector.shape_cast %160 : vector<128xf32> to vector<1x1x128xf32>
    %162 = vector.broadcast %161 : vector<1x1x128xf32> to vector<8x16x128xf32>
    %163 = arith.mulf %158, %162 : vector<8x16x128xf32>
    %164 = arith.addf %157, %163 : vector<8x16x128xf32>
    %c3_i32 = arith.constant 3 : i32
    %165 = arith.addi %1, %c3_i32 : i32
    %c0_67 = arith.constant 0 : index
    %166 = arith.index_cast %165 : i32 to index
    %c0_68 = arith.constant 0 : index
    %c0_69 = arith.constant 0 : index
    %167 = vector.load %arg2[%c0_67, %166, %c0_68, %c0_69] : memref<1x22x24x128xf32, #tpu.memory_space<vmem>>, vector<1x8x24x128xf32>
    %168 = vector.shape_cast %167 : vector<1x8x24x128xf32> to vector<8x24x128xf32>
    %169 = vector.extract_strided_slice %168 {offsets = [0, 0, 0], sizes = [8, 16, 128], strides = [1, 1, 1]} : vector<8x24x128xf32> to vector<8x16x128xf32>
    %c3_70 = arith.constant 3 : index
    %c0_71 = arith.constant 0 : index
    %c0_72 = arith.constant 0 : index
    %170 = vector.load %arg3[%c3_70, %c0_71, %c0_72] : memref<7x7x128xf32, #tpu.memory_space<vmem>>, vector<1x1x128xf32>
    %171 = vector.shape_cast %170 : vector<1x1x128xf32> to vector<128xf32>
    %172 = vector.shape_cast %171 : vector<128xf32> to vector<1x1x128xf32>
    %173 = vector.broadcast %172 : vector<1x1x128xf32> to vector<8x16x128xf32>
    %174 = arith.mulf %169, %173 : vector<8x16x128xf32>
    %175 = arith.addf %164, %174 : vector<8x16x128xf32>
    %176 = vector.extract_strided_slice %168 {offsets = [0, 1, 0], sizes = [8, 16, 128], strides = [1, 1, 1]} : vector<8x24x128xf32> to vector<8x16x128xf32>
    %c3_73 = arith.constant 3 : index
    %c1_74 = arith.constant 1 : index
    %c0_75 = arith.constant 0 : index
    %177 = vector.load %arg3[%c3_73, %c1_74, %c0_75] : memref<7x7x128xf32, #tpu.memory_space<vmem>>, vector<1x1x128xf32>
    %178 = vector.shape_cast %177 : vector<1x1x128xf32> to vector<128xf32>
    %179 = vector.shape_cast %178 : vector<128xf32> to vector<1x1x128xf32>
    %180 = vector.broadcast %179 : vector<1x1x128xf32> to vector<8x16x128xf32>
    %181 = arith.mulf %176, %180 : vector<8x16x128xf32>
    %182 = arith.addf %175, %181 : vector<8x16x128xf32>
    %183 = vector.extract_strided_slice %168 {offsets = [0, 2, 0], sizes = [8, 16, 128], strides = [1, 1, 1]} : vector<8x24x128xf32> to vector<8x16x128xf32>
    %c3_76 = arith.constant 3 : index
    %c2_77 = arith.constant 2 : index
    %c0_78 = arith.constant 0 : index
    %184 = vector.load %arg3[%c3_76, %c2_77, %c0_78] : memref<7x7x128xf32, #tpu.memory_space<vmem>>, vector<1x1x128xf32>
    %185 = vector.shape_cast %184 : vector<1x1x128xf32> to vector<128xf32>
    %186 = vector.shape_cast %185 : vector<128xf32> to vector<1x1x128xf32>
    %187 = vector.broadcast %186 : vector<1x1x128xf32> to vector<8x16x128xf32>
    %188 = arith.mulf %183, %187 : vector<8x16x128xf32>
    %189 = arith.addf %182, %188 : vector<8x16x128xf32>
    %190 = vector.extract_strided_slice %168 {offsets = [0, 3, 0], sizes = [8, 16, 128], strides = [1, 1, 1]} : vector<8x24x128xf32> to vector<8x16x128xf32>
    %c3_79 = arith.constant 3 : index
    %c3_80 = arith.constant 3 : index
    %c0_81 = arith.constant 0 : index
    %191 = vector.load %arg3[%c3_79, %c3_80, %c0_81] : memref<7x7x128xf32, #tpu.memory_space<vmem>>, vector<1x1x128xf32>
    %192 = vector.shape_cast %191 : vector<1x1x128xf32> to vector<128xf32>
    %193 = vector.shape_cast %192 : vector<128xf32> to vector<1x1x128xf32>
    %194 = vector.broadcast %193 : vector<1x1x128xf32> to vector<8x16x128xf32>
    %195 = arith.mulf %190, %194 : vector<8x16x128xf32>
    %196 = arith.addf %189, %195 : vector<8x16x128xf32>
    %197 = vector.extract_strided_slice %168 {offsets = [0, 4, 0], sizes = [8, 16, 128], strides = [1, 1, 1]} : vector<8x24x128xf32> to vector<8x16x128xf32>
    %c3_82 = arith.constant 3 : index
    %c4_83 = arith.constant 4 : index
    %c0_84 = arith.constant 0 : index
    %198 = vector.load %arg3[%c3_82, %c4_83, %c0_84] : memref<7x7x128xf32, #tpu.memory_space<vmem>>, vector<1x1x128xf32>
    %199 = vector.shape_cast %198 : vector<1x1x128xf32> to vector<128xf32>
    %200 = vector.shape_cast %199 : vector<128xf32> to vector<1x1x128xf32>
    %201 = vector.broadcast %200 : vector<1x1x128xf32> to vector<8x16x128xf32>
    %202 = arith.mulf %197, %201 : vector<8x16x128xf32>
    %203 = arith.addf %196, %202 : vector<8x16x128xf32>
    %204 = vector.extract_strided_slice %168 {offsets = [0, 5, 0], sizes = [8, 16, 128], strides = [1, 1, 1]} : vector<8x24x128xf32> to vector<8x16x128xf32>
    %c3_85 = arith.constant 3 : index
    %c5_86 = arith.constant 5 : index
    %c0_87 = arith.constant 0 : index
    %205 = vector.load %arg3[%c3_85, %c5_86, %c0_87] : memref<7x7x128xf32, #tpu.memory_space<vmem>>, vector<1x1x128xf32>
    %206 = vector.shape_cast %205 : vector<1x1x128xf32> to vector<128xf32>
    %207 = vector.shape_cast %206 : vector<128xf32> to vector<1x1x128xf32>
    %208 = vector.broadcast %207 : vector<1x1x128xf32> to vector<8x16x128xf32>
    %209 = arith.mulf %204, %208 : vector<8x16x128xf32>
    %210 = arith.addf %203, %209 : vector<8x16x128xf32>
    %211 = vector.extract_strided_slice %168 {offsets = [0, 6, 0], sizes = [8, 16, 128], strides = [1, 1, 1]} : vector<8x24x128xf32> to vector<8x16x128xf32>
    %c3_88 = arith.constant 3 : index
    %c6_89 = arith.constant 6 : index
    %c0_90 = arith.constant 0 : index
    %212 = vector.load %arg3[%c3_88, %c6_89, %c0_90] : memref<7x7x128xf32, #tpu.memory_space<vmem>>, vector<1x1x128xf32>
    %213 = vector.shape_cast %212 : vector<1x1x128xf32> to vector<128xf32>
    %214 = vector.shape_cast %213 : vector<128xf32> to vector<1x1x128xf32>
    %215 = vector.broadcast %214 : vector<1x1x128xf32> to vector<8x16x128xf32>
    %216 = arith.mulf %211, %215 : vector<8x16x128xf32>
    %217 = arith.addf %210, %216 : vector<8x16x128xf32>
    %c4_i32 = arith.constant 4 : i32
    %218 = arith.addi %1, %c4_i32 : i32
    %c0_91 = arith.constant 0 : index
    %219 = arith.index_cast %218 : i32 to index
    %c0_92 = arith.constant 0 : index
    %c0_93 = arith.constant 0 : index
    %220 = vector.load %arg2[%c0_91, %219, %c0_92, %c0_93] : memref<1x22x24x128xf32, #tpu.memory_space<vmem>>, vector<1x8x24x128xf32>
    %221 = vector.shape_cast %220 : vector<1x8x24x128xf32> to vector<8x24x128xf32>
    %222 = vector.extract_strided_slice %221 {offsets = [0, 0, 0], sizes = [8, 16, 128], strides = [1, 1, 1]} : vector<8x24x128xf32> to vector<8x16x128xf32>
    %c4_94 = arith.constant 4 : index
    %c0_95 = arith.constant 0 : index
    %c0_96 = arith.constant 0 : index
    %223 = vector.load %arg3[%c4_94, %c0_95, %c0_96] : memref<7x7x128xf32, #tpu.memory_space<vmem>>, vector<1x1x128xf32>
    %224 = vector.shape_cast %223 : vector<1x1x128xf32> to vector<128xf32>
    %225 = vector.shape_cast %224 : vector<128xf32> to vector<1x1x128xf32>
    %226 = vector.broadcast %225 : vector<1x1x128xf32> to vector<8x16x128xf32>
    %227 = arith.mulf %222, %226 : vector<8x16x128xf32>
    %228 = arith.addf %217, %227 : vector<8x16x128xf32>
    %229 = vector.extract_strided_slice %221 {offsets = [0, 1, 0], sizes = [8, 16, 128], strides = [1, 1, 1]} : vector<8x24x128xf32> to vector<8x16x128xf32>
    %c4_97 = arith.constant 4 : index
    %c1_98 = arith.constant 1 : index
    %c0_99 = arith.constant 0 : index
    %230 = vector.load %arg3[%c4_97, %c1_98, %c0_99] : memref<7x7x128xf32, #tpu.memory_space<vmem>>, vector<1x1x128xf32>
    %231 = vector.shape_cast %230 : vector<1x1x128xf32> to vector<128xf32>
    %232 = vector.shape_cast %231 : vector<128xf32> to vector<1x1x128xf32>
    %233 = vector.broadcast %232 : vector<1x1x128xf32> to vector<8x16x128xf32>
    %234 = arith.mulf %229, %233 : vector<8x16x128xf32>
    %235 = arith.addf %228, %234 : vector<8x16x128xf32>
    %236 = vector.extract_strided_slice %221 {offsets = [0, 2, 0], sizes = [8, 16, 128], strides = [1, 1, 1]} : vector<8x24x128xf32> to vector<8x16x128xf32>
    %c4_100 = arith.constant 4 : index
    %c2_101 = arith.constant 2 : index
    %c0_102 = arith.constant 0 : index
    %237 = vector.load %arg3[%c4_100, %c2_101, %c0_102] : memref<7x7x128xf32, #tpu.memory_space<vmem>>, vector<1x1x128xf32>
    %238 = vector.shape_cast %237 : vector<1x1x128xf32> to vector<128xf32>
    %239 = vector.shape_cast %238 : vector<128xf32> to vector<1x1x128xf32>
    %240 = vector.broadcast %239 : vector<1x1x128xf32> to vector<8x16x128xf32>
    %241 = arith.mulf %236, %240 : vector<8x16x128xf32>
    %242 = arith.addf %235, %241 : vector<8x16x128xf32>
    %243 = vector.extract_strided_slice %221 {offsets = [0, 3, 0], sizes = [8, 16, 128], strides = [1, 1, 1]} : vector<8x24x128xf32> to vector<8x16x128xf32>
    %c4_103 = arith.constant 4 : index
    %c3_104 = arith.constant 3 : index
    %c0_105 = arith.constant 0 : index
    %244 = vector.load %arg3[%c4_103, %c3_104, %c0_105] : memref<7x7x128xf32, #tpu.memory_space<vmem>>, vector<1x1x128xf32>
    %245 = vector.shape_cast %244 : vector<1x1x128xf32> to vector<128xf32>
    %246 = vector.shape_cast %245 : vector<128xf32> to vector<1x1x128xf32>
    %247 = vector.broadcast %246 : vector<1x1x128xf32> to vector<8x16x128xf32>
    %248 = arith.mulf %243, %247 : vector<8x16x128xf32>
    %249 = arith.addf %242, %248 : vector<8x16x128xf32>
    %250 = vector.extract_strided_slice %221 {offsets = [0, 4, 0], sizes = [8, 16, 128], strides = [1, 1, 1]} : vector<8x24x128xf32> to vector<8x16x128xf32>
    %c4_106 = arith.constant 4 : index
    %c4_107 = arith.constant 4 : index
    %c0_108 = arith.constant 0 : index
    %251 = vector.load %arg3[%c4_106, %c4_107, %c0_108] : memref<7x7x128xf32, #tpu.memory_space<vmem>>, vector<1x1x128xf32>
    %252 = vector.shape_cast %251 : vector<1x1x128xf32> to vector<128xf32>
    %253 = vector.shape_cast %252 : vector<128xf32> to vector<1x1x128xf32>
    %254 = vector.broadcast %253 : vector<1x1x128xf32> to vector<8x16x128xf32>
    %255 = arith.mulf %250, %254 : vector<8x16x128xf32>
    %256 = arith.addf %249, %255 : vector<8x16x128xf32>
    %257 = vector.extract_strided_slice %221 {offsets = [0, 5, 0], sizes = [8, 16, 128], strides = [1, 1, 1]} : vector<8x24x128xf32> to vector<8x16x128xf32>
    %c4_109 = arith.constant 4 : index
    %c5_110 = arith.constant 5 : index
    %c0_111 = arith.constant 0 : index
    %258 = vector.load %arg3[%c4_109, %c5_110, %c0_111] : memref<7x7x128xf32, #tpu.memory_space<vmem>>, vector<1x1x128xf32>
    %259 = vector.shape_cast %258 : vector<1x1x128xf32> to vector<128xf32>
    %260 = vector.shape_cast %259 : vector<128xf32> to vector<1x1x128xf32>
    %261 = vector.broadcast %260 : vector<1x1x128xf32> to vector<8x16x128xf32>
    %262 = arith.mulf %257, %261 : vector<8x16x128xf32>
    %263 = arith.addf %256, %262 : vector<8x16x128xf32>
    %264 = vector.extract_strided_slice %221 {offsets = [0, 6, 0], sizes = [8, 16, 128], strides = [1, 1, 1]} : vector<8x24x128xf32> to vector<8x16x128xf32>
    %c4_112 = arith.constant 4 : index
    %c6_113 = arith.constant 6 : index
    %c0_114 = arith.constant 0 : index
    %265 = vector.load %arg3[%c4_112, %c6_113, %c0_114] : memref<7x7x128xf32, #tpu.memory_space<vmem>>, vector<1x1x128xf32>
    %266 = vector.shape_cast %265 : vector<1x1x128xf32> to vector<128xf32>
    %267 = vector.shape_cast %266 : vector<128xf32> to vector<1x1x128xf32>
    %268 = vector.broadcast %267 : vector<1x1x128xf32> to vector<8x16x128xf32>
    %269 = arith.mulf %264, %268 : vector<8x16x128xf32>
    %270 = arith.addf %263, %269 : vector<8x16x128xf32>
    %c5_i32 = arith.constant 5 : i32
    %271 = arith.addi %1, %c5_i32 : i32
    %c0_115 = arith.constant 0 : index
    %272 = arith.index_cast %271 : i32 to index
    %c0_116 = arith.constant 0 : index
    %c0_117 = arith.constant 0 : index
    %273 = vector.load %arg2[%c0_115, %272, %c0_116, %c0_117] : memref<1x22x24x128xf32, #tpu.memory_space<vmem>>, vector<1x8x24x128xf32>
    %274 = vector.shape_cast %273 : vector<1x8x24x128xf32> to vector<8x24x128xf32>
    %275 = vector.extract_strided_slice %274 {offsets = [0, 0, 0], sizes = [8, 16, 128], strides = [1, 1, 1]} : vector<8x24x128xf32> to vector<8x16x128xf32>
    %c5_118 = arith.constant 5 : index
    %c0_119 = arith.constant 0 : index
    %c0_120 = arith.constant 0 : index
    %276 = vector.load %arg3[%c5_118, %c0_119, %c0_120] : memref<7x7x128xf32, #tpu.memory_space<vmem>>, vector<1x1x128xf32>
    %277 = vector.shape_cast %276 : vector<1x1x128xf32> to vector<128xf32>
    %278 = vector.shape_cast %277 : vector<128xf32> to vector<1x1x128xf32>
    %279 = vector.broadcast %278 : vector<1x1x128xf32> to vector<8x16x128xf32>
    %280 = arith.mulf %275, %279 : vector<8x16x128xf32>
    %281 = arith.addf %270, %280 : vector<8x16x128xf32>
    %282 = vector.extract_strided_slice %274 {offsets = [0, 1, 0], sizes = [8, 16, 128], strides = [1, 1, 1]} : vector<8x24x128xf32> to vector<8x16x128xf32>
    %c5_121 = arith.constant 5 : index
    %c1_122 = arith.constant 1 : index
    %c0_123 = arith.constant 0 : index
    %283 = vector.load %arg3[%c5_121, %c1_122, %c0_123] : memref<7x7x128xf32, #tpu.memory_space<vmem>>, vector<1x1x128xf32>
    %284 = vector.shape_cast %283 : vector<1x1x128xf32> to vector<128xf32>
    %285 = vector.shape_cast %284 : vector<128xf32> to vector<1x1x128xf32>
    %286 = vector.broadcast %285 : vector<1x1x128xf32> to vector<8x16x128xf32>
    %287 = arith.mulf %282, %286 : vector<8x16x128xf32>
    %288 = arith.addf %281, %287 : vector<8x16x128xf32>
    %289 = vector.extract_strided_slice %274 {offsets = [0, 2, 0], sizes = [8, 16, 128], strides = [1, 1, 1]} : vector<8x24x128xf32> to vector<8x16x128xf32>
    %c5_124 = arith.constant 5 : index
    %c2_125 = arith.constant 2 : index
    %c0_126 = arith.constant 0 : index
    %290 = vector.load %arg3[%c5_124, %c2_125, %c0_126] : memref<7x7x128xf32, #tpu.memory_space<vmem>>, vector<1x1x128xf32>
    %291 = vector.shape_cast %290 : vector<1x1x128xf32> to vector<128xf32>
    %292 = vector.shape_cast %291 : vector<128xf32> to vector<1x1x128xf32>
    %293 = vector.broadcast %292 : vector<1x1x128xf32> to vector<8x16x128xf32>
    %294 = arith.mulf %289, %293 : vector<8x16x128xf32>
    %295 = arith.addf %288, %294 : vector<8x16x128xf32>
    %296 = vector.extract_strided_slice %274 {offsets = [0, 3, 0], sizes = [8, 16, 128], strides = [1, 1, 1]} : vector<8x24x128xf32> to vector<8x16x128xf32>
    %c5_127 = arith.constant 5 : index
    %c3_128 = arith.constant 3 : index
    %c0_129 = arith.constant 0 : index
    %297 = vector.load %arg3[%c5_127, %c3_128, %c0_129] : memref<7x7x128xf32, #tpu.memory_space<vmem>>, vector<1x1x128xf32>
    %298 = vector.shape_cast %297 : vector<1x1x128xf32> to vector<128xf32>
    %299 = vector.shape_cast %298 : vector<128xf32> to vector<1x1x128xf32>
    %300 = vector.broadcast %299 : vector<1x1x128xf32> to vector<8x16x128xf32>
    %301 = arith.mulf %296, %300 : vector<8x16x128xf32>
    %302 = arith.addf %295, %301 : vector<8x16x128xf32>
    %303 = vector.extract_strided_slice %274 {offsets = [0, 4, 0], sizes = [8, 16, 128], strides = [1, 1, 1]} : vector<8x24x128xf32> to vector<8x16x128xf32>
    %c5_130 = arith.constant 5 : index
    %c4_131 = arith.constant 4 : index
    %c0_132 = arith.constant 0 : index
    %304 = vector.load %arg3[%c5_130, %c4_131, %c0_132] : memref<7x7x128xf32, #tpu.memory_space<vmem>>, vector<1x1x128xf32>
    %305 = vector.shape_cast %304 : vector<1x1x128xf32> to vector<128xf32>
    %306 = vector.shape_cast %305 : vector<128xf32> to vector<1x1x128xf32>
    %307 = vector.broadcast %306 : vector<1x1x128xf32> to vector<8x16x128xf32>
    %308 = arith.mulf %303, %307 : vector<8x16x128xf32>
    %309 = arith.addf %302, %308 : vector<8x16x128xf32>
    %310 = vector.extract_strided_slice %274 {offsets = [0, 5, 0], sizes = [8, 16, 128], strides = [1, 1, 1]} : vector<8x24x128xf32> to vector<8x16x128xf32>
    %c5_133 = arith.constant 5 : index
    %c5_134 = arith.constant 5 : index
    %c0_135 = arith.constant 0 : index
    %311 = vector.load %arg3[%c5_133, %c5_134, %c0_135] : memref<7x7x128xf32, #tpu.memory_space<vmem>>, vector<1x1x128xf32>
    %312 = vector.shape_cast %311 : vector<1x1x128xf32> to vector<128xf32>
    %313 = vector.shape_cast %312 : vector<128xf32> to vector<1x1x128xf32>
    %314 = vector.broadcast %313 : vector<1x1x128xf32> to vector<8x16x128xf32>
    %315 = arith.mulf %310, %314 : vector<8x16x128xf32>
    %316 = arith.addf %309, %315 : vector<8x16x128xf32>
    %317 = vector.extract_strided_slice %274 {offsets = [0, 6, 0], sizes = [8, 16, 128], strides = [1, 1, 1]} : vector<8x24x128xf32> to vector<8x16x128xf32>
    %c5_136 = arith.constant 5 : index
    %c6_137 = arith.constant 6 : index
    %c0_138 = arith.constant 0 : index
    %318 = vector.load %arg3[%c5_136, %c6_137, %c0_138] : memref<7x7x128xf32, #tpu.memory_space<vmem>>, vector<1x1x128xf32>
    %319 = vector.shape_cast %318 : vector<1x1x128xf32> to vector<128xf32>
    %320 = vector.shape_cast %319 : vector<128xf32> to vector<1x1x128xf32>
    %321 = vector.broadcast %320 : vector<1x1x128xf32> to vector<8x16x128xf32>
    %322 = arith.mulf %317, %321 : vector<8x16x128xf32>
    %323 = arith.addf %316, %322 : vector<8x16x128xf32>
    %c6_i32 = arith.constant 6 : i32
    %324 = arith.addi %1, %c6_i32 : i32
    %c0_139 = arith.constant 0 : index
    %325 = arith.index_cast %324 : i32 to index
    %c0_140 = arith.constant 0 : index
    %c0_141 = arith.constant 0 : index
    %326 = vector.load %arg2[%c0_139, %325, %c0_140, %c0_141] : memref<1x22x24x128xf32, #tpu.memory_space<vmem>>, vector<1x8x24x128xf32>
    %327 = vector.shape_cast %326 : vector<1x8x24x128xf32> to vector<8x24x128xf32>
    %328 = vector.extract_strided_slice %327 {offsets = [0, 0, 0], sizes = [8, 16, 128], strides = [1, 1, 1]} : vector<8x24x128xf32> to vector<8x16x128xf32>
    %c6_142 = arith.constant 6 : index
    %c0_143 = arith.constant 0 : index
    %c0_144 = arith.constant 0 : index
    %329 = vector.load %arg3[%c6_142, %c0_143, %c0_144] : memref<7x7x128xf32, #tpu.memory_space<vmem>>, vector<1x1x128xf32>
    %330 = vector.shape_cast %329 : vector<1x1x128xf32> to vector<128xf32>
    %331 = vector.shape_cast %330 : vector<128xf32> to vector<1x1x128xf32>
    %332 = vector.broadcast %331 : vector<1x1x128xf32> to vector<8x16x128xf32>
    %333 = arith.mulf %328, %332 : vector<8x16x128xf32>
    %334 = arith.addf %323, %333 : vector<8x16x128xf32>
    %335 = vector.extract_strided_slice %327 {offsets = [0, 1, 0], sizes = [8, 16, 128], strides = [1, 1, 1]} : vector<8x24x128xf32> to vector<8x16x128xf32>
    %c6_145 = arith.constant 6 : index
    %c1_146 = arith.constant 1 : index
    %c0_147 = arith.constant 0 : index
    %336 = vector.load %arg3[%c6_145, %c1_146, %c0_147] : memref<7x7x128xf32, #tpu.memory_space<vmem>>, vector<1x1x128xf32>
    %337 = vector.shape_cast %336 : vector<1x1x128xf32> to vector<128xf32>
    %338 = vector.shape_cast %337 : vector<128xf32> to vector<1x1x128xf32>
    %339 = vector.broadcast %338 : vector<1x1x128xf32> to vector<8x16x128xf32>
    %340 = arith.mulf %335, %339 : vector<8x16x128xf32>
    %341 = arith.addf %334, %340 : vector<8x16x128xf32>
    %342 = vector.extract_strided_slice %327 {offsets = [0, 2, 0], sizes = [8, 16, 128], strides = [1, 1, 1]} : vector<8x24x128xf32> to vector<8x16x128xf32>
    %c6_148 = arith.constant 6 : index
    %c2_149 = arith.constant 2 : index
    %c0_150 = arith.constant 0 : index
    %343 = vector.load %arg3[%c6_148, %c2_149, %c0_150] : memref<7x7x128xf32, #tpu.memory_space<vmem>>, vector<1x1x128xf32>
    %344 = vector.shape_cast %343 : vector<1x1x128xf32> to vector<128xf32>
    %345 = vector.shape_cast %344 : vector<128xf32> to vector<1x1x128xf32>
    %346 = vector.broadcast %345 : vector<1x1x128xf32> to vector<8x16x128xf32>
    %347 = arith.mulf %342, %346 : vector<8x16x128xf32>
    %348 = arith.addf %341, %347 : vector<8x16x128xf32>
    %349 = vector.extract_strided_slice %327 {offsets = [0, 3, 0], sizes = [8, 16, 128], strides = [1, 1, 1]} : vector<8x24x128xf32> to vector<8x16x128xf32>
    %c6_151 = arith.constant 6 : index
    %c3_152 = arith.constant 3 : index
    %c0_153 = arith.constant 0 : index
    %350 = vector.load %arg3[%c6_151, %c3_152, %c0_153] : memref<7x7x128xf32, #tpu.memory_space<vmem>>, vector<1x1x128xf32>
    %351 = vector.shape_cast %350 : vector<1x1x128xf32> to vector<128xf32>
    %352 = vector.shape_cast %351 : vector<128xf32> to vector<1x1x128xf32>
    %353 = vector.broadcast %352 : vector<1x1x128xf32> to vector<8x16x128xf32>
    %354 = arith.mulf %349, %353 : vector<8x16x128xf32>
    %355 = arith.addf %348, %354 : vector<8x16x128xf32>
    %356 = vector.extract_strided_slice %327 {offsets = [0, 4, 0], sizes = [8, 16, 128], strides = [1, 1, 1]} : vector<8x24x128xf32> to vector<8x16x128xf32>
    %c6_154 = arith.constant 6 : index
    %c4_155 = arith.constant 4 : index
    %c0_156 = arith.constant 0 : index
    %357 = vector.load %arg3[%c6_154, %c4_155, %c0_156] : memref<7x7x128xf32, #tpu.memory_space<vmem>>, vector<1x1x128xf32>
    %358 = vector.shape_cast %357 : vector<1x1x128xf32> to vector<128xf32>
    %359 = vector.shape_cast %358 : vector<128xf32> to vector<1x1x128xf32>
    %360 = vector.broadcast %359 : vector<1x1x128xf32> to vector<8x16x128xf32>
    %361 = arith.mulf %356, %360 : vector<8x16x128xf32>
    %362 = arith.addf %355, %361 : vector<8x16x128xf32>
    %363 = vector.extract_strided_slice %327 {offsets = [0, 5, 0], sizes = [8, 16, 128], strides = [1, 1, 1]} : vector<8x24x128xf32> to vector<8x16x128xf32>
    %c6_157 = arith.constant 6 : index
    %c5_158 = arith.constant 5 : index
    %c0_159 = arith.constant 0 : index
    %364 = vector.load %arg3[%c6_157, %c5_158, %c0_159] : memref<7x7x128xf32, #tpu.memory_space<vmem>>, vector<1x1x128xf32>
    %365 = vector.shape_cast %364 : vector<1x1x128xf32> to vector<128xf32>
    %366 = vector.shape_cast %365 : vector<128xf32> to vector<1x1x128xf32>
    %367 = vector.broadcast %366 : vector<1x1x128xf32> to vector<8x16x128xf32>
    %368 = arith.mulf %363, %367 : vector<8x16x128xf32>
    %369 = arith.addf %362, %368 : vector<8x16x128xf32>
    %370 = vector.extract_strided_slice %327 {offsets = [0, 6, 0], sizes = [8, 16, 128], strides = [1, 1, 1]} : vector<8x24x128xf32> to vector<8x16x128xf32>
    %c6_160 = arith.constant 6 : index
    %c6_161 = arith.constant 6 : index
    %c0_162 = arith.constant 0 : index
    %371 = vector.load %arg3[%c6_160, %c6_161, %c0_162] : memref<7x7x128xf32, #tpu.memory_space<vmem>>, vector<1x1x128xf32>
    %372 = vector.shape_cast %371 : vector<1x1x128xf32> to vector<128xf32>
    %373 = vector.shape_cast %372 : vector<128xf32> to vector<1x1x128xf32>
    %374 = vector.broadcast %373 : vector<1x1x128xf32> to vector<8x16x128xf32>
    %375 = arith.mulf %370, %374 : vector<8x16x128xf32>
    %376 = arith.addf %369, %375 : vector<8x16x128xf32>
    %c0_163 = arith.constant 0 : index
    %c0_164 = arith.constant 0 : index
    %c0_165 = arith.constant 0 : index
    %c0_166 = arith.constant 0 : index
    %377 = vector.load %arg5[%c0_163, %c0_164, %c0_165, %c0_166] : memref<1x8x16x128xf32, #tpu.memory_space<vmem>>, vector<1x8x16x128xf32>
    %378 = vector.shape_cast %377 : vector<1x8x16x128xf32> to vector<8x16x128xf32>
    %379 = vector.shape_cast %376 : vector<8x16x128xf32> to vector<1x8x16x128xf32>
    tpu.vector_store %arg5[%c0_163, %c0_164, %c0_165, %c0_166], %379 {strides = array<i32>} : memref<1x8x16x128xf32, #tpu.memory_space<vmem>>, vector<1x8x16x128xf32>,
    return
  }
  func.func @transform_0(%arg0: i32, %arg1: i32) -> (i32, i32, i32, i32) {
    %c0_i32 = arith.constant 0 : i32
    %c0_i32_0 = arith.constant 0 : i32
    %c0_i32_1 = arith.constant 0 : i32
    %c0_i32_2 = arith.constant 0 : i32
    return %arg0, %c0_i32, %c0_i32_0, %c0_i32_1 : i32, i32, i32, i32
  }
  func.func @transform_1(%arg0: i32, %arg1: i32) -> (i32, i32, i32) {
    %c0_i32 = arith.constant 0 : i32
    %c0_i32_0 = arith.constant 0 : i32
    %c0_i32_1 = arith.constant 0 : i32
    %c0_i32_2 = arith.constant 0 : i32
    return %c0_i32, %c0_i32_0, %c0_i32_1 : i32, i32, i32
  }
  func.func @transform_2(%arg0: i32, %arg1: i32) -> (i32, i32) {
    %c0_i32 = arith.constant 0 : i32
    %c0_i32_0 = arith.constant 0 : i32
    %c0_i32_1 = arith.constant 0 : i32
    return %c0_i32, %c0_i32_0 : i32, i32
  }
  func.func @transform_3(%arg0: i32, %arg1: i32) -> (i32, i32, i32, i32) {
    %c0_i32 = arith.constant 0 : i32
    %c0_i32_0 = arith.constant 0 : i32
    %c0_i32_1 = arith.constant 0 : i32
    return %arg0, %arg1, %c0_i32, %c0_i32_0 : i32, i32, i32, i32
  }
}

</mosaic_0001>

<llo_original>
// kernel: tpu_custom_call.1
$region0: #{tpu_custom_call.1}
  #allocation0 [shape = 'u32[]', space=smem, size = 0x4, offset = 0x4, fixed_abs, tag = 'smem constant byte address 0x4 - core index']
  #allocation1 [shape = 'u32[72,128]{1,0:T(1,128)}', space=vmem, size = 0x9000, scoped, tag = 'internal scratch']
  %s0 = inlined_call_operand.hbm [shape: f32[2,22,24,128], index: 0, kind: input, shape index: {}]
  %s1 = inlined_call_operand.hbm [shape: f32[7,7,128], index: 1, kind: input, shape index: {}]
  %s2 = inlined_call_operand.vmem [shape: f32[1,128], index: 2, kind: input, shape index: {}]
  %s3 = inlined_call_operand.hbm [shape: f32[2,16,16,128], index: 3, kind: output, shape index: {}]
  %s4 = sld [smem:[#allocation0]]
  $region53: #{tpu_custom_call.1} parent=0
    _
  %s6 = ssub.s32 1, %s4
  %s7 = scalar_select 0, %s6, %s4
  $region1: #{tpu_custom_call.1} parent=0
    #allocation2 [shape = 'u8[540672]{0}', space=vmem, size = 0x84000, scoped, tag = 'input window, operand 0']
    #allocation3 [shape = 's32[2]{0}', space=sflag, size = 0x8, scoped, tag = 'scoped memory for tpu_custom_call.1']
    #allocation4 [shape = 's32[2]{0}', space=sflag, size = 0x8, scoped, tag = 'scoped memory for tpu_custom_call.1']
    #allocation5 [shape = 'u8[28672]{0}', space=vmem, size = 0x7000, scoped, tag = 'input window, operand 1, single buffered']
    #allocation6 [shape = 's32[1]{0}', space=sflag, size = 0x4, scoped, tag = 'scoped memory for tpu_custom_call.1']
    #allocation7 [shape = 'u8[131072]{0}', space=vmem, size = 0x20000, scoped, tag = 'output window, operand 0']
    %8 = vsyncpa [#allocation3], 0
    %s9 = scalar_lea.sflag [#allocation3], 1
    %10 = vsyncpa %s9, 0
    %11 = vsyncpa [#allocation6], 0
    %12 = vsyncpa [#allocation4], 0
    %s13 = scalar_lea.sflag [#allocation4], 1
    %14 = vsyncpa %s13, 0
    loop: start=0, step=1, limit=6
    $region2: #{tpu_custom_call.1} parent=1 // loop_pre_header
      _
    $region3: #{tpu_custom_call.1} parent=1 // loop_header
      %s16 = sphi 0, %s20
      %p17 = scmp.ge.s32.totalorder %s16, 6
      %s23 = sphi 0, %s35
      %s24 = sphi 0, %s31
      %s25 = sphi 0, %s23
      %s26 = sphi 0, %s24
      %s27 = sphi 0, %s25
      %s28 = sphi 0, %s26
      %s38 = sphi 0, %s40
      %s41 = sphi 0, %s38
      %s42 = sphi 0, %s41
      %s58 = sphi 0, %s42
      %s62 = sphi 0, %s62
      %s64 = sphi 0, %s62
      %s65 = sphi 0, %s64
      %s79 = sphi 0, %s65
      %s83 = sphi 0, %s83
      %s85 = sphi 0, %s83
      %s86 = sphi 0, %s85
      %s100 = sphi 0, %s86
      %s108 = sphi 0, %s110
      %s111 = sphi 0, %s108
      %s112 = sphi 0, %s111
      %s128 = sphi 0, %s112
    $region4: #{tpu_custom_call.1} parent=1 // loop_header_branch
      %19 = sbr.rel (%p17) target = $region8
    $region5: #{tpu_custom_call.1} parent=1 // loop_body
      %s21 = ssub.s32 %s16, 1
      %s22 = ssub.s32 %s16, 2
      %s29 = sadd.s32 1, %s24
      %p30 = scmp.ge.s32.totalorder %s29, 2
      %s31 = scalar_select %p30, 0, %s29
      %s32 = sadd.s32 1, %s23
      %s33 = scalar_select %p30, %s32, %s23
      %p34 = scmp.ge.s32.totalorder %s33, 2
      %s35 = scalar_select %p34, 0, %s33
      %s36 = ssub.s32 %s23, %s35
      %p37 = scmp.eq.s32.totalorder %s36, 0
      %s39 = sadd.s32 %s38, 1
      %s40 = scalar_select %p37, %s38, %s39
      %p43 = pneg %p37
      %p44 = scmp.eq.s32.totalorder %s16, 3
      %p45 = por %p43, %p44
      %p46 = scmp.ne.s32.totalorder %s38, %s41
      %p47 = scmp.eq.s32.totalorder %s16, 0
      %p48 = por %p46, %p47
      %p49 = scmp.ne.s32.totalorder %s38, %s41
      %p50 = scmp.eq.s32.totalorder %s21, 3
      %p51 = por %p49, %p50
      %p52 = scmp.ne.s32.totalorder %s41, %s42
      %p53 = scmp.eq.s32.totalorder %s21, 0
      %p54 = por %p52, %p53
      %p55 = scmp.ne.s32.totalorder %s41, %s42
      %p56 = scmp.eq.s32.totalorder %s22, 3
      %p57 = por %p55, %p56
      %p59 = scmp.ne.s32.totalorder %s42, %s58
      %p60 = scmp.eq.s32.totalorder %s22, 0
      %p61 = por %p59, %p60
      %s63 = sadd.s32 %s62, 1
      %p66 = scmp.eq.s32.totalorder %s16, 3
      %p67 = scmp.ne.s32.totalorder %s62, %s64
      %p68 = scmp.eq.s32.totalorder %s16, 0
      %p69 = por %p67, %p68
      %p70 = scmp.ne.s32.totalorder %s62, %s64
      %p71 = scmp.eq.s32.totalorder %s21, 3
      %p72 = por %p70, %p71
      %p73 = scmp.ne.s32.totalorder %s64, %s65
      %p74 = scmp.eq.s32.totalorder %s21, 0
      %p75 = por %p73, %p74
      %p76 = scmp.ne.s32.totalorder %s64, %s65
      %p77 = scmp.eq.s32.totalorder %s22, 3
      %p78 = por %p76, %p77
      %p80 = scmp.ne.s32.totalorder %s65, %s79
      %p81 = scmp.eq.s32.totalorder %s22, 0
      %p82 = por %p80, %p81
      %s84 = sadd.s32 %s83, 1
      %p87 = scmp.eq.s32.totalorder %s16, 3
      %p88 = scmp.ne.s32.totalorder %s83, %s85
      %p89 = scmp.eq.s32.totalorder %s16, 0
      %p90 = por %p88, %p89
      %p91 = scmp.ne.s32.totalorder %s83, %s85
      %p92 = scmp.eq.s32.totalorder %s21, 3
      %p93 = por %p91, %p92
      %p94 = scmp.ne.s32.totalorder %s85, %s86
      %p95 = scmp.eq.s32.totalorder %s21, 0
      %p96 = por %p94, %p95
      %p97 = scmp.ne.s32.totalorder %s85, %s86
      %p98 = scmp.eq.s32.totalorder %s22, 3
      %p99 = por %p97, %p98
      %p101 = scmp.ne.s32.totalorder %s86, %s100
      %p102 = scmp.eq.s32.totalorder %s22, 0
      %p103 = por %p101, %p102
      %s104 = ssub.s32 %s23, %s35
      %s105 = ssub.s32 %s24, %s31
      %s106 = sor.u32 %s104, %s105
      %p107 = scmp.eq.s32.totalorder %s106, 0
      %s109 = sadd.s32 %s108, 1
      %s110 = scalar_select %p107, %s108, %s109
      %p113 = pneg %p107
      %p114 = scmp.eq.s32.totalorder %s16, 3
      %p115 = por %p113, %p114
      %p116 = scmp.ne.s32.totalorder %s108, %s111
      %p117 = scmp.eq.s32.totalorder %s16, 0
      %p118 = por %p116, %p117
      %p119 = scmp.ne.s32.totalorder %s108, %s111
      %p120 = scmp.eq.s32.totalorder %s21, 3
      %p121 = por %p119, %p120
      %p122 = scmp.ne.s32.totalorder %s111, %s112
      %p123 = scmp.eq.s32.totalorder %s21, 0
      %p124 = por %p122, %p123
      %p125 = scmp.ne.s32.totalorder %s111, %s112
      %p126 = scmp.eq.s32.totalorder %s22, 3
      %p127 = por %p125, %p126
      %p129 = scmp.ne.s32.totalorder %s112, %s128
      %p130 = scmp.eq.s32.totalorder %s22, 0
      %p131 = por %p129, %p130
      %p132 = scmp.le.s32.totalorder 1, %s16
      %p133 = scmp.lt.s32.totalorder %s16, 5
      %p134 = pnand %p132, %p133
      %p135 = pneg %p134
      // Predicated region
      $region9: #{tpu_custom_call.1} parent=5 // pred_check
        _
      $region10: #{tpu_custom_call.1} parent=5 // pred_check_branch
        %137 = sbr.rel (%p134) target = $region12
      $region11: #{tpu_custom_call.1} parent=5 // pred_region
        %s138 = ssub.s32 %s16, 1
        // Predicated region
        $region13: #{tpu_custom_call.1} parent=11 // pred_check
          %p139 = pneg %p75
        $region14: #{tpu_custom_call.1} parent=11 // pred_check_branch
          %141 = sbr.rel (%p139) target = $region16
        $region15: #{tpu_custom_call.1} parent=11 // pred_region
          %143 = vsyncadd [#allocation6], 0
          %s144 = sshll.u32 %s1, 4
          %s145 = int_to_ptr.hbm [resolvable:$true] %s144
          %s146 = sshll.u32 [#allocation5], 4
          %s147 = int_to_ptr.vmem [resolvable:$true] %s146
          %152 = dma.hbm_to_vmem [thread:$0]  %s145, 896, %s147, [#allocation6], 128, 128, 8
        $region16: #{tpu_custom_call.1} parent=11 // pred_fallthru
          _
        // Predicated region
        $region17: #{tpu_custom_call.1} parent=11 // pred_check
          %p153 = pneg %p96
        $region18: #{tpu_custom_call.1} parent=11 // pred_check_branch
          %155 = sbr.rel (%p153) target = $region20
        $region19: #{tpu_custom_call.1} parent=11 // pred_region
          _
        $region20: #{tpu_custom_call.1} parent=11 // pred_fallthru
          _
      $region12: #{tpu_custom_call.1} parent=5 // pred_fallthru
        _
      %p156 = scmp.lt.s32.totalorder %s16, 4
      // Predicated region
      $region21: #{tpu_custom_call.1} parent=5 // pred_check
        %p157 = pneg %p156
      $region22: #{tpu_custom_call.1} parent=5 // pred_check_branch
        %159 = sbr.rel (%p157) target = $region24
      $region23: #{tpu_custom_call.1} parent=5 // pred_region
        // Predicated region
        $region25: #{tpu_custom_call.1} parent=23 // pred_check
          %p160 = pneg %p48
        $region26: #{tpu_custom_call.1} parent=23 // pred_check_branch
          %162 = sbr.rel (%p160) target = $region28
        $region27: #{tpu_custom_call.1} parent=23 // pred_region
          %s163 = sand.u32 %s38, 1
          %s164 = scalar_lea.sflag [#allocation3], %s163
          %s165 = sand.u32 %s38, 1
          %s166 = smul.addr %s165, 528
          %s167 = scalar_lea.vmem [#allocation2], %s166
          %169 = vsyncadd %s164, 0
          %s170 = smul.addr %s23, 66
          %s171 = smul.addr %s170, 8
          %s172 = scalar_lea.hbm %s0, %s171
          %s173 = sshll.u32 %s172, 4
          %s174 = int_to_ptr.hbm [resolvable:$true] %s173
          %s175 = sshll.u32 %s167, 4
          %s176 = int_to_ptr.vmem [resolvable:$true] %s175
          %181 = dma.hbm_to_vmem [thread:$0]  %s174, 8448, %s176, %s164, 128, 128, 8
        $region28: #{tpu_custom_call.1} parent=23 // pred_fallthru
          _
      $region24: #{tpu_custom_call.1} parent=5 // pred_fallthru
        _
      %p182 = scmp.le.s32.totalorder 1, %s16
      %p183 = scmp.lt.s32.totalorder %s16, 5
      %p184 = pnand %p182, %p183
      %p185 = pneg %p184
      // Predicated region
      $region29: #{tpu_custom_call.1} parent=5 // pred_check
        _
      $region30: #{tpu_custom_call.1} parent=5 // pred_check_branch
        %187 = sbr.rel (%p184) target = $region32
      $region31: #{tpu_custom_call.1} parent=5 // pred_region
        %s188 = ssub.s32 %s16, 1
        %s189 = sand.u32 %s41, 1
        %s190 = scalar_lea.sflag [#allocation3], %s189
        %s191 = sand.u32 %s41, 1
        %s192 = smul.addr %s191, 528
        %s193 = scalar_lea.vmem [#allocation2], %s192
        // Predicated region
        $region33: #{tpu_custom_call.1} parent=31 // pred_check
          %p194 = pneg %p54
        $region34: #{tpu_custom_call.1} parent=31 // pred_check_branch
          %196 = sbr.rel (%p194) target = $region36
        $region35: #{tpu_custom_call.1} parent=31 // pred_region
          %198 = dma.done %s190, 8448
        $region36: #{tpu_custom_call.1} parent=31 // pred_fallthru
          _
        // Predicated region
        $region37: #{tpu_custom_call.1} parent=31 // pred_check
          %p199 = pneg %p75
        $region38: #{tpu_custom_call.1} parent=31 // pred_check_branch
          %201 = sbr.rel (%p199) target = $region40
        $region39: #{tpu_custom_call.1} parent=31 // pred_region
          %203 = dma.done [#allocation6], 896
        $region40: #{tpu_custom_call.1} parent=31 // pred_fallthru
          _
        %s204 = sand.u32 %s41, 1
        %s205 = scalar_lea.sflag [#allocation3], %s204
        %s206 = sand.u32 %s41, 1
        %s207 = smul.addr %s206, 528
        %s208 = scalar_lea.vmem [#allocation2], %s207
        %p209 = pneg %p54
        %p210 = pneg %p51
        %p211 = pneg %p75
        %p212 = pneg %p72
        %p213 = pneg %p96
        %p214 = pneg %p93
        %p215 = pneg %p124
        %p216 = pneg %p121
        %s217 = sand.u32 %s111, 1
        %s218 = scalar_lea.sflag [#allocation4], %s217
        %s219 = sand.u32 %s111, 1
        %s220 = smul.addr %s219, 128
        %s221 = scalar_lea.vmem [#allocation7], %s220
        %s222 = smul.u32 8, %s26
        %s223 = smul.u32 %s26, 8
        %v224 = vld [vmem:[%s2] sm:$0x1]
        %v226 = vperm.slane %v224, 0
        %s228 = smul.u32 %s223, 24
        %s229 = scalar_lea.vmem %s193, %s228 [#allocation2]
        %v230 = vld [vmem:[%s229] sm:$0xff]
        %v231 = vld [vmem:[%s229 + $0x8] sm:$0xff]
        %v232 = vld [vmem:[%s229 + $0x10] sm:$0xff]
        %v233 = vld [vmem:[%s229 + $0x18] sm:$0xff]
        %v234 = vld [vmem:[%s229 + $0x20] sm:$0xff]
        %v235 = vld [vmem:[%s229 + $0x28] sm:$0xff]
        %v236 = vld [vmem:[%s229 + $0x30] sm:$0xff]
        %v237 = vld [vmem:[%s229 + $0x38] sm:$0xff]
        %v238 = vld [vmem:[%s229 + $0x40] sm:$0xff]
        %v239 = vld [vmem:[%s229 + $0x48] sm:$0xff]
        %v240 = vld [vmem:[%s229 + $0x50] sm:$0xff]
        %v241 = vld [vmem:[%s229 + $0x58] sm:$0xff]
        %v242 = vld [vmem:[%s229 + $0x60] sm:$0xff]
        %v243 = vld [vmem:[%s229 + $0x68] sm:$0xff]
        %v244 = vld [vmem:[%s229 + $0x70] sm:$0xff]
        %v245 = vld [vmem:[%s229 + $0x78] sm:$0xff]
        %v246 = vld [vmem:[%s229 + $0x80] sm:$0xff]
        %v247 = vld [vmem:[%s229 + $0x88] sm:$0xff]
        %v248 = vld [vmem:[%s229 + $0x90] sm:$0xff]
        %v249 = vld [vmem:[%s229 + $0x98] sm:$0xff]
        %v250 = vld [vmem:[%s229 + $0xa0] sm:$0xff]
        %v251 = vld [vmem:[%s229 + $0xa8] sm:$0xff]
        %v252 = vld [vmem:[%s229 + $0xb0] sm:$0xff]
        %v253 = vld [vmem:[%s229 + $0xb8] sm:$0xff]
        %v254 = vld [vmem:[#allocation5] sm:$0x1]
        %v255 = vperm.slane %v254, 0
        %v256 = vmul.f32 %v230, %v255
        %v257 = vmul.f32 %v231, %v255
        %v258 = vmul.f32 %v233, %v255
        %v259 = vmul.f32 %v234, %v255
        %v260 = vmul.f32 %v236, %v255
        %v261 = vmul.f32 %v237, %v255
        %v262 = vmul.f32 %v239, %v255
        %v263 = vmul.f32 %v240, %v255
        %v264 = vmul.f32 %v242, %v255
        %v265 = vmul.f32 %v243, %v255
        %v266 = vmul.f32 %v245, %v255
        %v267 = vmul.f32 %v246, %v255
        %v268 = vmul.f32 %v248, %v255
        %v269 = vmul.f32 %v249, %v255
        %v270 = vmul.f32 %v251, %v255
        %v271 = vmul.f32 %v252, %v255
        %v272 = vadd.f32 %v226, %v256
        %v273 = vadd.f32 %v226, %v257
        %v274 = vadd.f32 %v226, %v258
        %v275 = vadd.f32 %v226, %v259
        %v276 = vadd.f32 %v226, %v260
        %v277 = vadd.f32 %v226, %v261
        %v278 = vadd.f32 %v226, %v262
        %v279 = vadd.f32 %v226, %v263
        %v280 = vadd.f32 %v226, %v264
        %v281 = vadd.f32 %v226, %v265
        %v282 = vadd.f32 %v226, %v266
        %v283 = vadd.f32 %v226, %v267
        %v284 = vadd.f32 %v226, %v268
        %v285 = vadd.f32 %v226, %v269
        %v286 = vadd.f32 %v226, %v270
        %v287 = vadd.f32 %v226, %v271
        %v288 = vld [vmem:[#allocation5 + $0x1] sm:$0x1]
        %v289 = vperm.slane %v288, 0
        %v290 = vmul.f32 %v230, %v289
        %v291 = vmul.f32 %v231, %v289
        %v292 = vmul.f32 %v232, %v289
        %v293 = vmul.f32 %v233, %v289
        %v294 = vmul.f32 %v234, %v289
        %v295 = vmul.f32 %v235, %v289
        %v296 = vmul.f32 %v236, %v289
        %v297 = vmul.f32 %v237, %v289
        %v298 = vmul.f32 %v238, %v289
        %v299 = vmul.f32 %v239, %v289
        %v300 = vmul.f32 %v240, %v289
        %v301 = vmul.f32 %v241, %v289
        %v302 = vmul.f32 %v242, %v289
        %v303 = vmul.f32 %v243, %v289
        %v304 = vmul.f32 %v244, %v289
        %v305 = vmul.f32 %v245, %v289
        %v306 = vmul.f32 %v246, %v289
        %v307 = vmul.f32 %v247, %v289
        %v308 = vmul.f32 %v248, %v289
        %v309 = vmul.f32 %v249, %v289
        %v310 = vmul.f32 %v250, %v289
        %v311 = vmul.f32 %v251, %v289
        %v312 = vmul.f32 %v252, %v289
        %v313 = vmul.f32 %v253, %v289
        %vm338 = vcmask 1046528
        %v339 = vrot.slane %v290, 1
        %v340 = vrot.slane %v291, 1
        %v341 = vsel %vm338, %v339, %v340
        %v342 = vrot.slane %v292, 1
        %v343 = vsel %vm338, %v340, %v342
        %v344 = vrot.slane %v293, 1
        %v345 = vrot.slane %v294, 1
        %v346 = vsel %vm338, %v344, %v345
        %v347 = vrot.slane %v295, 1
        %v348 = vsel %vm338, %v345, %v347
        %v349 = vrot.slane %v296, 1
        %v350 = vrot.slane %v297, 1
        %v351 = vsel %vm338, %v349, %v350
        %v352 = vrot.slane %v298, 1
        %v353 = vsel %vm338, %v350, %v352
        %v354 = vrot.slane %v299, 1
        %v355 = vrot.slane %v300, 1
        %v356 = vsel %vm338, %v354, %v355
        %v357 = vrot.slane %v301, 1
        %v358 = vsel %vm338, %v355, %v357
        %v359 = vrot.slane %v302, 1
        %v360 = vrot.slane %v303, 1
        %v361 = vsel %vm338, %v359, %v360
        %v362 = vrot.slane %v304, 1
        %v363 = vsel %vm338, %v360, %v362
        %v364 = vrot.slane %v305, 1
        %v365 = vrot.slane %v306, 1
        %v366 = vsel %vm338, %v364, %v365
        %v367 = vrot.slane %v307, 1
        %v368 = vsel %vm338, %v365, %v367
        %v369 = vrot.slane %v308, 1
        %v370 = vrot.slane %v309, 1
        %v371 = vsel %vm338, %v369, %v370
        %v372 = vrot.slane %v310, 1
        %v373 = vsel %vm338, %v370, %v372
        %v374 = vrot.slane %v311, 1
        %v375 = vrot.slane %v312, 1
        %v376 = vsel %vm338, %v374, %v375
        %v377 = vrot.slane %v313, 1
        %v378 = vsel %vm338, %v375, %v377
        %v395 = vadd.f32 %v272, %v341
        %v396 = vadd.f32 %v273, %v343
        %v397 = vadd.f32 %v274, %v346
        %v398 = vadd.f32 %v275, %v348
        %v399 = vadd.f32 %v276, %v351
        %v400 = vadd.f32 %v277, %v353
        %v401 = vadd.f32 %v278, %v356
        %v402 = vadd.f32 %v279, %v358
        %v403 = vadd.f32 %v280, %v361
        %v404 = vadd.f32 %v281, %v363
        %v405 = vadd.f32 %v282, %v366
        %v406 = vadd.f32 %v283, %v368
        %v407 = vadd.f32 %v284, %v371
        %v408 = vadd.f32 %v285, %v373
        %v409 = vadd.f32 %v286, %v376
        %v410 = vadd.f32 %v287, %v378
        %v411 = vld [vmem:[#allocation5 + $0x2] sm:$0x1]
        %v412 = vperm.slane %v411, 0
        %v413 = vmul.f32 %v230, %v412
        %v414 = vmul.f32 %v231, %v412
        %v415 = vmul.f32 %v232, %v412
        %v416 = vmul.f32 %v233, %v412
        %v417 = vmul.f32 %v234, %v412
        %v418 = vmul.f32 %v235, %v412
        %v419 = vmul.f32 %v236, %v412
        %v420 = vmul.f32 %v237, %v412
        %v421 = vmul.f32 %v238, %v412
        %v422 = vmul.f32 %v239, %v412
        %v423 = vmul.f32 %v240, %v412
        %v424 = vmul.f32 %v241, %v412
        %v425 = vmul.f32 %v242, %v412
        %v426 = vmul.f32 %v243, %v412
        %v427 = vmul.f32 %v244, %v412
        %v428 = vmul.f32 %v245, %v412
        %v429 = vmul.f32 %v246, %v412
        %v430 = vmul.f32 %v247, %v412
        %v431 = vmul.f32 %v248, %v412
        %v432 = vmul.f32 %v249, %v412
        %v433 = vmul.f32 %v250, %v412
        %v434 = vmul.f32 %v251, %v412
        %v435 = vmul.f32 %v252, %v412
        %v436 = vmul.f32 %v253, %v412
        %vm461 = vcmask 1045504
        %v462 = vrot.slane %v413, 2
        %v463 = vrot.slane %v414, 2
        %v464 = vsel %vm461, %v462, %v463
        %v465 = vrot.slane %v415, 2
        %v466 = vsel %vm461, %v463, %v465
        %v467 = vrot.slane %v416, 2
        %v468 = vrot.slane %v417, 2
        %v469 = vsel %vm461, %v467, %v468
        %v470 = vrot.slane %v418, 2
        %v471 = vsel %vm461, %v468, %v470
        %v472 = vrot.slane %v419, 2
        %v473 = vrot.slane %v420, 2
        %v474 = vsel %vm461, %v472, %v473
        %v475 = vrot.slane %v421, 2
        %v476 = vsel %vm461, %v473, %v475
        %v477 = vrot.slane %v422, 2
        %v478 = vrot.slane %v423, 2
        %v479 = vsel %vm461, %v477, %v478
        %v480 = vrot.slane %v424, 2
        %v481 = vsel %vm461, %v478, %v480
        %v482 = vrot.slane %v425, 2
        %v483 = vrot.slane %v426, 2
        %v484 = vsel %vm461, %v482, %v483
        %v485 = vrot.slane %v427, 2
        %v486 = vsel %vm461, %v483, %v485
        %v487 = vrot.slane %v428, 2
        %v488 = vrot.slane %v429, 2
        %v489 = vsel %vm461, %v487, %v488
        %v490 = vrot.slane %v430, 2
        %v491 = vsel %vm461, %v488, %v490
        %v492 = vrot.slane %v431, 2
        %v493 = vrot.slane %v432, 2
        %v494 = vsel %vm461, %v492, %v493
        %v495 = vrot.slane %v433, 2
        %v496 = vsel %vm461, %v493, %v495
        %v497 = vrot.slane %v434, 2
        %v498 = vrot.slane %v435, 2
        %v499 = vsel %vm461, %v497, %v498
        %v500 = vrot.slane %v436, 2
        %v501 = vsel %vm461, %v498, %v500
        %v518 = vadd.f32 %v395, %v464
        %v519 = vadd.f32 %v396, %v466
        %v520 = vadd.f32 %v397, %v469
        %v521 = vadd.f32 %v398, %v471
        %v522 = vadd.f32 %v399, %v474
        %v523 = vadd.f32 %v400, %v476
        %v524 = vadd.f32 %v401, %v479
        %v525 = vadd.f32 %v402, %v481
        %v526 = vadd.f32 %v403, %v484
        %v527 = vadd.f32 %v404, %v486
        %v528 = vadd.f32 %v405, %v489
        %v529 = vadd.f32 %v406, %v491
        %v530 = vadd.f32 %v407, %v494
        %v531 = vadd.f32 %v408, %v496
        %v532 = vadd.f32 %v409, %v499
        %v533 = vadd.f32 %v410, %v501
        %v534 = vld [vmem:[#allocation5 + $0x3] sm:$0x1]
        %v535 = vperm.slane %v534, 0
        %v536 = vmul.f32 %v230, %v535
        %v537 = vmul.f32 %v231, %v535
        %v538 = vmul.f32 %v232, %v535
        %v539 = vmul.f32 %v233, %v535
        %v540 = vmul.f32 %v234, %v535
        %v541 = vmul.f32 %v235, %v535
        %v542 = vmul.f32 %v236, %v535
        %v543 = vmul.f32 %v237, %v535
        %v544 = vmul.f32 %v238, %v535
        %v545 = vmul.f32 %v239, %v535
        %v546 = vmul.f32 %v240, %v535
        %v547 = vmul.f32 %v241, %v535
        %v548 = vmul.f32 %v242, %v535
        %v549 = vmul.f32 %v243, %v535
        %v550 = vmul.f32 %v244, %v535
        %v551 = vmul.f32 %v245, %v535
        %v552 = vmul.f32 %v246, %v535
        %v553 = vmul.f32 %v247, %v535
        %v554 = vmul.f32 %v248, %v535
        %v555 = vmul.f32 %v249, %v535
        %v556 = vmul.f32 %v250, %v535
        %v557 = vmul.f32 %v251, %v535
        %v558 = vmul.f32 %v252, %v535
        %v559 = vmul.f32 %v253, %v535
        %vm584 = vcmask 1044480
        %v585 = vrot.slane %v536, 3
        %v586 = vrot.slane %v537, 3
        %v587 = vsel %vm584, %v585, %v586
        %v588 = vrot.slane %v538, 3
        %v589 = vsel %vm584, %v586, %v588
        %v590 = vrot.slane %v539, 3
        %v591 = vrot.slane %v540, 3
        %v592 = vsel %vm584, %v590, %v591
        %v593 = vrot.slane %v541, 3
        %v594 = vsel %vm584, %v591, %v593
        %v595 = vrot.slane %v542, 3
        %v596 = vrot.slane %v543, 3
        %v597 = vsel %vm584, %v595, %v596
        %v598 = vrot.slane %v544, 3
        %v599 = vsel %vm584, %v596, %v598
        %v600 = vrot.slane %v545, 3
        %v601 = vrot.slane %v546, 3
        %v602 = vsel %vm584, %v600, %v601
        %v603 = vrot.slane %v547, 3
        %v604 = vsel %vm584, %v601, %v603
        %v605 = vrot.slane %v548, 3
        %v606 = vrot.slane %v549, 3
        %v607 = vsel %vm584, %v605, %v606
        %v608 = vrot.slane %v550, 3
        %v609 = vsel %vm584, %v606, %v608
        %v610 = vrot.slane %v551, 3
        %v611 = vrot.slane %v552, 3
        %v612 = vsel %vm584, %v610, %v611
        %v613 = vrot.slane %v553, 3
        %v614 = vsel %vm584, %v611, %v613
        %v615 = vrot.slane %v554, 3
        %v616 = vrot.slane %v555, 3
        %v617 = vsel %vm584, %v615, %v616
        %v618 = vrot.slane %v556, 3
        %v619 = vsel %vm584, %v616, %v618
        %v620 = vrot.slane %v557, 3
        %v621 = vrot.slane %v558, 3
        %v622 = vsel %vm584, %v620, %v621
        %v623 = vrot.slane %v559, 3
        %v624 = vsel %vm584, %v621, %v623
        %v641 = vadd.f32 %v518, %v587
        %v642 = vadd.f32 %v519, %v589
        %v643 = vadd.f32 %v520, %v592
        %v644 = vadd.f32 %v521, %v594
        %v645 = vadd.f32 %v522, %v597
        %v646 = vadd.f32 %v523, %v599
        %v647 = vadd.f32 %v524, %v602
        %v648 = vadd.f32 %v525, %v604
        %v649 = vadd.f32 %v526, %v607
        %v650 = vadd.f32 %v527, %v609
        %v651 = vadd.f32 %v528, %v612
        %v652 = vadd.f32 %v529, %v614
        %v653 = vadd.f32 %v530, %v617
        %v654 = vadd.f32 %v531, %v619
        %v655 = vadd.f32 %v532, %v622
        %v656 = vadd.f32 %v533, %v624
        %v657 = vld [vmem:[#allocation5 + $0x4] sm:$0x1]
        %v658 = vperm.slane %v657, 0
        %v659 = vmul.f32 %v230, %v658
        %v660 = vmul.f32 %v231, %v658
        %v661 = vmul.f32 %v232, %v658
        %v662 = vmul.f32 %v233, %v658
        %v663 = vmul.f32 %v234, %v658
        %v664 = vmul.f32 %v235, %v658
        %v665 = vmul.f32 %v236, %v658
        %v666 = vmul.f32 %v237, %v658
        %v667 = vmul.f32 %v238, %v658
        %v668 = vmul.f32 %v239, %v658
        %v669 = vmul.f32 %v240, %v658
        %v670 = vmul.f32 %v241, %v658
        %v671 = vmul.f32 %v242, %v658
        %v672 = vmul.f32 %v243, %v658
        %v673 = vmul.f32 %v244, %v658
        %v674 = vmul.f32 %v245, %v658
        %v675 = vmul.f32 %v246, %v658
        %v676 = vmul.f32 %v247, %v658
        %v677 = vmul.f32 %v248, %v658
        %v678 = vmul.f32 %v249, %v658
        %v679 = vmul.f32 %v250, %v658
        %v680 = vmul.f32 %v251, %v658
        %v681 = vmul.f32 %v252, %v658
        %v682 = vmul.f32 %v253, %v658
        %vm707 = vcmask 1043456
        %v708 = vrot.slane %v659, 4
        %v709 = vrot.slane %v660, 4
        %v710 = vsel %vm707, %v708, %v709
        %v711 = vrot.slane %v661, 4
        %v712 = vsel %vm707, %v709, %v711
        %v713 = vrot.slane %v662, 4
        %v714 = vrot.slane %v663, 4
        %v715 = vsel %vm707, %v713, %v714
        %v716 = vrot.slane %v664, 4
        %v717 = vsel %vm707, %v714, %v716
        %v718 = vrot.slane %v665, 4
        %v719 = vrot.slane %v666, 4
        %v720 = vsel %vm707, %v718, %v719
        %v721 = vrot.slane %v667, 4
        %v722 = vsel %vm707, %v719, %v721
        %v723 = vrot.slane %v668, 4
        %v724 = vrot.slane %v669, 4
        %v725 = vsel %vm707, %v723, %v724
        %v726 = vrot.slane %v670, 4
        %v727 = vsel %vm707, %v724, %v726
        %v728 = vrot.slane %v671, 4
        %v729 = vrot.slane %v672, 4
        %v730 = vsel %vm707, %v728, %v729
        %v731 = vrot.slane %v673, 4
        %v732 = vsel %vm707, %v729, %v731
        %v733 = vrot.slane %v674, 4
        %v734 = vrot.slane %v675, 4
        %v735 = vsel %vm707, %v733, %v734
        %v736 = vrot.slane %v676, 4
        %v737 = vsel %vm707, %v734, %v736
        %v738 = vrot.slane %v677, 4
        %v739 = vrot.slane %v678, 4
        %v740 = vsel %vm707, %v738, %v739
        %v741 = vrot.slane %v679, 4
        %v742 = vsel %vm707, %v739, %v741
        %v743 = vrot.slane %v680, 4
        %v744 = vrot.slane %v681, 4
        %v745 = vsel %vm707, %v743, %v744
        %v746 = vrot.slane %v682, 4
        %v747 = vsel %vm707, %v744, %v746
        %v764 = vadd.f32 %v641, %v710
        %v765 = vadd.f32 %v642, %v712
        %v766 = vadd.f32 %v643, %v715
        %v767 = vadd.f32 %v644, %v717
        %v768 = vadd.f32 %v645, %v720
        %v769 = vadd.f32 %v646, %v722
        %v770 = vadd.f32 %v647, %v725
        %v771 = vadd.f32 %v648, %v727
        %v772 = vadd.f32 %v649, %v730
        %v773 = vadd.f32 %v650, %v732
        %v774 = vadd.f32 %v651, %v735
        %v775 = vadd.f32 %v652, %v737
        %v776 = vadd.f32 %v653, %v740
        %v777 = vadd.f32 %v654, %v742
        %v778 = vadd.f32 %v655, %v745
        %v779 = vadd.f32 %v656, %v747
        %v780 = vld [vmem:[#allocation5 + $0x5] sm:$0x1]
        %v781 = vperm.slane %v780, 0
        %v782 = vmul.f32 %v230, %v781
        %v783 = vmul.f32 %v231, %v781
        %v784 = vmul.f32 %v232, %v781
        %v785 = vmul.f32 %v233, %v781
        %v786 = vmul.f32 %v234, %v781
        %v787 = vmul.f32 %v235, %v781
        %v788 = vmul.f32 %v236, %v781
        %v789 = vmul.f32 %v237, %v781
        %v790 = vmul.f32 %v238, %v781
        %v791 = vmul.f32 %v239, %v781
        %v792 = vmul.f32 %v240, %v781
        %v793 = vmul.f32 %v241, %v781
        %v794 = vmul.f32 %v242, %v781
        %v795 = vmul.f32 %v243, %v781
        %v796 = vmul.f32 %v244, %v781
        %v797 = vmul.f32 %v245, %v781
        %v798 = vmul.f32 %v246, %v781
        %v799 = vmul.f32 %v247, %v781
        %v800 = vmul.f32 %v248, %v781
        %v801 = vmul.f32 %v249, %v781
        %v802 = vmul.f32 %v250, %v781
        %v803 = vmul.f32 %v251, %v781
        %v804 = vmul.f32 %v252, %v781
        %v805 = vmul.f32 %v253, %v781
        %vm830 = vcmask 1042432
        %v831 = vrot.slane %v782, 5
        %v832 = vrot.slane %v783, 5
        %v833 = vsel %vm830, %v831, %v832
        %v834 = vrot.slane %v784, 5
        %v835 = vsel %vm830, %v832, %v834
        %v836 = vrot.slane %v785, 5
        %v837 = vrot.slane %v786, 5
        %v838 = vsel %vm830, %v836, %v837
        %v839 = vrot.slane %v787, 5
        %v840 = vsel %vm830, %v837, %v839
        %v841 = vrot.slane %v788, 5
        %v842 = vrot.slane %v789, 5
        %v843 = vsel %vm830, %v841, %v842
        %v844 = vrot.slane %v790, 5
        %v845 = vsel %vm830, %v842, %v844
        %v846 = vrot.slane %v791, 5
        %v847 = vrot.slane %v792, 5
        %v848 = vsel %vm830, %v846, %v847
        %v849 = vrot.slane %v793, 5
        %v850 = vsel %vm830, %v847, %v849
        %v851 = vrot.slane %v794, 5
        %v852 = vrot.slane %v795, 5
        %v853 = vsel %vm830, %v851, %v852
        %v854 = vrot.slane %v796, 5
        %v855 = vsel %vm830, %v852, %v854
        %v856 = vrot.slane %v797, 5
        %v857 = vrot.slane %v798, 5
        %v858 = vsel %vm830, %v856, %v857
        %v859 = vrot.slane %v799, 5
        %v860 = vsel %vm830, %v857, %v859
        %v861 = vrot.slane %v800, 5
        %v862 = vrot.slane %v801, 5
        %v863 = vsel %vm830, %v861, %v862
        %v864 = vrot.slane %v802, 5
        %v865 = vsel %vm830, %v862, %v864
        %v866 = vrot.slane %v803, 5
        %v867 = vrot.slane %v804, 5
        %v868 = vsel %vm830, %v866, %v867
        %v869 = vrot.slane %v805, 5
        %v870 = vsel %vm830, %v867, %v869
        %v887 = vadd.f32 %v764, %v833
        %v888 = vadd.f32 %v765, %v835
        %v889 = vadd.f32 %v766, %v838
        %v890 = vadd.f32 %v767, %v840
        %v891 = vadd.f32 %v768, %v843
        %v892 = vadd.f32 %v769, %v845
        %v893 = vadd.f32 %v770, %v848
        %v894 = vadd.f32 %v771, %v850
        %v895 = vadd.f32 %v772, %v853
        %v896 = vadd.f32 %v773, %v855
        %v897 = vadd.f32 %v774, %v858
        %v898 = vadd.f32 %v775, %v860
        %v899 = vadd.f32 %v776, %v863
        %v900 = vadd.f32 %v777, %v865
        %v901 = vadd.f32 %v778, %v868
        %v902 = vadd.f32 %v779, %v870
        %v903 = vld [vmem:[#allocation5 + $0x6] sm:$0x1]
        %v904 = vperm.slane %v903, 0
        %v905 = vmul.f32 %v230, %v904
        %v906 = vmul.f32 %v231, %v904
        %v907 = vmul.f32 %v232, %v904
        %v908 = vmul.f32 %v233, %v904
        %v909 = vmul.f32 %v234, %v904
        %v910 = vmul.f32 %v235, %v904
        %v911 = vmul.f32 %v236, %v904
        %v912 = vmul.f32 %v237, %v904
        %v913 = vmul.f32 %v238, %v904
        %v914 = vmul.f32 %v239, %v904
        %v915 = vmul.f32 %v240, %v904
        %v916 = vmul.f32 %v241, %v904
        %v917 = vmul.f32 %v242, %v904
        %v918 = vmul.f32 %v243, %v904
        %v919 = vmul.f32 %v244, %v904
        %v920 = vmul.f32 %v245, %v904
        %v921 = vmul.f32 %v246, %v904
        %v922 = vmul.f32 %v247, %v904
        %v923 = vmul.f32 %v248, %v904
        %v924 = vmul.f32 %v249, %v904
        %v925 = vmul.f32 %v250, %v904
        %v926 = vmul.f32 %v251, %v904
        %v927 = vmul.f32 %v252, %v904
        %v928 = vmul.f32 %v253, %v904
        %vm953 = vcmask 1041408
        %v954 = vrot.slane %v905, 6
        %v955 = vrot.slane %v906, 6
        %v956 = vsel %vm953, %v954, %v955
        %v957 = vrot.slane %v907, 6
        %v958 = vsel %vm953, %v955, %v957
        %v959 = vrot.slane %v908, 6
        %v960 = vrot.slane %v909, 6
        %v961 = vsel %vm953, %v959, %v960
        %v962 = vrot.slane %v910, 6
        %v963 = vsel %vm953, %v960, %v962
        %v964 = vrot.slane %v911, 6
        %v965 = vrot.slane %v912, 6
        %v966 = vsel %vm953, %v964, %v965
        %v967 = vrot.slane %v913, 6
        %v968 = vsel %vm953, %v965, %v967
        %v969 = vrot.slane %v914, 6
        %v970 = vrot.slane %v915, 6
        %v971 = vsel %vm953, %v969, %v970
        %v972 = vrot.slane %v916, 6
        %v973 = vsel %vm953, %v970, %v972
        %v974 = vrot.slane %v917, 6
        %v975 = vrot.slane %v918, 6
        %v976 = vsel %vm953, %v974, %v975
        %v977 = vrot.slane %v919, 6
        %v978 = vsel %vm953, %v975, %v977
        %v979 = vrot.slane %v920, 6
        %v980 = vrot.slane %v921, 6
        %v981 = vsel %vm953, %v979, %v980
        %v982 = vrot.slane %v922, 6
        %v983 = vsel %vm953, %v980, %v982
        %v984 = vrot.slane %v923, 6
        %v985 = vrot.slane %v924, 6
        %v986 = vsel %vm953, %v984, %v985
        %v987 = vrot.slane %v925, 6
        %v988 = vsel %vm953, %v985, %v987
        %v989 = vrot.slane %v926, 6
        %v990 = vrot.slane %v927, 6
        %v991 = vsel %vm953, %v989, %v990
        %v992 = vrot.slane %v928, 6
        %v993 = vsel %vm953, %v990, %v992
        %v1010 = vadd.f32 %v887, %v956
        %v1011 = vadd.f32 %v888, %v958
        %v1012 = vadd.f32 %v889, %v961
        %v1013 = vadd.f32 %v890, %v963
        %v1014 = vadd.f32 %v891, %v966
        %v1015 = vadd.f32 %v892, %v968
        %v1016 = vadd.f32 %v893, %v971
        %v1017 = vadd.f32 %v894, %v973
        %v1018 = vadd.f32 %v895, %v976
        %v1019 = vadd.f32 %v896, %v978
        %v1020 = vadd.f32 %v897, %v981
        %v1021 = vadd.f32 %v898, %v983
        %v1022 = vadd.f32 %v899, %v986
        %v1023 = vadd.f32 %v900, %v988
        %v1024 = vadd.f32 %v901, %v991
        %v1025 = vadd.f32 %v902, %v993
        %s1026 = sadd.s32 %s223, 1
        %s1027 = smul.u32 %s1026, 24
        %s1028 = scalar_lea.vmem %s193, %s1027 [#allocation2]
        %v1029 = vld [vmem:[%s1028] sm:$0xff]
        %v1030 = vld [vmem:[%s1028 + $0x8] sm:$0xff]
        %v1031 = vld [vmem:[%s1028 + $0x10] sm:$0xff]
        %v1032 = vld [vmem:[%s1028 + $0x18] sm:$0xff]
        %v1033 = vld [vmem:[%s1028 + $0x20] sm:$0xff]
        %v1034 = vld [vmem:[%s1028 + $0x28] sm:$0xff]
        %v1035 = vld [vmem:[%s1028 + $0x30] sm:$0xff]
        %v1036 = vld [vmem:[%s1028 + $0x38] sm:$0xff]
        %v1037 = vld [vmem:[%s1028 + $0x40] sm:$0xff]
        %v1038 = vld [vmem:[%s1028 + $0x48] sm:$0xff]
        %v1039 = vld [vmem:[%s1028 + $0x50] sm:$0xff]
        %v1040 = vld [vmem:[%s1028 + $0x58] sm:$0xff]
        %v1041 = vld [vmem:[%s1028 + $0x60] sm:$0xff]
        %v1042 = vld [vmem:[%s1028 + $0x68] sm:$0xff]
        %v1043 = vld [vmem:[%s1028 + $0x70] sm:$0xff]
        %v1044 = vld [vmem:[%s1028 + $0x78] sm:$0xff]
        %v1045 = vld [vmem:[%s1028 + $0x80] sm:$0xff]
        %v1046 = vld [vmem:[%s1028 + $0x88] sm:$0xff]
        %v1047 = vld [vmem:[%s1028 + $0x90] sm:$0xff]
        %v1048 = vld [vmem:[%s1028 + $0x98] sm:$0xff]
        %v1049 = vld [vmem:[%s1028 + $0xa0] sm:$0xff]
        %v1050 = vld [vmem:[%s1028 + $0xa8] sm:$0xff]
        %v1051 = vld [vmem:[%s1028 + $0xb0] sm:$0xff]
        %v1052 = vld [vmem:[%s1028 + $0xb8] sm:$0xff]
        %s1053 = scalar_lea.vmem [#allocation5], 8
        %v1054 = vld [vmem:[%s1053] sm:$0x1]
        %v1055 = vperm.slane %v1054, 0
        %v1056 = vmul.f32 %v1029, %v1055
        %v1057 = vmul.f32 %v1030, %v1055
        %v1058 = vmul.f32 %v1032, %v1055
        %v1059 = vmul.f32 %v1033, %v1055
        %v1060 = vmul.f32 %v1035, %v1055
        %v1061 = vmul.f32 %v1036, %v1055
        %v1062 = vmul.f32 %v1038, %v1055
        %v1063 = vmul.f32 %v1039, %v1055
        %v1064 = vmul.f32 %v1041, %v1055
        %v1065 = vmul.f32 %v1042, %v1055
        %v1066 = vmul.f32 %v1044, %v1055
        %v1067 = vmul.f32 %v1045, %v1055
        %v1068 = vmul.f32 %v1047, %v1055
        %v1069 = vmul.f32 %v1048, %v1055
        %v1070 = vmul.f32 %v1050, %v1055
        %v1071 = vmul.f32 %v1051, %v1055
        %v1072 = vadd.f32 %v1010, %v1056
        %v1073 = vadd.f32 %v1011, %v1057
        %v1074 = vadd.f32 %v1012, %v1058
        %v1075 = vadd.f32 %v1013, %v1059
        %v1076 = vadd.f32 %v1014, %v1060
        %v1077 = vadd.f32 %v1015, %v1061
        %v1078 = vadd.f32 %v1016, %v1062
        %v1079 = vadd.f32 %v1017, %v1063
        %v1080 = vadd.f32 %v1018, %v1064
        %v1081 = vadd.f32 %v1019, %v1065
        %v1082 = vadd.f32 %v1020, %v1066
        %v1083 = vadd.f32 %v1021, %v1067
        %v1084 = vadd.f32 %v1022, %v1068
        %v1085 = vadd.f32 %v1023, %v1069
        %v1086 = vadd.f32 %v1024, %v1070
        %v1087 = vadd.f32 %v1025, %v1071
        %v1088 = vld [vmem:[%s1053 + $0x1] sm:$0x1]
        %v1089 = vperm.slane %v1088, 0
        %v1090 = vmul.f32 %v1029, %v1089
        %v1091 = vmul.f32 %v1030, %v1089
        %v1092 = vmul.f32 %v1031, %v1089
        %v1093 = vmul.f32 %v1032, %v1089
        %v1094 = vmul.f32 %v1033, %v1089
        %v1095 = vmul.f32 %v1034, %v1089
        %v1096 = vmul.f32 %v1035, %v1089
        %v1097 = vmul.f32 %v1036, %v1089
        %v1098 = vmul.f32 %v1037, %v1089
        %v1099 = vmul.f32 %v1038, %v1089
        %v1100 = vmul.f32 %v1039, %v1089
        %v1101 = vmul.f32 %v1040, %v1089
        %v1102 = vmul.f32 %v1041, %v1089
        %v1103 = vmul.f32 %v1042, %v1089
        %v1104 = vmul.f32 %v1043, %v1089
        %v1105 = vmul.f32 %v1044, %v1089
        %v1106 = vmul.f32 %v1045, %v1089
        %v1107 = vmul.f32 %v1046, %v1089
        %v1108 = vmul.f32 %v1047, %v1089
        %v1109 = vmul.f32 %v1048, %v1089
        %v1110 = vmul.f32 %v1049, %v1089
        %v1111 = vmul.f32 %v1050, %v1089
        %v1112 = vmul.f32 %v1051, %v1089
        %v1113 = vmul.f32 %v1052, %v1089
        %v1138 = vrot.slane %v1090, 1
        %v1139 = vrot.slane %v1091, 1
        %v1140 = vsel %vm338, %v1138, %v1139
        %v1141 = vrot.slane %v1092, 1
        %v1142 = vsel %vm338, %v1139, %v1141
        %v1143 = vrot.slane %v1093, 1
        %v1144 = vrot.slane %v1094, 1
        %v1145 = vsel %vm338, %v1143, %v1144
        %v1146 = vrot.slane %v1095, 1
        %v1147 = vsel %vm338, %v1144, %v1146
        %v1148 = vrot.slane %v1096, 1
        %v1149 = vrot.slane %v1097, 1
        %v1150 = vsel %vm338, %v1148, %v1149
        %v1151 = vrot.slane %v1098, 1
        %v1152 = vsel %vm338, %v1149, %v1151
        %v1153 = vrot.slane %v1099, 1
        %v1154 = vrot.slane %v1100, 1
        %v1155 = vsel %vm338, %v1153, %v1154
        %v1156 = vrot.slane %v1101, 1
        %v1157 = vsel %vm338, %v1154, %v1156
        %v1158 = vrot.slane %v1102, 1
        %v1159 = vrot.slane %v1103, 1
        %v1160 = vsel %vm338, %v1158, %v1159
        %v1161 = vrot.slane %v1104, 1
        %v1162 = vsel %vm338, %v1159, %v1161
        %v1163 = vrot.slane %v1105, 1
        %v1164 = vrot.slane %v1106, 1
        %v1165 = vsel %vm338, %v1163, %v1164
        %v1166 = vrot.slane %v1107, 1
        %v1167 = vsel %vm338, %v1164, %v1166
        %v1168 = vrot.slane %v1108, 1
        %v1169 = vrot.slane %v1109, 1
        %v1170 = vsel %vm338, %v1168, %v1169
        %v1171 = vrot.slane %v1110, 1
        %v1172 = vsel %vm338, %v1169, %v1171
        %v1173 = vrot.slane %v1111, 1
        %v1174 = vrot.slane %v1112, 1
        %v1175 = vsel %vm338, %v1173, %v1174
        %v1176 = vrot.slane %v1113, 1
        %v1177 = vsel %vm338, %v1174, %v1176
        %v1194 = vadd.f32 %v1072, %v1140
        %v1195 = vadd.f32 %v1073, %v1142
        %v1196 = vadd.f32 %v1074, %v1145
        %v1197 = vadd.f32 %v1075, %v1147
        %v1198 = vadd.f32 %v1076, %v1150
        %v1199 = vadd.f32 %v1077, %v1152
        %v1200 = vadd.f32 %v1078, %v1155
        %v1201 = vadd.f32 %v1079, %v1157
        %v1202 = vadd.f32 %v1080, %v1160
        %v1203 = vadd.f32 %v1081, %v1162
        %v1204 = vadd.f32 %v1082, %v1165
        %v1205 = vadd.f32 %v1083, %v1167
        %v1206 = vadd.f32 %v1084, %v1170
        %v1207 = vadd.f32 %v1085, %v1172
        %v1208 = vadd.f32 %v1086, %v1175
        %v1209 = vadd.f32 %v1087, %v1177
        %v1210 = vld [vmem:[%s1053 + $0x2] sm:$0x1]
        %v1211 = vperm.slane %v1210, 0
        %v1212 = vmul.f32 %v1029, %v1211
        %v1213 = vmul.f32 %v1030, %v1211
        %v1214 = vmul.f32 %v1031, %v1211
        %v1215 = vmul.f32 %v1032, %v1211
        %v1216 = vmul.f32 %v1033, %v1211
        %v1217 = vmul.f32 %v1034, %v1211
        %v1218 = vmul.f32 %v1035, %v1211
        %v1219 = vmul.f32 %v1036, %v1211
        %v1220 = vmul.f32 %v1037, %v1211
        %v1221 = vmul.f32 %v1038, %v1211
        %v1222 = vmul.f32 %v1039, %v1211
        %v1223 = vmul.f32 %v1040, %v1211
        %v1224 = vmul.f32 %v1041, %v1211
        %v1225 = vmul.f32 %v1042, %v1211
        %v1226 = vmul.f32 %v1043, %v1211
        %v1227 = vmul.f32 %v1044, %v1211
        %v1228 = vmul.f32 %v1045, %v1211
        %v1229 = vmul.f32 %v1046, %v1211
        %v1230 = vmul.f32 %v1047, %v1211
        %v1231 = vmul.f32 %v1048, %v1211
        %v1232 = vmul.f32 %v1049, %v1211
        %v1233 = vmul.f32 %v1050, %v1211
        %v1234 = vmul.f32 %v1051, %v1211
        %v1235 = vmul.f32 %v1052, %v1211
        %v1260 = vrot.slane %v1212, 2
        %v1261 = vrot.slane %v1213, 2
        %v1262 = vsel %vm461, %v1260, %v1261
        %v1263 = vrot.slane %v1214, 2
        %v1264 = vsel %vm461, %v1261, %v1263
        %v1265 = vrot.slane %v1215, 2
        %v1266 = vrot.slane %v1216, 2
        %v1267 = vsel %vm461, %v1265, %v1266
        %v1268 = vrot.slane %v1217, 2
        %v1269 = vsel %vm461, %v1266, %v1268
        %v1270 = vrot.slane %v1218, 2
        %v1271 = vrot.slane %v1219, 2
        %v1272 = vsel %vm461, %v1270, %v1271
        %v1273 = vrot.slane %v1220, 2
        %v1274 = vsel %vm461, %v1271, %v1273
        %v1275 = vrot.slane %v1221, 2
        %v1276 = vrot.slane %v1222, 2
        %v1277 = vsel %vm461, %v1275, %v1276
        %v1278 = vrot.slane %v1223, 2
        %v1279 = vsel %vm461, %v1276, %v1278
        %v1280 = vrot.slane %v1224, 2
        %v1281 = vrot.slane %v1225, 2
        %v1282 = vsel %vm461, %v1280, %v1281
        %v1283 = vrot.slane %v1226, 2
        %v1284 = vsel %vm461, %v1281, %v1283
        %v1285 = vrot.slane %v1227, 2
        %v1286 = vrot.slane %v1228, 2
        %v1287 = vsel %vm461, %v1285, %v1286
        %v1288 = vrot.slane %v1229, 2
        %v1289 = vsel %vm461, %v1286, %v1288
        %v1290 = vrot.slane %v1230, 2
        %v1291 = vrot.slane %v1231, 2
        %v1292 = vsel %vm461, %v1290, %v1291
        %v1293 = vrot.slane %v1232, 2
        %v1294 = vsel %vm461, %v1291, %v1293
        %v1295 = vrot.slane %v1233, 2
        %v1296 = vrot.slane %v1234, 2
        %v1297 = vsel %vm461, %v1295, %v1296
        %v1298 = vrot.slane %v1235, 2
        %v1299 = vsel %vm461, %v1296, %v1298
        %v1316 = vadd.f32 %v1194, %v1262
        %v1317 = vadd.f32 %v1195, %v1264
        %v1318 = vadd.f32 %v1196, %v1267
        %v1319 = vadd.f32 %v1197, %v1269
        %v1320 = vadd.f32 %v1198, %v1272
        %v1321 = vadd.f32 %v1199, %v1274
        %v1322 = vadd.f32 %v1200, %v1277
        %v1323 = vadd.f32 %v1201, %v1279
        %v1324 = vadd.f32 %v1202, %v1282
        %v1325 = vadd.f32 %v1203, %v1284
        %v1326 = vadd.f32 %v1204, %v1287
        %v1327 = vadd.f32 %v1205, %v1289
        %v1328 = vadd.f32 %v1206, %v1292
        %v1329 = vadd.f32 %v1207, %v1294
        %v1330 = vadd.f32 %v1208, %v1297
        %v1331 = vadd.f32 %v1209, %v1299
        %v1332 = vld [vmem:[%s1053 + $0x3] sm:$0x1]
        %v1333 = vperm.slane %v1332, 0
        %v1334 = vmul.f32 %v1029, %v1333
        %v1335 = vmul.f32 %v1030, %v1333
        %v1336 = vmul.f32 %v1031, %v1333
        %v1337 = vmul.f32 %v1032, %v1333
        %v1338 = vmul.f32 %v1033, %v1333
        %v1339 = vmul.f32 %v1034, %v1333
        %v1340 = vmul.f32 %v1035, %v1333
        %v1341 = vmul.f32 %v1036, %v1333
        %v1342 = vmul.f32 %v1037, %v1333
        %v1343 = vmul.f32 %v1038, %v1333
        %v1344 = vmul.f32 %v1039, %v1333
        %v1345 = vmul.f32 %v1040, %v1333
        %v1346 = vmul.f32 %v1041, %v1333
        %v1347 = vmul.f32 %v1042, %v1333
        %v1348 = vmul.f32 %v1043, %v1333
        %v1349 = vmul.f32 %v1044, %v1333
        %v1350 = vmul.f32 %v1045, %v1333
        %v1351 = vmul.f32 %v1046, %v1333
        %v1352 = vmul.f32 %v1047, %v1333
        %v1353 = vmul.f32 %v1048, %v1333
        %v1354 = vmul.f32 %v1049, %v1333
        %v1355 = vmul.f32 %v1050, %v1333
        %v1356 = vmul.f32 %v1051, %v1333
        %v1357 = vmul.f32 %v1052, %v1333
        %v1382 = vrot.slane %v1334, 3
        %v1383 = vrot.slane %v1335, 3
        %v1384 = vsel %vm584, %v1382, %v1383
        %v1385 = vrot.slane %v1336, 3
        %v1386 = vsel %vm584, %v1383, %v1385
        %v1387 = vrot.slane %v1337, 3
        %v1388 = vrot.slane %v1338, 3
        %v1389 = vsel %vm584, %v1387, %v1388
        %v1390 = vrot.slane %v1339, 3
        %v1391 = vsel %vm584, %v1388, %v1390
        %v1392 = vrot.slane %v1340, 3
        %v1393 = vrot.slane %v1341, 3
        %v1394 = vsel %vm584, %v1392, %v1393
        %v1395 = vrot.slane %v1342, 3
        %v1396 = vsel %vm584, %v1393, %v1395
        %v1397 = vrot.slane %v1343, 3
        %v1398 = vrot.slane %v1344, 3
        %v1399 = vsel %vm584, %v1397, %v1398
        %v1400 = vrot.slane %v1345, 3
        %v1401 = vsel %vm584, %v1398, %v1400
        %v1402 = vrot.slane %v1346, 3
        %v1403 = vrot.slane %v1347, 3
        %v1404 = vsel %vm584, %v1402, %v1403
        %v1405 = vrot.slane %v1348, 3
        %v1406 = vsel %vm584, %v1403, %v1405
        %v1407 = vrot.slane %v1349, 3
        %v1408 = vrot.slane %v1350, 3
        %v1409 = vsel %vm584, %v1407, %v1408
        %v1410 = vrot.slane %v1351, 3
        %v1411 = vsel %vm584, %v1408, %v1410
        %v1412 = vrot.slane %v1352, 3
        %v1413 = vrot.slane %v1353, 3
        %v1414 = vsel %vm584, %v1412, %v1413
        %v1415 = vrot.slane %v1354, 3
        %v1416 = vsel %vm584, %v1413, %v1415
        %v1417 = vrot.slane %v1355, 3
        %v1418 = vrot.slane %v1356, 3
        %v1419 = vsel %vm584, %v1417, %v1418
        %v1420 = vrot.slane %v1357, 3
        %v1421 = vsel %vm584, %v1418, %v1420
        %v1438 = vadd.f32 %v1316, %v1384
        %v1439 = vadd.f32 %v1317, %v1386
        %v1440 = vadd.f32 %v1318, %v1389
        %v1441 = vadd.f32 %v1319, %v1391
        %v1442 = vadd.f32 %v1320, %v1394
        %v1443 = vadd.f32 %v1321, %v1396
        %v1444 = vadd.f32 %v1322, %v1399
        %v1445 = vadd.f32 %v1323, %v1401
        %v1446 = vadd.f32 %v1324, %v1404
        %v1447 = vadd.f32 %v1325, %v1406
        %v1448 = vadd.f32 %v1326, %v1409
        %v1449 = vadd.f32 %v1327, %v1411
        %v1450 = vadd.f32 %v1328, %v1414
        %v1451 = vadd.f32 %v1329, %v1416
        %v1452 = vadd.f32 %v1330, %v1419
        %v1453 = vadd.f32 %v1331, %v1421
        %v1454 = vld [vmem:[%s1053 + $0x4] sm:$0x1]
        %v1455 = vperm.slane %v1454, 0
        %v1456 = vmul.f32 %v1029, %v1455
        %v1457 = vmul.f32 %v1030, %v1455
        %v1458 = vmul.f32 %v1031, %v1455
        %v1459 = vmul.f32 %v1032, %v1455
        %v1460 = vmul.f32 %v1033, %v1455
        %v1461 = vmul.f32 %v1034, %v1455
        %v1462 = vmul.f32 %v1035, %v1455
        %v1463 = vmul.f32 %v1036, %v1455
        %v1464 = vmul.f32 %v1037, %v1455
        %v1465 = vmul.f32 %v1038, %v1455
        %v1466 = vmul.f32 %v1039, %v1455
        %v1467 = vmul.f32 %v1040, %v1455
        %v1468 = vmul.f32 %v1041, %v1455
        %v1469 = vmul.f32 %v1042, %v1455
        %v1470 = vmul.f32 %v1043, %v1455
        %v1471 = vmul.f32 %v1044, %v1455
        %v1472 = vmul.f32 %v1045, %v1455
        %v1473 = vmul.f32 %v1046, %v1455
        %v1474 = vmul.f32 %v1047, %v1455
        %v1475 = vmul.f32 %v1048, %v1455
        %v1476 = vmul.f32 %v1049, %v1455
        %v1477 = vmul.f32 %v1050, %v1455
        %v1478 = vmul.f32 %v1051, %v1455
        %v1479 = vmul.f32 %v1052, %v1455
        %v1504 = vrot.slane %v1456, 4
        %v1505 = vrot.slane %v1457, 4
        %v1506 = vsel %vm707, %v1504, %v1505
        %v1507 = vrot.slane %v1458, 4
        %v1508 = vsel %vm707, %v1505, %v1507
        %v1509 = vrot.slane %v1459, 4
        %v1510 = vrot.slane %v1460, 4
        %v1511 = vsel %vm707, %v1509, %v1510
        %v1512 = vrot.slane %v1461, 4
        %v1513 = vsel %vm707, %v1510, %v1512
        %v1514 = vrot.slane %v1462, 4
        %v1515 = vrot.slane %v1463, 4
        %v1516 = vsel %vm707, %v1514, %v1515
        %v1517 = vrot.slane %v1464, 4
        %v1518 = vsel %vm707, %v1515, %v1517
        %v1519 = vrot.slane %v1465, 4
        %v1520 = vrot.slane %v1466, 4
        %v1521 = vsel %vm707, %v1519, %v1520
        %v1522 = vrot.slane %v1467, 4
        %v1523 = vsel %vm707, %v1520, %v1522
        %v1524 = vrot.slane %v1468, 4
        %v1525 = vrot.slane %v1469, 4
        %v1526 = vsel %vm707, %v1524, %v1525
        %v1527 = vrot.slane %v1470, 4
        %v1528 = vsel %vm707, %v1525, %v1527
        %v1529 = vrot.slane %v1471, 4
        %v1530 = vrot.slane %v1472, 4
        %v1531 = vsel %vm707, %v1529, %v1530
        %v1532 = vrot.slane %v1473, 4
        %v1533 = vsel %vm707, %v1530, %v1532
        %v1534 = vrot.slane %v1474, 4
        %v1535 = vrot.slane %v1475, 4
        %v1536 = vsel %vm707, %v1534, %v1535
        %v1537 = vrot.slane %v1476, 4
        %v1538 = vsel %vm707, %v1535, %v1537
        %v1539 = vrot.slane %v1477, 4
        %v1540 = vrot.slane %v1478, 4
        %v1541 = vsel %vm707, %v1539, %v1540
        %v1542 = vrot.slane %v1479, 4
        %v1543 = vsel %vm707, %v1540, %v1542
        %v1560 = vadd.f32 %v1438, %v1506
        %v1561 = vadd.f32 %v1439, %v1508
        %v1562 = vadd.f32 %v1440, %v1511
        %v1563 = vadd.f32 %v1441, %v1513
        %v1564 = vadd.f32 %v1442, %v1516
        %v1565 = vadd.f32 %v1443, %v1518
        %v1566 = vadd.f32 %v1444, %v1521
        %v1567 = vadd.f32 %v1445, %v1523
        %v1568 = vadd.f32 %v1446, %v1526
        %v1569 = vadd.f32 %v1447, %v1528
        %v1570 = vadd.f32 %v1448, %v1531
        %v1571 = vadd.f32 %v1449, %v1533
        %v1572 = vadd.f32 %v1450, %v1536
        %v1573 = vadd.f32 %v1451, %v1538
        %v1574 = vadd.f32 %v1452, %v1541
        %v1575 = vadd.f32 %v1453, %v1543
        %v1576 = vld [vmem:[%s1053 + $0x5] sm:$0x1]
        %v1577 = vperm.slane %v1576, 0
        %v1578 = vmul.f32 %v1029, %v1577
        %v1579 = vmul.f32 %v1030, %v1577
        %v1580 = vmul.f32 %v1031, %v1577
        %v1581 = vmul.f32 %v1032, %v1577
        %v1582 = vmul.f32 %v1033, %v1577
        %v1583 = vmul.f32 %v1034, %v1577
        %v1584 = vmul.f32 %v1035, %v1577
        %v1585 = vmul.f32 %v1036, %v1577
        %v1586 = vmul.f32 %v1037, %v1577
        %v1587 = vmul.f32 %v1038, %v1577
        %v1588 = vmul.f32 %v1039, %v1577
        %v1589 = vmul.f32 %v1040, %v1577
        %v1590 = vmul.f32 %v1041, %v1577
        %v1591 = vmul.f32 %v1042, %v1577
        %v1592 = vmul.f32 %v1043, %v1577
        %v1593 = vmul.f32 %v1044, %v1577
        %v1594 = vmul.f32 %v1045, %v1577
        %v1595 = vmul.f32 %v1046, %v1577
        %v1596 = vmul.f32 %v1047, %v1577
        %v1597 = vmul.f32 %v1048, %v1577
        %v1598 = vmul.f32 %v1049, %v1577
        %v1599 = vmul.f32 %v1050, %v1577
        %v1600 = vmul.f32 %v1051, %v1577
        %v1601 = vmul.f32 %v1052, %v1577
        %v1626 = vrot.slane %v1578, 5
        %v1627 = vrot.slane %v1579, 5
        %v1628 = vsel %vm830, %v1626, %v1627
        %v1629 = vrot.slane %v1580, 5
        %v1630 = vsel %vm830, %v1627, %v1629
        %v1631 = vrot.slane %v1581, 5
        %v1632 = vrot.slane %v1582, 5
        %v1633 = vsel %vm830, %v1631, %v1632
        %v1634 = vrot.slane %v1583, 5
        %v1635 = vsel %vm830, %v1632, %v1634
        %v1636 = vrot.slane %v1584, 5
        %v1637 = vrot.slane %v1585, 5
        %v1638 = vsel %vm830, %v1636, %v1637
        %v1639 = vrot.slane %v1586, 5
        %v1640 = vsel %vm830, %v1637, %v1639
        %v1641 = vrot.slane %v1587, 5
        %v1642 = vrot.slane %v1588, 5
        %v1643 = vsel %vm830, %v1641, %v1642
        %v1644 = vrot.slane %v1589, 5
        %v1645 = vsel %vm830, %v1642, %v1644
        %v1646 = vrot.slane %v1590, 5
        %v1647 = vrot.slane %v1591, 5
        %v1648 = vsel %vm830, %v1646, %v1647
        %v1649 = vrot.slane %v1592, 5
        %v1650 = vsel %vm830, %v1647, %v1649
        %v1651 = vrot.slane %v1593, 5
        %v1652 = vrot.slane %v1594, 5
        %v1653 = vsel %vm830, %v1651, %v1652
        %v1654 = vrot.slane %v1595, 5
        %v1655 = vsel %vm830, %v1652, %v1654
        %v1656 = vrot.slane %v1596, 5
        %v1657 = vrot.slane %v1597, 5
        %v1658 = vsel %vm830, %v1656, %v1657
        %v1659 = vrot.slane %v1598, 5
        %v1660 = vsel %vm830, %v1657, %v1659
        %v1661 = vrot.slane %v1599, 5
        %v1662 = vrot.slane %v1600, 5
        %v1663 = vsel %vm830, %v1661, %v1662
        %v1664 = vrot.slane %v1601, 5
        %v1665 = vsel %vm830, %v1662, %v1664
        %v1682 = vadd.f32 %v1560, %v1628
        %v1683 = vadd.f32 %v1561, %v1630
        %v1684 = vadd.f32 %v1562, %v1633
        %v1685 = vadd.f32 %v1563, %v1635
        %v1686 = vadd.f32 %v1564, %v1638
        %v1687 = vadd.f32 %v1565, %v1640
        %v1688 = vadd.f32 %v1566, %v1643
        %v1689 = vadd.f32 %v1567, %v1645
        %v1690 = vadd.f32 %v1568, %v1648
        %v1691 = vadd.f32 %v1569, %v1650
        %v1692 = vadd.f32 %v1570, %v1653
        %v1693 = vadd.f32 %v1571, %v1655
        %v1694 = vadd.f32 %v1572, %v1658
        %v1695 = vadd.f32 %v1573, %v1660
        %v1696 = vadd.f32 %v1574, %v1663
        %v1697 = vadd.f32 %v1575, %v1665
        %v1698 = vld [vmem:[%s1053 + $0x6] sm:$0x1]
        %v1699 = vperm.slane %v1698, 0
        %v1700 = vmul.f32 %v1029, %v1699
        %v1701 = vmul.f32 %v1030, %v1699
        %v1702 = vmul.f32 %v1031, %v1699
        %v1703 = vmul.f32 %v1032, %v1699
        %v1704 = vmul.f32 %v1033, %v1699
        %v1705 = vmul.f32 %v1034, %v1699
        %v1706 = vmul.f32 %v1035, %v1699
        %v1707 = vmul.f32 %v1036, %v1699
        %v1708 = vmul.f32 %v1037, %v1699
        %v1709 = vmul.f32 %v1038, %v1699
        %v1710 = vmul.f32 %v1039, %v1699
        %v1711 = vmul.f32 %v1040, %v1699
        %v1712 = vmul.f32 %v1041, %v1699
        %v1713 = vmul.f32 %v1042, %v1699
        %v1714 = vmul.f32 %v1043, %v1699
        %v1715 = vmul.f32 %v1044, %v1699
        %v1716 = vmul.f32 %v1045, %v1699
        %v1717 = vmul.f32 %v1046, %v1699
        %v1718 = vmul.f32 %v1047, %v1699
        %v1719 = vmul.f32 %v1048, %v1699
        %v1720 = vmul.f32 %v1049, %v1699
        %v1721 = vmul.f32 %v1050, %v1699
        %v1722 = vmul.f32 %v1051, %v1699
        %v1723 = vmul.f32 %v1052, %v1699
        %v1748 = vrot.slane %v1700, 6
        %v1749 = vrot.slane %v1701, 6
        %v1750 = vsel %vm953, %v1748, %v1749
        %v1751 = vrot.slane %v1702, 6
        %v1752 = vsel %vm953, %v1749, %v1751
        %v1753 = vrot.slane %v1703, 6
        %v1754 = vrot.slane %v1704, 6
        %v1755 = vsel %vm953, %v1753, %v1754
        %v1756 = vrot.slane %v1705, 6
        %v1757 = vsel %vm953, %v1754, %v1756
        %v1758 = vrot.slane %v1706, 6
        %v1759 = vrot.slane %v1707, 6
        %v1760 = vsel %vm953, %v1758, %v1759
        %v1761 = vrot.slane %v1708, 6
        %v1762 = vsel %vm953, %v1759, %v1761
        %v1763 = vrot.slane %v1709, 6
        %v1764 = vrot.slane %v1710, 6
        %v1765 = vsel %vm953, %v1763, %v1764
        %v1766 = vrot.slane %v1711, 6
        %v1767 = vsel %vm953, %v1764, %v1766
        %v1768 = vrot.slane %v1712, 6
        %v1769 = vrot.slane %v1713, 6
        %v1770 = vsel %vm953, %v1768, %v1769
        %v1771 = vrot.slane %v1714, 6
        %v1772 = vsel %vm953, %v1769, %v1771
        %v1773 = vrot.slane %v1715, 6
        %v1774 = vrot.slane %v1716, 6
        %v1775 = vsel %vm953, %v1773, %v1774
        %v1776 = vrot.slane %v1717, 6
        %v1777 = vsel %vm953, %v1774, %v1776
        %v1778 = vrot.slane %v1718, 6
        %v1779 = vrot.slane %v1719, 6
        %v1780 = vsel %vm953, %v1778, %v1779
        %v1781 = vrot.slane %v1720, 6
        %v1782 = vsel %vm953, %v1779, %v1781
        %v1783 = vrot.slane %v1721, 6
        %v1784 = vrot.slane %v1722, 6
        %v1785 = vsel %vm953, %v1783, %v1784
        %v1786 = vrot.slane %v1723, 6
        %v1787 = vsel %vm953, %v1784, %v1786
        %v1804 = vadd.f32 %v1682, %v1750
        %v1805 = vadd.f32 %v1683, %v1752
        %v1806 = vadd.f32 %v1684, %v1755
        %v1807 = vadd.f32 %v1685, %v1757
        %v1808 = vadd.f32 %v1686, %v1760
        %v1809 = vadd.f32 %v1687, %v1762
        %v1810 = vadd.f32 %v1688, %v1765
        %v1811 = vadd.f32 %v1689, %v1767
        %v1812 = vadd.f32 %v1690, %v1770
        %v1813 = vadd.f32 %v1691, %v1772
        %v1814 = vadd.f32 %v1692, %v1775
        %v1815 = vadd.f32 %v1693, %v1777
        %v1816 = vadd.f32 %v1694, %v1780
        %v1817 = vadd.f32 %v1695, %v1782
        %v1818 = vadd.f32 %v1696, %v1785
        %v1819 = vadd.f32 %v1697, %v1787
        %s1820 = sadd.s32 %s223, 2
        %s1821 = smul.u32 %s1820, 24
        %s1822 = scalar_lea.vmem %s193, %s1821 [#allocation2]
        %v1823 = vld [vmem:[%s1822] sm:$0xff]
        %v1824 = vld [vmem:[%s1822 + $0x8] sm:$0xff]
        %v1825 = vld [vmem:[%s1822 + $0x10] sm:$0xff]
        %v1826 = vld [vmem:[%s1822 + $0x18] sm:$0xff]
        %v1827 = vld [vmem:[%s1822 + $0x20] sm:$0xff]
        %v1828 = vld [vmem:[%s1822 + $0x28] sm:$0xff]
        %v1829 = vld [vmem:[%s1822 + $0x30] sm:$0xff]
        %v1830 = vld [vmem:[%s1822 + $0x38] sm:$0xff]
        %v1831 = vld [vmem:[%s1822 + $0x40] sm:$0xff]
        %v1832 = vld [vmem:[%s1822 + $0x48] sm:$0xff]
        %v1833 = vld [vmem:[%s1822 + $0x50] sm:$0xff]
        %v1834 = vld [vmem:[%s1822 + $0x58] sm:$0xff]
        %v1835 = vld [vmem:[%s1822 + $0x60] sm:$0xff]
        %v1836 = vld [vmem:[%s1822 + $0x68] sm:$0xff]
        %v1837 = vld [vmem:[%s1822 + $0x70] sm:$0xff]
        %v1838 = vld [vmem:[%s1822 + $0x78] sm:$0xff]
        %v1839 = vld [vmem:[%s1822 + $0x80] sm:$0xff]
        %v1840 = vld [vmem:[%s1822 + $0x88] sm:$0xff]
        %v1841 = vld [vmem:[%s1822 + $0x90] sm:$0xff]
        %v1842 = vld [vmem:[%s1822 + $0x98] sm:$0xff]
        %v1843 = vld [vmem:[%s1822 + $0xa0] sm:$0xff]
        %v1844 = vld [vmem:[%s1822 + $0xa8] sm:$0xff]
        %v1845 = vld [vmem:[%s1822 + $0xb0] sm:$0xff]
        %v1846 = vld [vmem:[%s1822 + $0xb8] sm:$0xff]
        %s1847 = scalar_lea.vmem [#allocation5], 16
        %v1848 = vld [vmem:[%s1847] sm:$0x1]
        %v1849 = vperm.slane %v1848, 0
        %v1850 = vmul.f32 %v1823, %v1849
        %v1851 = vmul.f32 %v1824, %v1849
        %v1852 = vmul.f32 %v1826, %v1849
        %v1853 = vmul.f32 %v1827, %v1849
        %v1854 = vmul.f32 %v1829, %v1849
        %v1855 = vmul.f32 %v1830, %v1849
        %v1856 = vmul.f32 %v1832, %v1849
        %v1857 = vmul.f32 %v1833, %v1849
        %v1858 = vmul.f32 %v1835, %v1849
        %v1859 = vmul.f32 %v1836, %v1849
        %v1860 = vmul.f32 %v1838, %v1849
        %v1861 = vmul.f32 %v1839, %v1849
        %v1862 = vmul.f32 %v1841, %v1849
        %v1863 = vmul.f32 %v1842, %v1849
        %v1864 = vmul.f32 %v1844, %v1849
        %v1865 = vmul.f32 %v1845, %v1849
        %v1866 = vadd.f32 %v1804, %v1850
        %v1867 = vadd.f32 %v1805, %v1851
        %v1868 = vadd.f32 %v1806, %v1852
        %v1869 = vadd.f32 %v1807, %v1853
        %v1870 = vadd.f32 %v1808, %v1854
        %v1871 = vadd.f32 %v1809, %v1855
        %v1872 = vadd.f32 %v1810, %v1856
        %v1873 = vadd.f32 %v1811, %v1857
        %v1874 = vadd.f32 %v1812, %v1858
        %v1875 = vadd.f32 %v1813, %v1859
        %v1876 = vadd.f32 %v1814, %v1860
        %v1877 = vadd.f32 %v1815, %v1861
        %v1878 = vadd.f32 %v1816, %v1862
        %v1879 = vadd.f32 %v1817, %v1863
        %v1880 = vadd.f32 %v1818, %v1864
        %v1881 = vadd.f32 %v1819, %v1865
        %v1882 = vld [vmem:[%s1847 + $0x1] sm:$0x1]
        %v1883 = vperm.slane %v1882, 0
        %v1884 = vmul.f32 %v1823, %v1883
        %v1885 = vmul.f32 %v1824, %v1883
        %v1886 = vmul.f32 %v1825, %v1883
        %v1887 = vmul.f32 %v1826, %v1883
        %v1888 = vmul.f32 %v1827, %v1883
        %v1889 = vmul.f32 %v1828, %v1883
        %v1890 = vmul.f32 %v1829, %v1883
        %v1891 = vmul.f32 %v1830, %v1883
        %v1892 = vmul.f32 %v1831, %v1883
        %v1893 = vmul.f32 %v1832, %v1883
        %v1894 = vmul.f32 %v1833, %v1883
        %v1895 = vmul.f32 %v1834, %v1883
        %v1896 = vmul.f32 %v1835, %v1883
        %v1897 = vmul.f32 %v1836, %v1883
        %v1898 = vmul.f32 %v1837, %v1883
        %v1899 = vmul.f32 %v1838, %v1883
        %v1900 = vmul.f32 %v1839, %v1883
        %v1901 = vmul.f32 %v1840, %v1883
        %v1902 = vmul.f32 %v1841, %v1883
        %v1903 = vmul.f32 %v1842, %v1883
        %v1904 = vmul.f32 %v1843, %v1883
        %v1905 = vmul.f32 %v1844, %v1883
        %v1906 = vmul.f32 %v1845, %v1883
        %v1907 = vmul.f32 %v1846, %v1883
        %v1932 = vrot.slane %v1884, 1
        %v1933 = vrot.slane %v1885, 1
        %v1934 = vsel %vm338, %v1932, %v1933
        %v1935 = vrot.slane %v1886, 1
        %v1936 = vsel %vm338, %v1933, %v1935
        %v1937 = vrot.slane %v1887, 1
        %v1938 = vrot.slane %v1888, 1
        %v1939 = vsel %vm338, %v1937, %v1938
        %v1940 = vrot.slane %v1889, 1
        %v1941 = vsel %vm338, %v1938, %v1940
        %v1942 = vrot.slane %v1890, 1
        %v1943 = vrot.slane %v1891, 1
        %v1944 = vsel %vm338, %v1942, %v1943
        %v1945 = vrot.slane %v1892, 1
        %v1946 = vsel %vm338, %v1943, %v1945
        %v1947 = vrot.slane %v1893, 1
        %v1948 = vrot.slane %v1894, 1
        %v1949 = vsel %vm338, %v1947, %v1948
        %v1950 = vrot.slane %v1895, 1
        %v1951 = vsel %vm338, %v1948, %v1950
        %v1952 = vrot.slane %v1896, 1
        %v1953 = vrot.slane %v1897, 1
        %v1954 = vsel %vm338, %v1952, %v1953
        %v1955 = vrot.slane %v1898, 1
        %v1956 = vsel %vm338, %v1953, %v1955
        %v1957 = vrot.slane %v1899, 1
        %v1958 = vrot.slane %v1900, 1
        %v1959 = vsel %vm338, %v1957, %v1958
        %v1960 = vrot.slane %v1901, 1
        %v1961 = vsel %vm338, %v1958, %v1960
        %v1962 = vrot.slane %v1902, 1
        %v1963 = vrot.slane %v1903, 1
        %v1964 = vsel %vm338, %v1962, %v1963
        %v1965 = vrot.slane %v1904, 1
        %v1966 = vsel %vm338, %v1963, %v1965
        %v1967 = vrot.slane %v1905, 1
        %v1968 = vrot.slane %v1906, 1
        %v1969 = vsel %vm338, %v1967, %v1968
        %v1970 = vrot.slane %v1907, 1
        %v1971 = vsel %vm338, %v1968, %v1970
        %v1988 = vadd.f32 %v1866, %v1934
        %v1989 = vadd.f32 %v1867, %v1936
        %v1990 = vadd.f32 %v1868, %v1939
        %v1991 = vadd.f32 %v1869, %v1941
        %v1992 = vadd.f32 %v1870, %v1944
        %v1993 = vadd.f32 %v1871, %v1946
        %v1994 = vadd.f32 %v1872, %v1949
        %v1995 = vadd.f32 %v1873, %v1951
        %v1996 = vadd.f32 %v1874, %v1954
        %v1997 = vadd.f32 %v1875, %v1956
        %v1998 = vadd.f32 %v1876, %v1959
        %v1999 = vadd.f32 %v1877, %v1961
        %v2000 = vadd.f32 %v1878, %v1964
        %v2001 = vadd.f32 %v1879, %v1966
        %v2002 = vadd.f32 %v1880, %v1969
        %v2003 = vadd.f32 %v1881, %v1971
        %v2004 = vld [vmem:[%s1847 + $0x2] sm:$0x1]
        %v2005 = vperm.slane %v2004, 0
        %v2006 = vmul.f32 %v1823, %v2005
        %v2007 = vmul.f32 %v1824, %v2005
        %v2008 = vmul.f32 %v1825, %v2005
        %v2009 = vmul.f32 %v1826, %v2005
        %v2010 = vmul.f32 %v1827, %v2005
        %v2011 = vmul.f32 %v1828, %v2005
        %v2012 = vmul.f32 %v1829, %v2005
        %v2013 = vmul.f32 %v1830, %v2005
        %v2014 = vmul.f32 %v1831, %v2005
        %v2015 = vmul.f32 %v1832, %v2005
        %v2016 = vmul.f32 %v1833, %v2005
        %v2017 = vmul.f32 %v1834, %v2005
        %v2018 = vmul.f32 %v1835, %v2005
        %v2019 = vmul.f32 %v1836, %v2005
        %v2020 = vmul.f32 %v1837, %v2005
        %v2021 = vmul.f32 %v1838, %v2005
        %v2022 = vmul.f32 %v1839, %v2005
        %v2023 = vmul.f32 %v1840, %v2005
        %v2024 = vmul.f32 %v1841, %v2005
        %v2025 = vmul.f32 %v1842, %v2005
        %v2026 = vmul.f32 %v1843, %v2005
        %v2027 = vmul.f32 %v1844, %v2005
        %v2028 = vmul.f32 %v1845, %v2005
        %v2029 = vmul.f32 %v1846, %v2005
        %v2054 = vrot.slane %v2006, 2
        %v2055 = vrot.slane %v2007, 2
        %v2056 = vsel %vm461, %v2054, %v2055
        %v2057 = vrot.slane %v2008, 2
        %v2058 = vsel %vm461, %v2055, %v2057
        %v2059 = vrot.slane %v2009, 2
        %v2060 = vrot.slane %v2010, 2
        %v2061 = vsel %vm461, %v2059, %v2060
        %v2062 = vrot.slane %v2011, 2
        %v2063 = vsel %vm461, %v2060, %v2062
        %v2064 = vrot.slane %v2012, 2
        %v2065 = vrot.slane %v2013, 2
        %v2066 = vsel %vm461, %v2064, %v2065
        %v2067 = vrot.slane %v2014, 2
        %v2068 = vsel %vm461, %v2065, %v2067
        %v2069 = vrot.slane %v2015, 2
        %v2070 = vrot.slane %v2016, 2
        %v2071 = vsel %vm461, %v2069, %v2070
        %v2072 = vrot.slane %v2017, 2
        %v2073 = vsel %vm461, %v2070, %v2072
        %v2074 = vrot.slane %v2018, 2
        %v2075 = vrot.slane %v2019, 2
        %v2076 = vsel %vm461, %v2074, %v2075
        %v2077 = vrot.slane %v2020, 2
        %v2078 = vsel %vm461, %v2075, %v2077
        %v2079 = vrot.slane %v2021, 2
        %v2080 = vrot.slane %v2022, 2
        %v2081 = vsel %vm461, %v2079, %v2080
        %v2082 = vrot.slane %v2023, 2
        %v2083 = vsel %vm461, %v2080, %v2082
        %v2084 = vrot.slane %v2024, 2
        %v2085 = vrot.slane %v2025, 2
        %v2086 = vsel %vm461, %v2084, %v2085
        %v2087 = vrot.slane %v2026, 2
        %v2088 = vsel %vm461, %v2085, %v2087
        %v2089 = vrot.slane %v2027, 2
        %v2090 = vrot.slane %v2028, 2
        %v2091 = vsel %vm461, %v2089, %v2090
        %v2092 = vrot.slane %v2029, 2
        %v2093 = vsel %vm461, %v2090, %v2092
        %v2110 = vadd.f32 %v1988, %v2056
        %v2111 = vadd.f32 %v1989, %v2058
        %v2112 = vadd.f32 %v1990, %v2061
        %v2113 = vadd.f32 %v1991, %v2063
        %v2114 = vadd.f32 %v1992, %v2066
        %v2115 = vadd.f32 %v1993, %v2068
        %v2116 = vadd.f32 %v1994, %v2071
        %v2117 = vadd.f32 %v1995, %v2073
        %v2118 = vadd.f32 %v1996, %v2076
        %v2119 = vadd.f32 %v1997, %v2078
        %v2120 = vadd.f32 %v1998, %v2081
        %v2121 = vadd.f32 %v1999, %v2083
        %v2122 = vadd.f32 %v2000, %v2086
        %v2123 = vadd.f32 %v2001, %v2088
        %v2124 = vadd.f32 %v2002, %v2091
        %v2125 = vadd.f32 %v2003, %v2093
        %v2126 = vld [vmem:[%s1847 + $0x3] sm:$0x1]
        %v2127 = vperm.slane %v2126, 0
        %v2128 = vmul.f32 %v1823, %v2127
        %v2129 = vmul.f32 %v1824, %v2127
        %v2130 = vmul.f32 %v1825, %v2127
        %v2131 = vmul.f32 %v1826, %v2127
        %v2132 = vmul.f32 %v1827, %v2127
        %v2133 = vmul.f32 %v1828, %v2127
        %v2134 = vmul.f32 %v1829, %v2127
        %v2135 = vmul.f32 %v1830, %v2127
        %v2136 = vmul.f32 %v1831, %v2127
        %v2137 = vmul.f32 %v1832, %v2127
        %v2138 = vmul.f32 %v1833, %v2127
        %v2139 = vmul.f32 %v1834, %v2127
        %v2140 = vmul.f32 %v1835, %v2127
        %v2141 = vmul.f32 %v1836, %v2127
        %v2142 = vmul.f32 %v1837, %v2127
        %v2143 = vmul.f32 %v1838, %v2127
        %v2144 = vmul.f32 %v1839, %v2127
        %v2145 = vmul.f32 %v1840, %v2127
        %v2146 = vmul.f32 %v1841, %v2127
        %v2147 = vmul.f32 %v1842, %v2127
        %v2148 = vmul.f32 %v1843, %v2127
        %v2149 = vmul.f32 %v1844, %v2127
        %v2150 = vmul.f32 %v1845, %v2127
        %v2151 = vmul.f32 %v1846, %v2127
        %v2176 = vrot.slane %v2128, 3
        %v2177 = vrot.slane %v2129, 3
        %v2178 = vsel %vm584, %v2176, %v2177
        %v2179 = vrot.slane %v2130, 3
        %v2180 = vsel %vm584, %v2177, %v2179
        %v2181 = vrot.slane %v2131, 3
        %v2182 = vrot.slane %v2132, 3
        %v2183 = vsel %vm584, %v2181, %v2182
        %v2184 = vrot.slane %v2133, 3
        %v2185 = vsel %vm584, %v2182, %v2184
        %v2186 = vrot.slane %v2134, 3
        %v2187 = vrot.slane %v2135, 3
        %v2188 = vsel %vm584, %v2186, %v2187
        %v2189 = vrot.slane %v2136, 3
        %v2190 = vsel %vm584, %v2187, %v2189
        %v2191 = vrot.slane %v2137, 3
        %v2192 = vrot.slane %v2138, 3
        %v2193 = vsel %vm584, %v2191, %v2192
        %v2194 = vrot.slane %v2139, 3
        %v2195 = vsel %vm584, %v2192, %v2194
        %v2196 = vrot.slane %v2140, 3
        %v2197 = vrot.slane %v2141, 3
        %v2198 = vsel %vm584, %v2196, %v2197
        %v2199 = vrot.slane %v2142, 3
        %v2200 = vsel %vm584, %v2197, %v2199
        %v2201 = vrot.slane %v2143, 3
        %v2202 = vrot.slane %v2144, 3
        %v2203 = vsel %vm584, %v2201, %v2202
        %v2204 = vrot.slane %v2145, 3
        %v2205 = vsel %vm584, %v2202, %v2204
        %v2206 = vrot.slane %v2146, 3
        %v2207 = vrot.slane %v2147, 3
        %v2208 = vsel %vm584, %v2206, %v2207
        %v2209 = vrot.slane %v2148, 3
        %v2210 = vsel %vm584, %v2207, %v2209
        %v2211 = vrot.slane %v2149, 3
        %v2212 = vrot.slane %v2150, 3
        %v2213 = vsel %vm584, %v2211, %v2212
        %v2214 = vrot.slane %v2151, 3
        %v2215 = vsel %vm584, %v2212, %v2214
        %v2232 = vadd.f32 %v2110, %v2178
        %v2233 = vadd.f32 %v2111, %v2180
        %v2234 = vadd.f32 %v2112, %v2183
        %v2235 = vadd.f32 %v2113, %v2185
        %v2236 = vadd.f32 %v2114, %v2188
        %v2237 = vadd.f32 %v2115, %v2190
        %v2238 = vadd.f32 %v2116, %v2193
        %v2239 = vadd.f32 %v2117, %v2195
        %v2240 = vadd.f32 %v2118, %v2198
        %v2241 = vadd.f32 %v2119, %v2200
        %v2242 = vadd.f32 %v2120, %v2203
        %v2243 = vadd.f32 %v2121, %v2205
        %v2244 = vadd.f32 %v2122, %v2208
        %v2245 = vadd.f32 %v2123, %v2210
        %v2246 = vadd.f32 %v2124, %v2213
        %v2247 = vadd.f32 %v2125, %v2215
        %v2248 = vld [vmem:[%s1847 + $0x4] sm:$0x1]
        %v2249 = vperm.slane %v2248, 0
        %v2250 = vmul.f32 %v1823, %v2249
        %v2251 = vmul.f32 %v1824, %v2249
        %v2252 = vmul.f32 %v1825, %v2249
        %v2253 = vmul.f32 %v1826, %v2249
        %v2254 = vmul.f32 %v1827, %v2249
        %v2255 = vmul.f32 %v1828, %v2249
        %v2256 = vmul.f32 %v1829, %v2249
        %v2257 = vmul.f32 %v1830, %v2249
        %v2258 = vmul.f32 %v1831, %v2249
        %v2259 = vmul.f32 %v1832, %v2249
        %v2260 = vmul.f32 %v1833, %v2249
        %v2261 = vmul.f32 %v1834, %v2249
        %v2262 = vmul.f32 %v1835, %v2249
        %v2263 = vmul.f32 %v1836, %v2249
        %v2264 = vmul.f32 %v1837, %v2249
        %v2265 = vmul.f32 %v1838, %v2249
        %v2266 = vmul.f32 %v1839, %v2249
        %v2267 = vmul.f32 %v1840, %v2249
        %v2268 = vmul.f32 %v1841, %v2249
        %v2269 = vmul.f32 %v1842, %v2249
        %v2270 = vmul.f32 %v1843, %v2249
        %v2271 = vmul.f32 %v1844, %v2249
        %v2272 = vmul.f32 %v1845, %v2249
        %v2273 = vmul.f32 %v1846, %v2249
        %v2298 = vrot.slane %v2250, 4
        %v2299 = vrot.slane %v2251, 4
        %v2300 = vsel %vm707, %v2298, %v2299
        %v2301 = vrot.slane %v2252, 4
        %v2302 = vsel %vm707, %v2299, %v2301
        %v2303 = vrot.slane %v2253, 4
        %v2304 = vrot.slane %v2254, 4
        %v2305 = vsel %vm707, %v2303, %v2304
        %v2306 = vrot.slane %v2255, 4
        %v2307 = vsel %vm707, %v2304, %v2306
        %v2308 = vrot.slane %v2256, 4
        %v2309 = vrot.slane %v2257, 4
        %v2310 = vsel %vm707, %v2308, %v2309
        %v2311 = vrot.slane %v2258, 4
        %v2312 = vsel %vm707, %v2309, %v2311
        %v2313 = vrot.slane %v2259, 4
        %v2314 = vrot.slane %v2260, 4
        %v2315 = vsel %vm707, %v2313, %v2314
        %v2316 = vrot.slane %v2261, 4
        %v2317 = vsel %vm707, %v2314, %v2316
        %v2318 = vrot.slane %v2262, 4
        %v2319 = vrot.slane %v2263, 4
        %v2320 = vsel %vm707, %v2318, %v2319
        %v2321 = vrot.slane %v2264, 4
        %v2322 = vsel %vm707, %v2319, %v2321
        %v2323 = vrot.slane %v2265, 4
        %v2324 = vrot.slane %v2266, 4
        %v2325 = vsel %vm707, %v2323, %v2324
        %v2326 = vrot.slane %v2267, 4
        %v2327 = vsel %vm707, %v2324, %v2326
        %v2328 = vrot.slane %v2268, 4
        %v2329 = vrot.slane %v2269, 4
        %v2330 = vsel %vm707, %v2328, %v2329
        %v2331 = vrot.slane %v2270, 4
        %v2332 = vsel %vm707, %v2329, %v2331
        %v2333 = vrot.slane %v2271, 4
        %v2334 = vrot.slane %v2272, 4
        %v2335 = vsel %vm707, %v2333, %v2334
        %v2336 = vrot.slane %v2273, 4
        %v2337 = vsel %vm707, %v2334, %v2336
        %v2354 = vadd.f32 %v2232, %v2300
        %v2355 = vadd.f32 %v2233, %v2302
        %v2356 = vadd.f32 %v2234, %v2305
        %v2357 = vadd.f32 %v2235, %v2307
        %v2358 = vadd.f32 %v2236, %v2310
        %v2359 = vadd.f32 %v2237, %v2312
        %v2360 = vadd.f32 %v2238, %v2315
        %v2361 = vadd.f32 %v2239, %v2317
        %v2362 = vadd.f32 %v2240, %v2320
        %v2363 = vadd.f32 %v2241, %v2322
        %v2364 = vadd.f32 %v2242, %v2325
        %v2365 = vadd.f32 %v2243, %v2327
        %v2366 = vadd.f32 %v2244, %v2330
        %v2367 = vadd.f32 %v2245, %v2332
        %v2368 = vadd.f32 %v2246, %v2335
        %v2369 = vadd.f32 %v2247, %v2337
        %v2370 = vld [vmem:[%s1847 + $0x5] sm:$0x1]
        %v2371 = vperm.slane %v2370, 0
        %v2372 = vmul.f32 %v1823, %v2371
        %v2373 = vmul.f32 %v1824, %v2371
        %v2374 = vmul.f32 %v1825, %v2371
        %v2375 = vmul.f32 %v1826, %v2371
        %v2376 = vmul.f32 %v1827, %v2371
        %v2377 = vmul.f32 %v1828, %v2371
        %v2378 = vmul.f32 %v1829, %v2371
        %v2379 = vmul.f32 %v1830, %v2371
        %v2380 = vmul.f32 %v1831, %v2371
        %v2381 = vmul.f32 %v1832, %v2371
        %v2382 = vmul.f32 %v1833, %v2371
        %v2383 = vmul.f32 %v1834, %v2371
        %v2384 = vmul.f32 %v1835, %v2371
        %v2385 = vmul.f32 %v1836, %v2371
        %v2386 = vmul.f32 %v1837, %v2371
        %v2387 = vmul.f32 %v1838, %v2371
        %v2388 = vmul.f32 %v1839, %v2371
        %v2389 = vmul.f32 %v1840, %v2371
        %v2390 = vmul.f32 %v1841, %v2371
        %v2391 = vmul.f32 %v1842, %v2371
        %v2392 = vmul.f32 %v1843, %v2371
        %v2393 = vmul.f32 %v1844, %v2371
        %v2394 = vmul.f32 %v1845, %v2371
        %v2395 = vmul.f32 %v1846, %v2371
        %v2420 = vrot.slane %v2372, 5
        %v2421 = vrot.slane %v2373, 5
        %v2422 = vsel %vm830, %v2420, %v2421
        %v2423 = vrot.slane %v2374, 5
        %v2424 = vsel %vm830, %v2421, %v2423
        %v2425 = vrot.slane %v2375, 5
        %v2426 = vrot.slane %v2376, 5
        %v2427 = vsel %vm830, %v2425, %v2426
        %v2428 = vrot.slane %v2377, 5
        %v2429 = vsel %vm830, %v2426, %v2428
        %v2430 = vrot.slane %v2378, 5
        %v2431 = vrot.slane %v2379, 5
        %v2432 = vsel %vm830, %v2430, %v2431
        %v2433 = vrot.slane %v2380, 5
        %v2434 = vsel %vm830, %v2431, %v2433
        %v2435 = vrot.slane %v2381, 5
        %v2436 = vrot.slane %v2382, 5
        %v2437 = vsel %vm830, %v2435, %v2436
        %v2438 = vrot.slane %v2383, 5
        %v2439 = vsel %vm830, %v2436, %v2438
        %v2440 = vrot.slane %v2384, 5
        %v2441 = vrot.slane %v2385, 5
        %v2442 = vsel %vm830, %v2440, %v2441
        %v2443 = vrot.slane %v2386, 5
        %v2444 = vsel %vm830, %v2441, %v2443
        %v2445 = vrot.slane %v2387, 5
        %v2446 = vrot.slane %v2388, 5
        %v2447 = vsel %vm830, %v2445, %v2446
        %v2448 = vrot.slane %v2389, 5
        %v2449 = vsel %vm830, %v2446, %v2448
        %v2450 = vrot.slane %v2390, 5
        %v2451 = vrot.slane %v2391, 5
        %v2452 = vsel %vm830, %v2450, %v2451
        %v2453 = vrot.slane %v2392, 5
        %v2454 = vsel %vm830, %v2451, %v2453
        %v2455 = vrot.slane %v2393, 5
        %v2456 = vrot.slane %v2394, 5
        %v2457 = vsel %vm830, %v2455, %v2456
        %v2458 = vrot.slane %v2395, 5
        %v2459 = vsel %vm830, %v2456, %v2458
        %v2476 = vadd.f32 %v2354, %v2422
        %v2477 = vadd.f32 %v2355, %v2424
        %v2478 = vadd.f32 %v2356, %v2427
        %v2479 = vadd.f32 %v2357, %v2429
        %v2480 = vadd.f32 %v2358, %v2432
        %v2481 = vadd.f32 %v2359, %v2434
        %v2482 = vadd.f32 %v2360, %v2437
        %v2483 = vadd.f32 %v2361, %v2439
        %v2484 = vadd.f32 %v2362, %v2442
        %v2485 = vadd.f32 %v2363, %v2444
        %v2486 = vadd.f32 %v2364, %v2447
        %v2487 = vadd.f32 %v2365, %v2449
        %v2488 = vadd.f32 %v2366, %v2452
        %v2489 = vadd.f32 %v2367, %v2454
        %v2490 = vadd.f32 %v2368, %v2457
        %v2491 = vadd.f32 %v2369, %v2459
        %v2492 = vld [vmem:[%s1847 + $0x6] sm:$0x1]
        %v2493 = vperm.slane %v2492, 0
        %v2494 = vmul.f32 %v1823, %v2493
        %v2495 = vmul.f32 %v1824, %v2493
        %v2496 = vmul.f32 %v1825, %v2493
        %v2497 = vmul.f32 %v1826, %v2493
        %v2498 = vmul.f32 %v1827, %v2493
        %v2499 = vmul.f32 %v1828, %v2493
        %v2500 = vmul.f32 %v1829, %v2493
        %v2501 = vmul.f32 %v1830, %v2493
        %v2502 = vmul.f32 %v1831, %v2493
        %v2503 = vmul.f32 %v1832, %v2493
        %v2504 = vmul.f32 %v1833, %v2493
        %v2505 = vmul.f32 %v1834, %v2493
        %v2506 = vmul.f32 %v1835, %v2493
        %v2507 = vmul.f32 %v1836, %v2493
        %v2508 = vmul.f32 %v1837, %v2493
        %v2509 = vmul.f32 %v1838, %v2493
        %v2510 = vmul.f32 %v1839, %v2493
        %v2511 = vmul.f32 %v1840, %v2493
        %v2512 = vmul.f32 %v1841, %v2493
        %v2513 = vmul.f32 %v1842, %v2493
        %v2514 = vmul.f32 %v1843, %v2493
        %v2515 = vmul.f32 %v1844, %v2493
        %v2516 = vmul.f32 %v1845, %v2493
        %v2517 = vmul.f32 %v1846, %v2493
        %v2542 = vrot.slane %v2494, 6
        %v2543 = vrot.slane %v2495, 6
        %v2544 = vsel %vm953, %v2542, %v2543
        %v2545 = vrot.slane %v2496, 6
        %v2546 = vsel %vm953, %v2543, %v2545
        %v2547 = vrot.slane %v2497, 6
        %v2548 = vrot.slane %v2498, 6
        %v2549 = vsel %vm953, %v2547, %v2548
        %v2550 = vrot.slane %v2499, 6
        %v2551 = vsel %vm953, %v2548, %v2550
        %v2552 = vrot.slane %v2500, 6
        %v2553 = vrot.slane %v2501, 6
        %v2554 = vsel %vm953, %v2552, %v2553
        %v2555 = vrot.slane %v2502, 6
        %v2556 = vsel %vm953, %v2553, %v2555
        %v2557 = vrot.slane %v2503, 6
        %v2558 = vrot.slane %v2504, 6
        %v2559 = vsel %vm953, %v2557, %v2558
        %v2560 = vrot.slane %v2505, 6
        %v2561 = vsel %vm953, %v2558, %v2560
        %v2562 = vrot.slane %v2506, 6
        %v2563 = vrot.slane %v2507, 6
        %v2564 = vsel %vm953, %v2562, %v2563
        %v2565 = vrot.slane %v2508, 6
        %v2566 = vsel %vm953, %v2563, %v2565
        %v2567 = vrot.slane %v2509, 6
        %v2568 = vrot.slane %v2510, 6
        %v2569 = vsel %vm953, %v2567, %v2568
        %v2570 = vrot.slane %v2511, 6
        %v2571 = vsel %vm953, %v2568, %v2570
        %v2572 = vrot.slane %v2512, 6
        %v2573 = vrot.slane %v2513, 6
        %v2574 = vsel %vm953, %v2572, %v2573
        %v2575 = vrot.slane %v2514, 6
        %v2576 = vsel %vm953, %v2573, %v2575
        %v2577 = vrot.slane %v2515, 6
        %v2578 = vrot.slane %v2516, 6
        %v2579 = vsel %vm953, %v2577, %v2578
        %v2580 = vrot.slane %v2517, 6
        %v2581 = vsel %vm953, %v2578, %v2580
        %v2598 = vadd.f32 %v2476, %v2544
        %v2599 = vadd.f32 %v2477, %v2546
        %v2600 = vadd.f32 %v2478, %v2549
        %v2601 = vadd.f32 %v2479, %v2551
        %v2602 = vadd.f32 %v2480, %v2554
        %v2603 = vadd.f32 %v2481, %v2556
        %v2604 = vadd.f32 %v2482, %v2559
        %v2605 = vadd.f32 %v2483, %v2561
        %v2606 = vadd.f32 %v2484, %v2564
        %v2607 = vadd.f32 %v2485, %v2566
        %v2608 = vadd.f32 %v2486, %v2569
        %v2609 = vadd.f32 %v2487, %v2571
        %v2610 = vadd.f32 %v2488, %v2574
        %v2611 = vadd.f32 %v2489, %v2576
        %v2612 = vadd.f32 %v2490, %v2579
        %v2613 = vadd.f32 %v2491, %v2581
        %s2614 = sadd.s32 %s223, 3
        %s2615 = smul.u32 %s2614, 24
        %s2616 = scalar_lea.vmem %s193, %s2615 [#allocation2]
        %v2617 = vld [vmem:[%s2616] sm:$0xff]
        %v2618 = vld [vmem:[%s2616 + $0x8] sm:$0xff]
        %v2619 = vld [vmem:[%s2616 + $0x10] sm:$0xff]
        %v2620 = vld [vmem:[%s2616 + $0x18] sm:$0xff]
        %v2621 = vld [vmem:[%s2616 + $0x20] sm:$0xff]
        %v2622 = vld [vmem:[%s2616 + $0x28] sm:$0xff]
        %v2623 = vld [vmem:[%s2616 + $0x30] sm:$0xff]
        %v2624 = vld [vmem:[%s2616 + $0x38] sm:$0xff]
        %v2625 = vld [vmem:[%s2616 + $0x40] sm:$0xff]
        %v2626 = vld [vmem:[%s2616 + $0x48] sm:$0xff]
        %v2627 = vld [vmem:[%s2616 + $0x50] sm:$0xff]
        %v2628 = vld [vmem:[%s2616 + $0x58] sm:$0xff]
        %v2629 = vld [vmem:[%s2616 + $0x60] sm:$0xff]
        %v2630 = vld [vmem:[%s2616 + $0x68] sm:$0xff]
        %v2631 = vld [vmem:[%s2616 + $0x70] sm:$0xff]
        %v2632 = vld [vmem:[%s2616 + $0x78] sm:$0xff]
        %v2633 = vld [vmem:[%s2616 + $0x80] sm:$0xff]
        %v2634 = vld [vmem:[%s2616 + $0x88] sm:$0xff]
        %v2635 = vld [vmem:[%s2616 + $0x90] sm:$0xff]
        %v2636 = vld [vmem:[%s2616 + $0x98] sm:$0xff]
        %v2637 = vld [vmem:[%s2616 + $0xa0] sm:$0xff]
        %v2638 = vld [vmem:[%s2616 + $0xa8] sm:$0xff]
        %v2639 = vld [vmem:[%s2616 + $0xb0] sm:$0xff]
        %v2640 = vld [vmem:[%s2616 + $0xb8] sm:$0xff]
        %s2641 = scalar_lea.vmem [#allocation5], 24
        %v2642 = vld [vmem:[%s2641] sm:$0x1]
        %v2643 = vperm.slane %v2642, 0
        %v2644 = vmul.f32 %v2617, %v2643
        %v2645 = vmul.f32 %v2618, %v2643
        %v2646 = vmul.f32 %v2620, %v2643
        %v2647 = vmul.f32 %v2621, %v2643
        %v2648 = vmul.f32 %v2623, %v2643
        %v2649 = vmul.f32 %v2624, %v2643
        %v2650 = vmul.f32 %v2626, %v2643
        %v2651 = vmul.f32 %v2627, %v2643
        %v2652 = vmul.f32 %v2629, %v2643
        %v2653 = vmul.f32 %v2630, %v2643
        %v2654 = vmul.f32 %v2632, %v2643
        %v2655 = vmul.f32 %v2633, %v2643
        %v2656 = vmul.f32 %v2635, %v2643
        %v2657 = vmul.f32 %v2636, %v2643
        %v2658 = vmul.f32 %v2638, %v2643
        %v2659 = vmul.f32 %v2639, %v2643
        %v2660 = vadd.f32 %v2598, %v2644
        %v2661 = vadd.f32 %v2599, %v2645
        %v2662 = vadd.f32 %v2600, %v2646
        %v2663 = vadd.f32 %v2601, %v2647
        %v2664 = vadd.f32 %v2602, %v2648
        %v2665 = vadd.f32 %v2603, %v2649
        %v2666 = vadd.f32 %v2604, %v2650
        %v2667 = vadd.f32 %v2605, %v2651
        %v2668 = vadd.f32 %v2606, %v2652
        %v2669 = vadd.f32 %v2607, %v2653
        %v2670 = vadd.f32 %v2608, %v2654
        %v2671 = vadd.f32 %v2609, %v2655
        %v2672 = vadd.f32 %v2610, %v2656
        %v2673 = vadd.f32 %v2611, %v2657
        %v2674 = vadd.f32 %v2612, %v2658
        %v2675 = vadd.f32 %v2613, %v2659
        %v2676 = vld [vmem:[%s2641 + $0x1] sm:$0x1]
        %v2677 = vperm.slane %v2676, 0
        %v2678 = vmul.f32 %v2617, %v2677
        %v2679 = vmul.f32 %v2618, %v2677
        %v2680 = vmul.f32 %v2619, %v2677
        %v2681 = vmul.f32 %v2620, %v2677
        %v2682 = vmul.f32 %v2621, %v2677
        %v2683 = vmul.f32 %v2622, %v2677
        %v2684 = vmul.f32 %v2623, %v2677
        %v2685 = vmul.f32 %v2624, %v2677
        %v2686 = vmul.f32 %v2625, %v2677
        %v2687 = vmul.f32 %v2626, %v2677
        %v2688 = vmul.f32 %v2627, %v2677
        %v2689 = vmul.f32 %v2628, %v2677
        %v2690 = vmul.f32 %v2629, %v2677
        %v2691 = vmul.f32 %v2630, %v2677
        %v2692 = vmul.f32 %v2631, %v2677
        %v2693 = vmul.f32 %v2632, %v2677
        %v2694 = vmul.f32 %v2633, %v2677
        %v2695 = vmul.f32 %v2634, %v2677
        %v2696 = vmul.f32 %v2635, %v2677
        %v2697 = vmul.f32 %v2636, %v2677
        %v2698 = vmul.f32 %v2637, %v2677
        %v2699 = vmul.f32 %v2638, %v2677
        %v2700 = vmul.f32 %v2639, %v2677
        %v2701 = vmul.f32 %v2640, %v2677
        %v2726 = vrot.slane %v2678, 1
        %v2727 = vrot.slane %v2679, 1
        %v2728 = vsel %vm338, %v2726, %v2727
        %v2729 = vrot.slane %v2680, 1
        %v2730 = vsel %vm338, %v2727, %v2729
        %v2731 = vrot.slane %v2681, 1
        %v2732 = vrot.slane %v2682, 1
        %v2733 = vsel %vm338, %v2731, %v2732
        %v2734 = vrot.slane %v2683, 1
        %v2735 = vsel %vm338, %v2732, %v2734
        %v2736 = vrot.slane %v2684, 1
        %v2737 = vrot.slane %v2685, 1
        %v2738 = vsel %vm338, %v2736, %v2737
        %v2739 = vrot.slane %v2686, 1
        %v2740 = vsel %vm338, %v2737, %v2739
        %v2741 = vrot.slane %v2687, 1
        %v2742 = vrot.slane %v2688, 1
        %v2743 = vsel %vm338, %v2741, %v2742
        %v2744 = vrot.slane %v2689, 1
        %v2745 = vsel %vm338, %v2742, %v2744
        %v2746 = vrot.slane %v2690, 1
        %v2747 = vrot.slane %v2691, 1
        %v2748 = vsel %vm338, %v2746, %v2747
        %v2749 = vrot.slane %v2692, 1
        %v2750 = vsel %vm338, %v2747, %v2749
        %v2751 = vrot.slane %v2693, 1
        %v2752 = vrot.slane %v2694, 1
        %v2753 = vsel %vm338, %v2751, %v2752
        %v2754 = vrot.slane %v2695, 1
        %v2755 = vsel %vm338, %v2752, %v2754
        %v2756 = vrot.slane %v2696, 1
        %v2757 = vrot.slane %v2697, 1
        %v2758 = vsel %vm338, %v2756, %v2757
        %v2759 = vrot.slane %v2698, 1
        %v2760 = vsel %vm338, %v2757, %v2759
        %v2761 = vrot.slane %v2699, 1
        %v2762 = vrot.slane %v2700, 1
        %v2763 = vsel %vm338, %v2761, %v2762
        %v2764 = vrot.slane %v2701, 1
        %v2765 = vsel %vm338, %v2762, %v2764
        %v2782 = vadd.f32 %v2660, %v2728
        %v2783 = vadd.f32 %v2661, %v2730
        %v2784 = vadd.f32 %v2662, %v2733
        %v2785 = vadd.f32 %v2663, %v2735
        %v2786 = vadd.f32 %v2664, %v2738
        %v2787 = vadd.f32 %v2665, %v2740
        %v2788 = vadd.f32 %v2666, %v2743
        %v2789 = vadd.f32 %v2667, %v2745
        %v2790 = vadd.f32 %v2668, %v2748
        %v2791 = vadd.f32 %v2669, %v2750
        %v2792 = vadd.f32 %v2670, %v2753
        %v2793 = vadd.f32 %v2671, %v2755
        %v2794 = vadd.f32 %v2672, %v2758
        %v2795 = vadd.f32 %v2673, %v2760
        %v2796 = vadd.f32 %v2674, %v2763
        %v2797 = vadd.f32 %v2675, %v2765
        %v2798 = vld [vmem:[%s2641 + $0x2] sm:$0x1]
        %v2799 = vperm.slane %v2798, 0
        %v2800 = vmul.f32 %v2617, %v2799
        %v2801 = vmul.f32 %v2618, %v2799
        %v2802 = vmul.f32 %v2619, %v2799
        %v2803 = vmul.f32 %v2620, %v2799
        %v2804 = vmul.f32 %v2621, %v2799
        %v2805 = vmul.f32 %v2622, %v2799
        %v2806 = vmul.f32 %v2623, %v2799
        %v2807 = vmul.f32 %v2624, %v2799
        %v2808 = vmul.f32 %v2625, %v2799
        %v2809 = vmul.f32 %v2626, %v2799
        %v2810 = vmul.f32 %v2627, %v2799
        %v2811 = vmul.f32 %v2628, %v2799
        %v2812 = vmul.f32 %v2629, %v2799
        %v2813 = vmul.f32 %v2630, %v2799
        %v2814 = vmul.f32 %v2631, %v2799
        %v2815 = vmul.f32 %v2632, %v2799
        %v2816 = vmul.f32 %v2633, %v2799
        %v2817 = vmul.f32 %v2634, %v2799
        %v2818 = vmul.f32 %v2635, %v2799
        %v2819 = vmul.f32 %v2636, %v2799
        %v2820 = vmul.f32 %v2637, %v2799
        %v2821 = vmul.f32 %v2638, %v2799
        %v2822 = vmul.f32 %v2639, %v2799
        %v2823 = vmul.f32 %v2640, %v2799
        %v2848 = vrot.slane %v2800, 2
        %v2849 = vrot.slane %v2801, 2
        %v2850 = vsel %vm461, %v2848, %v2849
        %v2851 = vrot.slane %v2802, 2
        %v2852 = vsel %vm461, %v2849, %v2851
        %v2853 = vrot.slane %v2803, 2
        %v2854 = vrot.slane %v2804, 2
        %v2855 = vsel %vm461, %v2853, %v2854
        %v2856 = vrot.slane %v2805, 2
        %v2857 = vsel %vm461, %v2854, %v2856
        %v2858 = vrot.slane %v2806, 2
        %v2859 = vrot.slane %v2807, 2
        %v2860 = vsel %vm461, %v2858, %v2859
        %v2861 = vrot.slane %v2808, 2
        %v2862 = vsel %vm461, %v2859, %v2861
        %v2863 = vrot.slane %v2809, 2
        %v2864 = vrot.slane %v2810, 2
        %v2865 = vsel %vm461, %v2863, %v2864
        %v2866 = vrot.slane %v2811, 2
        %v2867 = vsel %vm461, %v2864, %v2866
        %v2868 = vrot.slane %v2812, 2
        %v2869 = vrot.slane %v2813, 2
        %v2870 = vsel %vm461, %v2868, %v2869
        %v2871 = vrot.slane %v2814, 2
        %v2872 = vsel %vm461, %v2869, %v2871
        %v2873 = vrot.slane %v2815, 2
        %v2874 = vrot.slane %v2816, 2
        %v2875 = vsel %vm461, %v2873, %v2874
        %v2876 = vrot.slane %v2817, 2
        %v2877 = vsel %vm461, %v2874, %v2876
        %v2878 = vrot.slane %v2818, 2
        %v2879 = vrot.slane %v2819, 2
        %v2880 = vsel %vm461, %v2878, %v2879
        %v2881 = vrot.slane %v2820, 2
        %v2882 = vsel %vm461, %v2879, %v2881
        %v2883 = vrot.slane %v2821, 2
        %v2884 = vrot.slane %v2822, 2
        %v2885 = vsel %vm461, %v2883, %v2884
        %v2886 = vrot.slane %v2823, 2
        %v2887 = vsel %vm461, %v2884, %v2886
        %v2904 = vadd.f32 %v2782, %v2850
        %v2905 = vadd.f32 %v2783, %v2852
        %v2906 = vadd.f32 %v2784, %v2855
        %v2907 = vadd.f32 %v2785, %v2857
        %v2908 = vadd.f32 %v2786, %v2860
        %v2909 = vadd.f32 %v2787, %v2862
        %v2910 = vadd.f32 %v2788, %v2865
        %v2911 = vadd.f32 %v2789, %v2867
        %v2912 = vadd.f32 %v2790, %v2870
        %v2913 = vadd.f32 %v2791, %v2872
        %v2914 = vadd.f32 %v2792, %v2875
        %v2915 = vadd.f32 %v2793, %v2877
        %v2916 = vadd.f32 %v2794, %v2880
        %v2917 = vadd.f32 %v2795, %v2882
        %v2918 = vadd.f32 %v2796, %v2885
        %v2919 = vadd.f32 %v2797, %v2887
        %v2920 = vld [vmem:[%s2641 + $0x3] sm:$0x1]
        %v2921 = vperm.slane %v2920, 0
        %v2922 = vmul.f32 %v2617, %v2921
        %v2923 = vmul.f32 %v2618, %v2921
        %v2924 = vmul.f32 %v2619, %v2921
        %v2925 = vmul.f32 %v2620, %v2921
        %v2926 = vmul.f32 %v2621, %v2921
        %v2927 = vmul.f32 %v2622, %v2921
        %v2928 = vmul.f32 %v2623, %v2921
        %v2929 = vmul.f32 %v2624, %v2921
        %v2930 = vmul.f32 %v2625, %v2921
        %v2931 = vmul.f32 %v2626, %v2921
        %v2932 = vmul.f32 %v2627, %v2921
        %v2933 = vmul.f32 %v2628, %v2921
        %v2934 = vmul.f32 %v2629, %v2921
        %v2935 = vmul.f32 %v2630, %v2921
        %v2936 = vmul.f32 %v2631, %v2921
        %v2937 = vmul.f32 %v2632, %v2921
        %v2938 = vmul.f32 %v2633, %v2921
        %v2939 = vmul.f32 %v2634, %v2921
        %v2940 = vmul.f32 %v2635, %v2921
        %v2941 = vmul.f32 %v2636, %v2921
        %v2942 = vmul.f32 %v2637, %v2921
        %v2943 = vmul.f32 %v2638, %v2921
        %v2944 = vmul.f32 %v2639, %v2921
        %v2945 = vmul.f32 %v2640, %v2921
        %v2970 = vrot.slane %v2922, 3
        %v2971 = vrot.slane %v2923, 3
        %v2972 = vsel %vm584, %v2970, %v2971
        %v2973 = vrot.slane %v2924, 3
        %v2974 = vsel %vm584, %v2971, %v2973
        %v2975 = vrot.slane %v2925, 3
        %v2976 = vrot.slane %v2926, 3
        %v2977 = vsel %vm584, %v2975, %v2976
        %v2978 = vrot.slane %v2927, 3
        %v2979 = vsel %vm584, %v2976, %v2978
        %v2980 = vrot.slane %v2928, 3
        %v2981 = vrot.slane %v2929, 3
        %v2982 = vsel %vm584, %v2980, %v2981
        %v2983 = vrot.slane %v2930, 3
        %v2984 = vsel %vm584, %v2981, %v2983
        %v2985 = vrot.slane %v2931, 3
        %v2986 = vrot.slane %v2932, 3
        %v2987 = vsel %vm584, %v2985, %v2986
        %v2988 = vrot.slane %v2933, 3
        %v2989 = vsel %vm584, %v2986, %v2988
        %v2990 = vrot.slane %v2934, 3
        %v2991 = vrot.slane %v2935, 3
        %v2992 = vsel %vm584, %v2990, %v2991
        %v2993 = vrot.slane %v2936, 3
        %v2994 = vsel %vm584, %v2991, %v2993
        %v2995 = vrot.slane %v2937, 3
        %v2996 = vrot.slane %v2938, 3
        %v2997 = vsel %vm584, %v2995, %v2996
        %v2998 = vrot.slane %v2939, 3
        %v2999 = vsel %vm584, %v2996, %v2998
        %v3000 = vrot.slane %v2940, 3
        %v3001 = vrot.slane %v2941, 3
        %v3002 = vsel %vm584, %v3000, %v3001
        %v3003 = vrot.slane %v2942, 3
        %v3004 = vsel %vm584, %v3001, %v3003
        %v3005 = vrot.slane %v2943, 3
        %v3006 = vrot.slane %v2944, 3
        %v3007 = vsel %vm584, %v3005, %v3006
        %v3008 = vrot.slane %v2945, 3
        %v3009 = vsel %vm584, %v3006, %v3008
        %v3026 = vadd.f32 %v2904, %v2972
        %v3027 = vadd.f32 %v2905, %v2974
        %v3028 = vadd.f32 %v2906, %v2977
        %v3029 = vadd.f32 %v2907, %v2979
        %v3030 = vadd.f32 %v2908, %v2982
        %v3031 = vadd.f32 %v2909, %v2984
        %v3032 = vadd.f32 %v2910, %v2987
        %v3033 = vadd.f32 %v2911, %v2989
        %v3034 = vadd.f32 %v2912, %v2992
        %v3035 = vadd.f32 %v2913, %v2994
        %v3036 = vadd.f32 %v2914, %v2997
        %v3037 = vadd.f32 %v2915, %v2999
        %v3038 = vadd.f32 %v2916, %v3002
        %v3039 = vadd.f32 %v2917, %v3004
        %v3040 = vadd.f32 %v2918, %v3007
        %v3041 = vadd.f32 %v2919, %v3009
        %v3042 = vld [vmem:[%s2641 + $0x4] sm:$0x1]
        %v3043 = vperm.slane %v3042, 0
        %v3044 = vmul.f32 %v2617, %v3043
        %v3045 = vmul.f32 %v2618, %v3043
        %v3046 = vmul.f32 %v2619, %v3043
        %v3047 = vmul.f32 %v2620, %v3043
        %v3048 = vmul.f32 %v2621, %v3043
        %v3049 = vmul.f32 %v2622, %v3043
        %v3050 = vmul.f32 %v2623, %v3043
        %v3051 = vmul.f32 %v2624, %v3043
        %v3052 = vmul.f32 %v2625, %v3043
        %v3053 = vmul.f32 %v2626, %v3043
        %v3054 = vmul.f32 %v2627, %v3043
        %v3055 = vmul.f32 %v2628, %v3043
        %v3056 = vmul.f32 %v2629, %v3043
        %v3057 = vmul.f32 %v2630, %v3043
        %v3058 = vmul.f32 %v2631, %v3043
        %v3059 = vmul.f32 %v2632, %v3043
        %v3060 = vmul.f32 %v2633, %v3043
        %v3061 = vmul.f32 %v2634, %v3043
        %v3062 = vmul.f32 %v2635, %v3043
        %v3063 = vmul.f32 %v2636, %v3043
        %v3064 = vmul.f32 %v2637, %v3043
        %v3065 = vmul.f32 %v2638, %v3043
        %v3066 = vmul.f32 %v2639, %v3043
        %v3067 = vmul.f32 %v2640, %v3043
        %v3092 = vrot.slane %v3044, 4
        %v3093 = vrot.slane %v3045, 4
        %v3094 = vsel %vm707, %v3092, %v3093
        %v3095 = vrot.slane %v3046, 4
        %v3096 = vsel %vm707, %v3093, %v3095
        %v3097 = vrot.slane %v3047, 4
        %v3098 = vrot.slane %v3048, 4
        %v3099 = vsel %vm707, %v3097, %v3098
        %v3100 = vrot.slane %v3049, 4
        %v3101 = vsel %vm707, %v3098, %v3100
        %v3102 = vrot.slane %v3050, 4
        %v3103 = vrot.slane %v3051, 4
        %v3104 = vsel %vm707, %v3102, %v3103
        %v3105 = vrot.slane %v3052, 4
        %v3106 = vsel %vm707, %v3103, %v3105
        %v3107 = vrot.slane %v3053, 4
        %v3108 = vrot.slane %v3054, 4
        %v3109 = vsel %vm707, %v3107, %v3108
        %v3110 = vrot.slane %v3055, 4
        %v3111 = vsel %vm707, %v3108, %v3110
        %v3112 = vrot.slane %v3056, 4
        %v3113 = vrot.slane %v3057, 4
        %v3114 = vsel %vm707, %v3112, %v3113
        %v3115 = vrot.slane %v3058, 4
        %v3116 = vsel %vm707, %v3113, %v3115
        %v3117 = vrot.slane %v3059, 4
        %v3118 = vrot.slane %v3060, 4
        %v3119 = vsel %vm707, %v3117, %v3118
        %v3120 = vrot.slane %v3061, 4
        %v3121 = vsel %vm707, %v3118, %v3120
        %v3122 = vrot.slane %v3062, 4
        %v3123 = vrot.slane %v3063, 4
        %v3124 = vsel %vm707, %v3122, %v3123
        %v3125 = vrot.slane %v3064, 4
        %v3126 = vsel %vm707, %v3123, %v3125
        %v3127 = vrot.slane %v3065, 4
        %v3128 = vrot.slane %v3066, 4
        %v3129 = vsel %vm707, %v3127, %v3128
        %v3130 = vrot.slane %v3067, 4
        %v3131 = vsel %vm707, %v3128, %v3130
        %v3148 = vadd.f32 %v3026, %v3094
        %v3149 = vadd.f32 %v3027, %v3096
        %v3150 = vadd.f32 %v3028, %v3099
        %v3151 = vadd.f32 %v3029, %v3101
        %v3152 = vadd.f32 %v3030, %v3104
        %v3153 = vadd.f32 %v3031, %v3106
        %v3154 = vadd.f32 %v3032, %v3109
        %v3155 = vadd.f32 %v3033, %v3111
        %v3156 = vadd.f32 %v3034, %v3114
        %v3157 = vadd.f32 %v3035, %v3116
        %v3158 = vadd.f32 %v3036, %v3119
        %v3159 = vadd.f32 %v3037, %v3121
        %v3160 = vadd.f32 %v3038, %v3124
        %v3161 = vadd.f32 %v3039, %v3126
        %v3162 = vadd.f32 %v3040, %v3129
        %v3163 = vadd.f32 %v3041, %v3131
        %v3164 = vld [vmem:[%s2641 + $0x5] sm:$0x1]
        %v3165 = vperm.slane %v3164, 0
        %v3166 = vmul.f32 %v2617, %v3165
        %v3167 = vmul.f32 %v2618, %v3165
        %v3168 = vmul.f32 %v2619, %v3165
        %v3169 = vmul.f32 %v2620, %v3165
        %v3170 = vmul.f32 %v2621, %v3165
        %v3171 = vmul.f32 %v2622, %v3165
        %v3172 = vmul.f32 %v2623, %v3165
        %v3173 = vmul.f32 %v2624, %v3165
        %v3174 = vmul.f32 %v2625, %v3165
        %v3175 = vmul.f32 %v2626, %v3165
        %v3176 = vmul.f32 %v2627, %v3165
        %v3177 = vmul.f32 %v2628, %v3165
        %v3178 = vmul.f32 %v2629, %v3165
        %v3179 = vmul.f32 %v2630, %v3165
        %v3180 = vmul.f32 %v2631, %v3165
        %v3181 = vmul.f32 %v2632, %v3165
        %v3182 = vmul.f32 %v2633, %v3165
        %v3183 = vmul.f32 %v2634, %v3165
        %v3184 = vmul.f32 %v2635, %v3165
        %v3185 = vmul.f32 %v2636, %v3165
        %v3186 = vmul.f32 %v2637, %v3165
        %v3187 = vmul.f32 %v2638, %v3165
        %v3188 = vmul.f32 %v2639, %v3165
        %v3189 = vmul.f32 %v2640, %v3165
        %v3214 = vrot.slane %v3166, 5
        %v3215 = vrot.slane %v3167, 5
        %v3216 = vsel %vm830, %v3214, %v3215
        %v3217 = vrot.slane %v3168, 5
        %v3218 = vsel %vm830, %v3215, %v3217
        %v3219 = vrot.slane %v3169, 5
        %v3220 = vrot.slane %v3170, 5
        %v3221 = vsel %vm830, %v3219, %v3220
        %v3222 = vrot.slane %v3171, 5
        %v3223 = vsel %vm830, %v3220, %v3222
        %v3224 = vrot.slane %v3172, 5
        %v3225 = vrot.slane %v3173, 5
        %v3226 = vsel %vm830, %v3224, %v3225
        %v3227 = vrot.slane %v3174, 5
        %v3228 = vsel %vm830, %v3225, %v3227
        %v3229 = vrot.slane %v3175, 5
        %v3230 = vrot.slane %v3176, 5
        %v3231 = vsel %vm830, %v3229, %v3230
        %v3232 = vrot.slane %v3177, 5
        %v3233 = vsel %vm830, %v3230, %v3232
        %v3234 = vrot.slane %v3178, 5
        %v3235 = vrot.slane %v3179, 5
        %v3236 = vsel %vm830, %v3234, %v3235
        %v3237 = vrot.slane %v3180, 5
        %v3238 = vsel %vm830, %v3235, %v3237
        %v3239 = vrot.slane %v3181, 5
        %v3240 = vrot.slane %v3182, 5
        %v3241 = vsel %vm830, %v3239, %v3240
        %v3242 = vrot.slane %v3183, 5
        %v3243 = vsel %vm830, %v3240, %v3242
        %v3244 = vrot.slane %v3184, 5
        %v3245 = vrot.slane %v3185, 5
        %v3246 = vsel %vm830, %v3244, %v3245
        %v3247 = vrot.slane %v3186, 5
        %v3248 = vsel %vm830, %v3245, %v3247
        %v3249 = vrot.slane %v3187, 5
        %v3250 = vrot.slane %v3188, 5
        %v3251 = vsel %vm830, %v3249, %v3250
        %v3252 = vrot.slane %v3189, 5
        %v3253 = vsel %vm830, %v3250, %v3252
        %v3270 = vadd.f32 %v3148, %v3216
        %v3271 = vadd.f32 %v3149, %v3218
        %v3272 = vadd.f32 %v3150, %v3221
        %v3273 = vadd.f32 %v3151, %v3223
        %v3274 = vadd.f32 %v3152, %v3226
        %v3275 = vadd.f32 %v3153, %v3228
        %v3276 = vadd.f32 %v3154, %v3231
        %v3277 = vadd.f32 %v3155, %v3233
        %v3278 = vadd.f32 %v3156, %v3236
        %v3279 = vadd.f32 %v3157, %v3238
        %v3280 = vadd.f32 %v3158, %v3241
        %v3281 = vadd.f32 %v3159, %v3243
        %v3282 = vadd.f32 %v3160, %v3246
        %v3283 = vadd.f32 %v3161, %v3248
        %v3284 = vadd.f32 %v3162, %v3251
        %v3285 = vadd.f32 %v3163, %v3253
        %v3286 = vld [vmem:[%s2641 + $0x6] sm:$0x1]
        %v3287 = vperm.slane %v3286, 0
        %v3288 = vmul.f32 %v2617, %v3287
        %v3289 = vmul.f32 %v2618, %v3287
        %v3290 = vmul.f32 %v2619, %v3287
        %v3291 = vmul.f32 %v2620, %v3287
        %v3292 = vmul.f32 %v2621, %v3287
        %v3293 = vmul.f32 %v2622, %v3287
        %v3294 = vmul.f32 %v2623, %v3287
        %v3295 = vmul.f32 %v2624, %v3287
        %v3296 = vmul.f32 %v2625, %v3287
        %v3297 = vmul.f32 %v2626, %v3287
        %v3298 = vmul.f32 %v2627, %v3287
        %v3299 = vmul.f32 %v2628, %v3287
        %v3300 = vmul.f32 %v2629, %v3287
        %v3301 = vmul.f32 %v2630, %v3287
        %v3302 = vmul.f32 %v2631, %v3287
        %v3303 = vmul.f32 %v2632, %v3287
        %v3304 = vmul.f32 %v2633, %v3287
        %v3305 = vmul.f32 %v2634, %v3287
        %v3306 = vmul.f32 %v2635, %v3287
        %v3307 = vmul.f32 %v2636, %v3287
        %v3308 = vmul.f32 %v2637, %v3287
        %v3309 = vmul.f32 %v2638, %v3287
        %v3310 = vmul.f32 %v2639, %v3287
        %v3311 = vmul.f32 %v2640, %v3287
        %v3336 = vrot.slane %v3288, 6
        %v3337 = vrot.slane %v3289, 6
        %v3338 = vsel %vm953, %v3336, %v3337
        %v3339 = vrot.slane %v3290, 6
        %v3340 = vsel %vm953, %v3337, %v3339
        %v3341 = vrot.slane %v3291, 6
        %v3342 = vrot.slane %v3292, 6
        %v3343 = vsel %vm953, %v3341, %v3342
        %v3344 = vrot.slane %v3293, 6
        %v3345 = vsel %vm953, %v3342, %v3344
        %v3346 = vrot.slane %v3294, 6
        %v3347 = vrot.slane %v3295, 6
        %v3348 = vsel %vm953, %v3346, %v3347
        %v3349 = vrot.slane %v3296, 6
        %v3350 = vsel %vm953, %v3347, %v3349
        %v3351 = vrot.slane %v3297, 6
        %v3352 = vrot.slane %v3298, 6
        %v3353 = vsel %vm953, %v3351, %v3352
        %v3354 = vrot.slane %v3299, 6
        %v3355 = vsel %vm953, %v3352, %v3354
        %v3356 = vrot.slane %v3300, 6
        %v3357 = vrot.slane %v3301, 6
        %v3358 = vsel %vm953, %v3356, %v3357
        %v3359 = vrot.slane %v3302, 6
        %v3360 = vsel %vm953, %v3357, %v3359
        %v3361 = vrot.slane %v3303, 6
        %v3362 = vrot.slane %v3304, 6
        %v3363 = vsel %vm953, %v3361, %v3362
        %v3364 = vrot.slane %v3305, 6
        %v3365 = vsel %vm953, %v3362, %v3364
        %v3366 = vrot.slane %v3306, 6
        %v3367 = vrot.slane %v3307, 6
        %v3368 = vsel %vm953, %v3366, %v3367
        %v3369 = vrot.slane %v3308, 6
        %v3370 = vsel %vm953, %v3367, %v3369
        %v3371 = vrot.slane %v3309, 6
        %v3372 = vrot.slane %v3310, 6
        %v3373 = vsel %vm953, %v3371, %v3372
        %v3374 = vrot.slane %v3311, 6
        %v3375 = vsel %vm953, %v3372, %v3374
        %v3392 = vadd.f32 %v3270, %v3338
        %v3393 = vadd.f32 %v3271, %v3340
        %v3394 = vadd.f32 %v3272, %v3343
        %v3395 = vadd.f32 %v3273, %v3345
        %v3396 = vadd.f32 %v3274, %v3348
        %v3397 = vadd.f32 %v3275, %v3350
        %v3398 = vadd.f32 %v3276, %v3353
        %v3399 = vadd.f32 %v3277, %v3355
        %v3400 = vadd.f32 %v3278, %v3358
        %v3401 = vadd.f32 %v3279, %v3360
        %v3402 = vadd.f32 %v3280, %v3363
        %v3403 = vadd.f32 %v3281, %v3365
        %v3404 = vadd.f32 %v3282, %v3368
        %v3405 = vadd.f32 %v3283, %v3370
        %v3406 = vadd.f32 %v3284, %v3373
        %v3407 = vadd.f32 %v3285, %v3375
        %s3408 = sadd.s32 %s223, 4
        %s3409 = smul.u32 %s3408, 24
        %s3410 = scalar_lea.vmem %s193, %s3409 [#allocation2]
        %v3411 = vld [vmem:[%s3410] sm:$0xff]
        %v3412 = vld [vmem:[%s3410 + $0x8] sm:$0xff]
        %v3413 = vld [vmem:[%s3410 + $0x10] sm:$0xff]
        %v3414 = vld [vmem:[%s3410 + $0x18] sm:$0xff]
        %v3415 = vld [vmem:[%s3410 + $0x20] sm:$0xff]
        %v3416 = vld [vmem:[%s3410 + $0x28] sm:$0xff]
        %v3417 = vld [vmem:[%s3410 + $0x30] sm:$0xff]
        %v3418 = vld [vmem:[%s3410 + $0x38] sm:$0xff]
        %v3419 = vld [vmem:[%s3410 + $0x40] sm:$0xff]
        %v3420 = vld [vmem:[%s3410 + $0x48] sm:$0xff]
        %v3421 = vld [vmem:[%s3410 + $0x50] sm:$0xff]
        %v3422 = vld [vmem:[%s3410 + $0x58] sm:$0xff]
        %v3423 = vld [vmem:[%s3410 + $0x60] sm:$0xff]
        %v3424 = vld [vmem:[%s3410 + $0x68] sm:$0xff]
        %v3425 = vld [vmem:[%s3410 + $0x70] sm:$0xff]
        %v3426 = vld [vmem:[%s3410 + $0x78] sm:$0xff]
        %v3427 = vld [vmem:[%s3410 + $0x80] sm:$0xff]
        %v3428 = vld [vmem:[%s3410 + $0x88] sm:$0xff]
        %v3429 = vld [vmem:[%s3410 + $0x90] sm:$0xff]
        %v3430 = vld [vmem:[%s3410 + $0x98] sm:$0xff]
        %v3431 = vld [vmem:[%s3410 + $0xa0] sm:$0xff]
        %v3432 = vld [vmem:[%s3410 + $0xa8] sm:$0xff]
        %v3433 = vld [vmem:[%s3410 + $0xb0] sm:$0xff]
        %v3434 = vld [vmem:[%s3410 + $0xb8] sm:$0xff]
        %s3435 = scalar_lea.vmem [#allocation5], 32
        %v3436 = vld [vmem:[%s3435] sm:$0x1]
        %v3437 = vperm.slane %v3436, 0
        %v3438 = vmul.f32 %v3411, %v3437
        %v3439 = vmul.f32 %v3412, %v3437
        %v3440 = vmul.f32 %v3414, %v3437
        %v3441 = vmul.f32 %v3415, %v3437
        %v3442 = vmul.f32 %v3417, %v3437
        %v3443 = vmul.f32 %v3418, %v3437
        %v3444 = vmul.f32 %v3420, %v3437
        %v3445 = vmul.f32 %v3421, %v3437
        %v3446 = vmul.f32 %v3423, %v3437
        %v3447 = vmul.f32 %v3424, %v3437
        %v3448 = vmul.f32 %v3426, %v3437
        %v3449 = vmul.f32 %v3427, %v3437
        %v3450 = vmul.f32 %v3429, %v3437
        %v3451 = vmul.f32 %v3430, %v3437
        %v3452 = vmul.f32 %v3432, %v3437
        %v3453 = vmul.f32 %v3433, %v3437
        %v3454 = vadd.f32 %v3392, %v3438
        %v3455 = vadd.f32 %v3393, %v3439
        %v3456 = vadd.f32 %v3394, %v3440
        %v3457 = vadd.f32 %v3395, %v3441
        %v3458 = vadd.f32 %v3396, %v3442
        %v3459 = vadd.f32 %v3397, %v3443
        %v3460 = vadd.f32 %v3398, %v3444
        %v3461 = vadd.f32 %v3399, %v3445
        %v3462 = vadd.f32 %v3400, %v3446
        %v3463 = vadd.f32 %v3401, %v3447
        %v3464 = vadd.f32 %v3402, %v3448
        %v3465 = vadd.f32 %v3403, %v3449
        %v3466 = vadd.f32 %v3404, %v3450
        %v3467 = vadd.f32 %v3405, %v3451
        %v3468 = vadd.f32 %v3406, %v3452
        %v3469 = vadd.f32 %v3407, %v3453
        %v3470 = vld [vmem:[%s3435 + $0x1] sm:$0x1]
        %v3471 = vperm.slane %v3470, 0
        %v3472 = vmul.f32 %v3411, %v3471
        %v3473 = vmul.f32 %v3412, %v3471
        %v3474 = vmul.f32 %v3413, %v3471
        %v3475 = vmul.f32 %v3414, %v3471
        %v3476 = vmul.f32 %v3415, %v3471
        %v3477 = vmul.f32 %v3416, %v3471
        %v3478 = vmul.f32 %v3417, %v3471
        %v3479 = vmul.f32 %v3418, %v3471
        %v3480 = vmul.f32 %v3419, %v3471
        %v3481 = vmul.f32 %v3420, %v3471
        %v3482 = vmul.f32 %v3421, %v3471
        %v3483 = vmul.f32 %v3422, %v3471
        %v3484 = vmul.f32 %v3423, %v3471
        %v3485 = vmul.f32 %v3424, %v3471
        %v3486 = vmul.f32 %v3425, %v3471
        %v3487 = vmul.f32 %v3426, %v3471
        %v3488 = vmul.f32 %v3427, %v3471
        %v3489 = vmul.f32 %v3428, %v3471
        %v3490 = vmul.f32 %v3429, %v3471
        %v3491 = vmul.f32 %v3430, %v3471
        %v3492 = vmul.f32 %v3431, %v3471
        %v3493 = vmul.f32 %v3432, %v3471
        %v3494 = vmul.f32 %v3433, %v3471
        %v3495 = vmul.f32 %v3434, %v3471
        %v3520 = vrot.slane %v3472, 1
        %v3521 = vrot.slane %v3473, 1
        %v3522 = vsel %vm338, %v3520, %v3521
        %v3523 = vrot.slane %v3474, 1
        %v3524 = vsel %vm338, %v3521, %v3523
        %v3525 = vrot.slane %v3475, 1
        %v3526 = vrot.slane %v3476, 1
        %v3527 = vsel %vm338, %v3525, %v3526
        %v3528 = vrot.slane %v3477, 1
        %v3529 = vsel %vm338, %v3526, %v3528
        %v3530 = vrot.slane %v3478, 1
        %v3531 = vrot.slane %v3479, 1
        %v3532 = vsel %vm338, %v3530, %v3531
        %v3533 = vrot.slane %v3480, 1
        %v3534 = vsel %vm338, %v3531, %v3533
        %v3535 = vrot.slane %v3481, 1
        %v3536 = vrot.slane %v3482, 1
        %v3537 = vsel %vm338, %v3535, %v3536
        %v3538 = vrot.slane %v3483, 1
        %v3539 = vsel %vm338, %v3536, %v3538
        %v3540 = vrot.slane %v3484, 1
        %v3541 = vrot.slane %v3485, 1
        %v3542 = vsel %vm338, %v3540, %v3541
        %v3543 = vrot.slane %v3486, 1
        %v3544 = vsel %vm338, %v3541, %v3543
        %v3545 = vrot.slane %v3487, 1
        %v3546 = vrot.slane %v3488, 1
        %v3547 = vsel %vm338, %v3545, %v3546
        %v3548 = vrot.slane %v3489, 1
        %v3549 = vsel %vm338, %v3546, %v3548
        %v3550 = vrot.slane %v3490, 1
        %v3551 = vrot.slane %v3491, 1
        %v3552 = vsel %vm338, %v3550, %v3551
        %v3553 = vrot.slane %v3492, 1
        %v3554 = vsel %vm338, %v3551, %v3553
        %v3555 = vrot.slane %v3493, 1
        %v3556 = vrot.slane %v3494, 1
        %v3557 = vsel %vm338, %v3555, %v3556
        %v3558 = vrot.slane %v3495, 1
        %v3559 = vsel %vm338, %v3556, %v3558
        %v3576 = vadd.f32 %v3454, %v3522
        %v3577 = vadd.f32 %v3455, %v3524
        %v3578 = vadd.f32 %v3456, %v3527
        %v3579 = vadd.f32 %v3457, %v3529
        %v3580 = vadd.f32 %v3458, %v3532
        %v3581 = vadd.f32 %v3459, %v3534
        %v3582 = vadd.f32 %v3460, %v3537
        %v3583 = vadd.f32 %v3461, %v3539
        %v3584 = vadd.f32 %v3462, %v3542
        %v3585 = vadd.f32 %v3463, %v3544
        %v3586 = vadd.f32 %v3464, %v3547
        %v3587 = vadd.f32 %v3465, %v3549
        %v3588 = vadd.f32 %v3466, %v3552
        %v3589 = vadd.f32 %v3467, %v3554
        %v3590 = vadd.f32 %v3468, %v3557
        %v3591 = vadd.f32 %v3469, %v3559
        %v3592 = vld [vmem:[%s3435 + $0x2] sm:$0x1]
        %v3593 = vperm.slane %v3592, 0
        %v3594 = vmul.f32 %v3411, %v3593
        %v3595 = vmul.f32 %v3412, %v3593
        %v3596 = vmul.f32 %v3413, %v3593
        %v3597 = vmul.f32 %v3414, %v3593
        %v3598 = vmul.f32 %v3415, %v3593
        %v3599 = vmul.f32 %v3416, %v3593
        %v3600 = vmul.f32 %v3417, %v3593
        %v3601 = vmul.f32 %v3418, %v3593
        %v3602 = vmul.f32 %v3419, %v3593
        %v3603 = vmul.f32 %v3420, %v3593
        %v3604 = vmul.f32 %v3421, %v3593
        %v3605 = vmul.f32 %v3422, %v3593
        %v3606 = vmul.f32 %v3423, %v3593
        %v3607 = vmul.f32 %v3424, %v3593
        %v3608 = vmul.f32 %v3425, %v3593
        %v3609 = vmul.f32 %v3426, %v3593
        %v3610 = vmul.f32 %v3427, %v3593
        %v3611 = vmul.f32 %v3428, %v3593
        %v3612 = vmul.f32 %v3429, %v3593
        %v3613 = vmul.f32 %v3430, %v3593
        %v3614 = vmul.f32 %v3431, %v3593
        %v3615 = vmul.f32 %v3432, %v3593
        %v3616 = vmul.f32 %v3433, %v3593
        %v3617 = vmul.f32 %v3434, %v3593
        %v3642 = vrot.slane %v3594, 2
        %v3643 = vrot.slane %v3595, 2
        %v3644 = vsel %vm461, %v3642, %v3643
        %v3645 = vrot.slane %v3596, 2
        %v3646 = vsel %vm461, %v3643, %v3645
        %v3647 = vrot.slane %v3597, 2
        %v3648 = vrot.slane %v3598, 2
        %v3649 = vsel %vm461, %v3647, %v3648
        %v3650 = vrot.slane %v3599, 2
        %v3651 = vsel %vm461, %v3648, %v3650
        %v3652 = vrot.slane %v3600, 2
        %v3653 = vrot.slane %v3601, 2
        %v3654 = vsel %vm461, %v3652, %v3653
        %v3655 = vrot.slane %v3602, 2
        %v3656 = vsel %vm461, %v3653, %v3655
        %v3657 = vrot.slane %v3603, 2
        %v3658 = vrot.slane %v3604, 2
        %v3659 = vsel %vm461, %v3657, %v3658
        %v3660 = vrot.slane %v3605, 2
        %v3661 = vsel %vm461, %v3658, %v3660
        %v3662 = vrot.slane %v3606, 2
        %v3663 = vrot.slane %v3607, 2
        %v3664 = vsel %vm461, %v3662, %v3663
        %v3665 = vrot.slane %v3608, 2
        %v3666 = vsel %vm461, %v3663, %v3665
        %v3667 = vrot.slane %v3609, 2
        %v3668 = vrot.slane %v3610, 2
        %v3669 = vsel %vm461, %v3667, %v3668
        %v3670 = vrot.slane %v3611, 2
        %v3671 = vsel %vm461, %v3668, %v3670
        %v3672 = vrot.slane %v3612, 2
        %v3673 = vrot.slane %v3613, 2
        %v3674 = vsel %vm461, %v3672, %v3673
        %v3675 = vrot.slane %v3614, 2
        %v3676 = vsel %vm461, %v3673, %v3675
        %v3677 = vrot.slane %v3615, 2
        %v3678 = vrot.slane %v3616, 2
        %v3679 = vsel %vm461, %v3677, %v3678
        %v3680 = vrot.slane %v3617, 2
        %v3681 = vsel %vm461, %v3678, %v3680
        %v3698 = vadd.f32 %v3576, %v3644
        %v3699 = vadd.f32 %v3577, %v3646
        %v3700 = vadd.f32 %v3578, %v3649
        %v3701 = vadd.f32 %v3579, %v3651
        %v3702 = vadd.f32 %v3580, %v3654
        %v3703 = vadd.f32 %v3581, %v3656
        %v3704 = vadd.f32 %v3582, %v3659
        %v3705 = vadd.f32 %v3583, %v3661
        %v3706 = vadd.f32 %v3584, %v3664
        %v3707 = vadd.f32 %v3585, %v3666
        %v3708 = vadd.f32 %v3586, %v3669
        %v3709 = vadd.f32 %v3587, %v3671
        %v3710 = vadd.f32 %v3588, %v3674
        %v3711 = vadd.f32 %v3589, %v3676
        %v3712 = vadd.f32 %v3590, %v3679
        %v3713 = vadd.f32 %v3591, %v3681
        %v3714 = vld [vmem:[%s3435 + $0x3] sm:$0x1]
        %v3715 = vperm.slane %v3714, 0
        %v3716 = vmul.f32 %v3411, %v3715
        %v3717 = vmul.f32 %v3412, %v3715
        %v3718 = vmul.f32 %v3413, %v3715
        %v3719 = vmul.f32 %v3414, %v3715
        %v3720 = vmul.f32 %v3415, %v3715
        %v3721 = vmul.f32 %v3416, %v3715
        %v3722 = vmul.f32 %v3417, %v3715
        %v3723 = vmul.f32 %v3418, %v3715
        %v3724 = vmul.f32 %v3419, %v3715
        %v3725 = vmul.f32 %v3420, %v3715
        %v3726 = vmul.f32 %v3421, %v3715
        %v3727 = vmul.f32 %v3422, %v3715
        %v3728 = vmul.f32 %v3423, %v3715
        %v3729 = vmul.f32 %v3424, %v3715
        %v3730 = vmul.f32 %v3425, %v3715
        %v3731 = vmul.f32 %v3426, %v3715
        %v3732 = vmul.f32 %v3427, %v3715
        %v3733 = vmul.f32 %v3428, %v3715
        %v3734 = vmul.f32 %v3429, %v3715
        %v3735 = vmul.f32 %v3430, %v3715
        %v3736 = vmul.f32 %v3431, %v3715
        %v3737 = vmul.f32 %v3432, %v3715
        %v3738 = vmul.f32 %v3433, %v3715
        %v3739 = vmul.f32 %v3434, %v3715
        %v3764 = vrot.slane %v3716, 3
        %v3765 = vrot.slane %v3717, 3
        %v3766 = vsel %vm584, %v3764, %v3765
        %v3767 = vrot.slane %v3718, 3
        %v3768 = vsel %vm584, %v3765, %v3767
        %v3769 = vrot.slane %v3719, 3
        %v3770 = vrot.slane %v3720, 3
        %v3771 = vsel %vm584, %v3769, %v3770
        %v3772 = vrot.slane %v3721, 3
        %v3773 = vsel %vm584, %v3770, %v3772
        %v3774 = vrot.slane %v3722, 3
        %v3775 = vrot.slane %v3723, 3
        %v3776 = vsel %vm584, %v3774, %v3775
        %v3777 = vrot.slane %v3724, 3
        %v3778 = vsel %vm584, %v3775, %v3777
        %v3779 = vrot.slane %v3725, 3
        %v3780 = vrot.slane %v3726, 3
        %v3781 = vsel %vm584, %v3779, %v3780
        %v3782 = vrot.slane %v3727, 3
        %v3783 = vsel %vm584, %v3780, %v3782
        %v3784 = vrot.slane %v3728, 3
        %v3785 = vrot.slane %v3729, 3
        %v3786 = vsel %vm584, %v3784, %v3785
        %v3787 = vrot.slane %v3730, 3
        %v3788 = vsel %vm584, %v3785, %v3787
        %v3789 = vrot.slane %v3731, 3
        %v3790 = vrot.slane %v3732, 3
        %v3791 = vsel %vm584, %v3789, %v3790
        %v3792 = vrot.slane %v3733, 3
        %v3793 = vsel %vm584, %v3790, %v3792
        %v3794 = vrot.slane %v3734, 3
        %v3795 = vrot.slane %v3735, 3
        %v3796 = vsel %vm584, %v3794, %v3795
        %v3797 = vrot.slane %v3736, 3
        %v3798 = vsel %vm584, %v3795, %v3797
        %v3799 = vrot.slane %v3737, 3
        %v3800 = vrot.slane %v3738, 3
        %v3801 = vsel %vm584, %v3799, %v3800
        %v3802 = vrot.slane %v3739, 3
        %v3803 = vsel %vm584, %v3800, %v3802
        %v3820 = vadd.f32 %v3698, %v3766
        %v3821 = vadd.f32 %v3699, %v3768
        %v3822 = vadd.f32 %v3700, %v3771
        %v3823 = vadd.f32 %v3701, %v3773
        %v3824 = vadd.f32 %v3702, %v3776
        %v3825 = vadd.f32 %v3703, %v3778
        %v3826 = vadd.f32 %v3704, %v3781
        %v3827 = vadd.f32 %v3705, %v3783
        %v3828 = vadd.f32 %v3706, %v3786
        %v3829 = vadd.f32 %v3707, %v3788
        %v3830 = vadd.f32 %v3708, %v3791
        %v3831 = vadd.f32 %v3709, %v3793
        %v3832 = vadd.f32 %v3710, %v3796
        %v3833 = vadd.f32 %v3711, %v3798
        %v3834 = vadd.f32 %v3712, %v3801
        %v3835 = vadd.f32 %v3713, %v3803
        %v3836 = vld [vmem:[%s3435 + $0x4] sm:$0x1]
        %v3837 = vperm.slane %v3836, 0
        %v3838 = vmul.f32 %v3411, %v3837
        %v3839 = vmul.f32 %v3412, %v3837
        %v3840 = vmul.f32 %v3413, %v3837
        %v3841 = vmul.f32 %v3414, %v3837
        %v3842 = vmul.f32 %v3415, %v3837
        %v3843 = vmul.f32 %v3416, %v3837
        %v3844 = vmul.f32 %v3417, %v3837
        %v3845 = vmul.f32 %v3418, %v3837
        %v3846 = vmul.f32 %v3419, %v3837
        %v3847 = vmul.f32 %v3420, %v3837
        %v3848 = vmul.f32 %v3421, %v3837
        %v3849 = vmul.f32 %v3422, %v3837
        %v3850 = vmul.f32 %v3423, %v3837
        %v3851 = vmul.f32 %v3424, %v3837
        %v3852 = vmul.f32 %v3425, %v3837
        %v3853 = vmul.f32 %v3426, %v3837
        %v3854 = vmul.f32 %v3427, %v3837
        %v3855 = vmul.f32 %v3428, %v3837
        %v3856 = vmul.f32 %v3429, %v3837
        %v3857 = vmul.f32 %v3430, %v3837
        %v3858 = vmul.f32 %v3431, %v3837
        %v3859 = vmul.f32 %v3432, %v3837
        %v3860 = vmul.f32 %v3433, %v3837
        %v3861 = vmul.f32 %v3434, %v3837
        %v3886 = vrot.slane %v3838, 4
        %v3887 = vrot.slane %v3839, 4
        %v3888 = vsel %vm707, %v3886, %v3887
        %v3889 = vrot.slane %v3840, 4
        %v3890 = vsel %vm707, %v3887, %v3889
        %v3891 = vrot.slane %v3841, 4
        %v3892 = vrot.slane %v3842, 4
        %v3893 = vsel %vm707, %v3891, %v3892
        %v3894 = vrot.slane %v3843, 4
        %v3895 = vsel %vm707, %v3892, %v3894
        %v3896 = vrot.slane %v3844, 4
        %v3897 = vrot.slane %v3845, 4
        %v3898 = vsel %vm707, %v3896, %v3897
        %v3899 = vrot.slane %v3846, 4
        %v3900 = vsel %vm707, %v3897, %v3899
        %v3901 = vrot.slane %v3847, 4
        %v3902 = vrot.slane %v3848, 4
        %v3903 = vsel %vm707, %v3901, %v3902
        %v3904 = vrot.slane %v3849, 4
        %v3905 = vsel %vm707, %v3902, %v3904
        %v3906 = vrot.slane %v3850, 4
        %v3907 = vrot.slane %v3851, 4
        %v3908 = vsel %vm707, %v3906, %v3907
        %v3909 = vrot.slane %v3852, 4
        %v3910 = vsel %vm707, %v3907, %v3909
        %v3911 = vrot.slane %v3853, 4
        %v3912 = vrot.slane %v3854, 4
        %v3913 = vsel %vm707, %v3911, %v3912
        %v3914 = vrot.slane %v3855, 4
        %v3915 = vsel %vm707, %v3912, %v3914
        %v3916 = vrot.slane %v3856, 4
        %v3917 = vrot.slane %v3857, 4
        %v3918 = vsel %vm707, %v3916, %v3917
        %v3919 = vrot.slane %v3858, 4
        %v3920 = vsel %vm707, %v3917, %v3919
        %v3921 = vrot.slane %v3859, 4
        %v3922 = vrot.slane %v3860, 4
        %v3923 = vsel %vm707, %v3921, %v3922
        %v3924 = vrot.slane %v3861, 4
        %v3925 = vsel %vm707, %v3922, %v3924
        %v3942 = vadd.f32 %v3820, %v3888
        %v3943 = vadd.f32 %v3821, %v3890
        %v3944 = vadd.f32 %v3822, %v3893
        %v3945 = vadd.f32 %v3823, %v3895
        %v3946 = vadd.f32 %v3824, %v3898
        %v3947 = vadd.f32 %v3825, %v3900
        %v3948 = vadd.f32 %v3826, %v3903
        %v3949 = vadd.f32 %v3827, %v3905
        %v3950 = vadd.f32 %v3828, %v3908
        %v3951 = vadd.f32 %v3829, %v3910
        %v3952 = vadd.f32 %v3830, %v3913
        %v3953 = vadd.f32 %v3831, %v3915
        %v3954 = vadd.f32 %v3832, %v3918
        %v3955 = vadd.f32 %v3833, %v3920
        %v3956 = vadd.f32 %v3834, %v3923
        %v3957 = vadd.f32 %v3835, %v3925
        %v3958 = vld [vmem:[%s3435 + $0x5] sm:$0x1]
        %v3959 = vperm.slane %v3958, 0
        %v3960 = vmul.f32 %v3411, %v3959
        %v3961 = vmul.f32 %v3412, %v3959
        %v3962 = vmul.f32 %v3413, %v3959
        %v3963 = vmul.f32 %v3414, %v3959
        %v3964 = vmul.f32 %v3415, %v3959
        %v3965 = vmul.f32 %v3416, %v3959
        %v3966 = vmul.f32 %v3417, %v3959
        %v3967 = vmul.f32 %v3418, %v3959
        %v3968 = vmul.f32 %v3419, %v3959
        %v3969 = vmul.f32 %v3420, %v3959
        %v3970 = vmul.f32 %v3421, %v3959
        %v3971 = vmul.f32 %v3422, %v3959
        %v3972 = vmul.f32 %v3423, %v3959
        %v3973 = vmul.f32 %v3424, %v3959
        %v3974 = vmul.f32 %v3425, %v3959
        %v3975 = vmul.f32 %v3426, %v3959
        %v3976 = vmul.f32 %v3427, %v3959
        %v3977 = vmul.f32 %v3428, %v3959
        %v3978 = vmul.f32 %v3429, %v3959
        %v3979 = vmul.f32 %v3430, %v3959
        %v3980 = vmul.f32 %v3431, %v3959
        %v3981 = vmul.f32 %v3432, %v3959
        %v3982 = vmul.f32 %v3433, %v3959
        %v3983 = vmul.f32 %v3434, %v3959
        %v4008 = vrot.slane %v3960, 5
        %v4009 = vrot.slane %v3961, 5
        %v4010 = vsel %vm830, %v4008, %v4009
        %v4011 = vrot.slane %v3962, 5
        %v4012 = vsel %vm830, %v4009, %v4011
        %v4013 = vrot.slane %v3963, 5
        %v4014 = vrot.slane %v3964, 5
        %v4015 = vsel %vm830, %v4013, %v4014
        %v4016 = vrot.slane %v3965, 5
        %v4017 = vsel %vm830, %v4014, %v4016
        %v4018 = vrot.slane %v3966, 5
        %v4019 = vrot.slane %v3967, 5
        %v4020 = vsel %vm830, %v4018, %v4019
        %v4021 = vrot.slane %v3968, 5
        %v4022 = vsel %vm830, %v4019, %v4021
        %v4023 = vrot.slane %v3969, 5
        %v4024 = vrot.slane %v3970, 5
        %v4025 = vsel %vm830, %v4023, %v4024
        %v4026 = vrot.slane %v3971, 5
        %v4027 = vsel %vm830, %v4024, %v4026
        %v4028 = vrot.slane %v3972, 5
        %v4029 = vrot.slane %v3973, 5
        %v4030 = vsel %vm830, %v4028, %v4029
        %v4031 = vrot.slane %v3974, 5
        %v4032 = vsel %vm830, %v4029, %v4031
        %v4033 = vrot.slane %v3975, 5
        %v4034 = vrot.slane %v3976, 5
        %v4035 = vsel %vm830, %v4033, %v4034
        %v4036 = vrot.slane %v3977, 5
        %v4037 = vsel %vm830, %v4034, %v4036
        %v4038 = vrot.slane %v3978, 5
        %v4039 = vrot.slane %v3979, 5
        %v4040 = vsel %vm830, %v4038, %v4039
        %v4041 = vrot.slane %v3980, 5
        %v4042 = vsel %vm830, %v4039, %v4041
        %v4043 = vrot.slane %v3981, 5
        %v4044 = vrot.slane %v3982, 5
        %v4045 = vsel %vm830, %v4043, %v4044
        %v4046 = vrot.slane %v3983, 5
        %v4047 = vsel %vm830, %v4044, %v4046
        %v4064 = vadd.f32 %v3942, %v4010
        %v4065 = vadd.f32 %v3943, %v4012
        %v4066 = vadd.f32 %v3944, %v4015
        %v4067 = vadd.f32 %v3945, %v4017
        %v4068 = vadd.f32 %v3946, %v4020
        %v4069 = vadd.f32 %v3947, %v4022
        %v4070 = vadd.f32 %v3948, %v4025
        %v4071 = vadd.f32 %v3949, %v4027
        %v4072 = vadd.f32 %v3950, %v4030
        %v4073 = vadd.f32 %v3951, %v4032
        %v4074 = vadd.f32 %v3952, %v4035
        %v4075 = vadd.f32 %v3953, %v4037
        %v4076 = vadd.f32 %v3954, %v4040
        %v4077 = vadd.f32 %v3955, %v4042
        %v4078 = vadd.f32 %v3956, %v4045
        %v4079 = vadd.f32 %v3957, %v4047
        %v4080 = vld [vmem:[%s3435 + $0x6] sm:$0x1]
        %v4081 = vperm.slane %v4080, 0
        %v4082 = vmul.f32 %v3411, %v4081
        %v4083 = vmul.f32 %v3412, %v4081
        %v4084 = vmul.f32 %v3413, %v4081
        %v4085 = vmul.f32 %v3414, %v4081
        %v4086 = vmul.f32 %v3415, %v4081
        %v4087 = vmul.f32 %v3416, %v4081
        %v4088 = vmul.f32 %v3417, %v4081
        %v4089 = vmul.f32 %v3418, %v4081
        %v4090 = vmul.f32 %v3419, %v4081
        %v4091 = vmul.f32 %v3420, %v4081
        %v4092 = vmul.f32 %v3421, %v4081
        %v4093 = vmul.f32 %v3422, %v4081
        %v4094 = vmul.f32 %v3423, %v4081
        %v4095 = vmul.f32 %v3424, %v4081
        %v4096 = vmul.f32 %v3425, %v4081
        %v4097 = vmul.f32 %v3426, %v4081
        %v4098 = vmul.f32 %v3427, %v4081
        %v4099 = vmul.f32 %v3428, %v4081
        %v4100 = vmul.f32 %v3429, %v4081
        %v4101 = vmul.f32 %v3430, %v4081
        %v4102 = vmul.f32 %v3431, %v4081
        %v4103 = vmul.f32 %v3432, %v4081
        %v4104 = vmul.f32 %v3433, %v4081
        %v4105 = vmul.f32 %v3434, %v4081
        %v4130 = vrot.slane %v4082, 6
        %v4131 = vrot.slane %v4083, 6
        %v4132 = vsel %vm953, %v4130, %v4131
        %v4133 = vrot.slane %v4084, 6
        %v4134 = vsel %vm953, %v4131, %v4133
        %v4135 = vrot.slane %v4085, 6
        %v4136 = vrot.slane %v4086, 6
        %v4137 = vsel %vm953, %v4135, %v4136
        %v4138 = vrot.slane %v4087, 6
        %v4139 = vsel %vm953, %v4136, %v4138
        %v4140 = vrot.slane %v4088, 6
        %v4141 = vrot.slane %v4089, 6
        %v4142 = vsel %vm953, %v4140, %v4141
        %v4143 = vrot.slane %v4090, 6
        %v4144 = vsel %vm953, %v4141, %v4143
        %v4145 = vrot.slane %v4091, 6
        %v4146 = vrot.slane %v4092, 6
        %v4147 = vsel %vm953, %v4145, %v4146
        %v4148 = vrot.slane %v4093, 6
        %v4149 = vsel %vm953, %v4146, %v4148
        %v4150 = vrot.slane %v4094, 6
        %v4151 = vrot.slane %v4095, 6
        %v4152 = vsel %vm953, %v4150, %v4151
        %v4153 = vrot.slane %v4096, 6
        %v4154 = vsel %vm953, %v4151, %v4153
        %v4155 = vrot.slane %v4097, 6
        %v4156 = vrot.slane %v4098, 6
        %v4157 = vsel %vm953, %v4155, %v4156
        %v4158 = vrot.slane %v4099, 6
        %v4159 = vsel %vm953, %v4156, %v4158
        %v4160 = vrot.slane %v4100, 6
        %v4161 = vrot.slane %v4101, 6
        %v4162 = vsel %vm953, %v4160, %v4161
        %v4163 = vrot.slane %v4102, 6
        %v4164 = vsel %vm953, %v4161, %v4163
        %v4165 = vrot.slane %v4103, 6
        %v4166 = vrot.slane %v4104, 6
        %v4167 = vsel %vm953, %v4165, %v4166
        %v4168 = vrot.slane %v4105, 6
        %v4169 = vsel %vm953, %v4166, %v4168
        %v4186 = vadd.f32 %v4064, %v4132
        %v4187 = vadd.f32 %v4065, %v4134
        %v4188 = vadd.f32 %v4066, %v4137
        %v4189 = vadd.f32 %v4067, %v4139
        %v4190 = vadd.f32 %v4068, %v4142
        %v4191 = vadd.f32 %v4069, %v4144
        %v4192 = vadd.f32 %v4070, %v4147
        %v4193 = vadd.f32 %v4071, %v4149
        %v4194 = vadd.f32 %v4072, %v4152
        %v4195 = vadd.f32 %v4073, %v4154
        %v4196 = vadd.f32 %v4074, %v4157
        %v4197 = vadd.f32 %v4075, %v4159
        %v4198 = vadd.f32 %v4076, %v4162
        %v4199 = vadd.f32 %v4077, %v4164
        %v4200 = vadd.f32 %v4078, %v4167
        %v4201 = vadd.f32 %v4079, %v4169
        %s4202 = sadd.s32 %s223, 5
        %s4203 = smul.u32 %s4202, 24
        %s4204 = scalar_lea.vmem %s193, %s4203 [#allocation2]
        %v4205 = vld [vmem:[%s4204] sm:$0xff]
        %v4206 = vld [vmem:[%s4204 + $0x8] sm:$0xff]
        %v4207 = vld [vmem:[%s4204 + $0x10] sm:$0xff]
        %v4208 = vld [vmem:[%s4204 + $0x18] sm:$0xff]
        %v4209 = vld [vmem:[%s4204 + $0x20] sm:$0xff]
        %v4210 = vld [vmem:[%s4204 + $0x28] sm:$0xff]
        %v4211 = vld [vmem:[%s4204 + $0x30] sm:$0xff]
        %v4212 = vld [vmem:[%s4204 + $0x38] sm:$0xff]
        %v4213 = vld [vmem:[%s4204 + $0x40] sm:$0xff]
        %v4214 = vld [vmem:[%s4204 + $0x48] sm:$0xff]
        %v4215 = vld [vmem:[%s4204 + $0x50] sm:$0xff]
        %v4216 = vld [vmem:[%s4204 + $0x58] sm:$0xff]
        %v4217 = vld [vmem:[%s4204 + $0x60] sm:$0xff]
        %v4218 = vld [vmem:[%s4204 + $0x68] sm:$0xff]
        %v4219 = vld [vmem:[%s4204 + $0x70] sm:$0xff]
        %v4220 = vld [vmem:[%s4204 + $0x78] sm:$0xff]
        %v4221 = vld [vmem:[%s4204 + $0x80] sm:$0xff]
        %v4222 = vld [vmem:[%s4204 + $0x88] sm:$0xff]
        %v4223 = vld [vmem:[%s4204 + $0x90] sm:$0xff]
        %v4224 = vld [vmem:[%s4204 + $0x98] sm:$0xff]
        %v4225 = vld [vmem:[%s4204 + $0xa0] sm:$0xff]
        %v4226 = vld [vmem:[%s4204 + $0xa8] sm:$0xff]
        %v4227 = vld [vmem:[%s4204 + $0xb0] sm:$0xff]
        %v4228 = vld [vmem:[%s4204 + $0xb8] sm:$0xff]
        %s4229 = scalar_lea.vmem [#allocation5], 40
        %v4230 = vld [vmem:[%s4229] sm:$0x1]
        %v4231 = vperm.slane %v4230, 0
        %v4232 = vmul.f32 %v4205, %v4231
        %v4233 = vmul.f32 %v4206, %v4231
        %v4234 = vmul.f32 %v4208, %v4231
        %v4235 = vmul.f32 %v4209, %v4231
        %v4236 = vmul.f32 %v4211, %v4231
        %v4237 = vmul.f32 %v4212, %v4231
        %v4238 = vmul.f32 %v4214, %v4231
        %v4239 = vmul.f32 %v4215, %v4231
        %v4240 = vmul.f32 %v4217, %v4231
        %v4241 = vmul.f32 %v4218, %v4231
        %v4242 = vmul.f32 %v4220, %v4231
        %v4243 = vmul.f32 %v4221, %v4231
        %v4244 = vmul.f32 %v4223, %v4231
        %v4245 = vmul.f32 %v4224, %v4231
        %v4246 = vmul.f32 %v4226, %v4231
        %v4247 = vmul.f32 %v4227, %v4231
        %v4248 = vadd.f32 %v4186, %v4232
        %v4249 = vadd.f32 %v4187, %v4233
        %v4250 = vadd.f32 %v4188, %v4234
        %v4251 = vadd.f32 %v4189, %v4235
        %v4252 = vadd.f32 %v4190, %v4236
        %v4253 = vadd.f32 %v4191, %v4237
        %v4254 = vadd.f32 %v4192, %v4238
        %v4255 = vadd.f32 %v4193, %v4239
        %v4256 = vadd.f32 %v4194, %v4240
        %v4257 = vadd.f32 %v4195, %v4241
        %v4258 = vadd.f32 %v4196, %v4242
        %v4259 = vadd.f32 %v4197, %v4243
        %v4260 = vadd.f32 %v4198, %v4244
        %v4261 = vadd.f32 %v4199, %v4245
        %v4262 = vadd.f32 %v4200, %v4246
        %v4263 = vadd.f32 %v4201, %v4247
        %v4264 = vld [vmem:[%s4229 + $0x1] sm:$0x1]
        %v4265 = vperm.slane %v4264, 0
        %v4266 = vmul.f32 %v4205, %v4265
        %v4267 = vmul.f32 %v4206, %v4265
        %v4268 = vmul.f32 %v4207, %v4265
        %v4269 = vmul.f32 %v4208, %v4265
        %v4270 = vmul.f32 %v4209, %v4265
        %v4271 = vmul.f32 %v4210, %v4265
        %v4272 = vmul.f32 %v4211, %v4265
        %v4273 = vmul.f32 %v4212, %v4265
        %v4274 = vmul.f32 %v4213, %v4265
        %v4275 = vmul.f32 %v4214, %v4265
        %v4276 = vmul.f32 %v4215, %v4265
        %v4277 = vmul.f32 %v4216, %v4265
        %v4278 = vmul.f32 %v4217, %v4265
        %v4279 = vmul.f32 %v4218, %v4265
        %v4280 = vmul.f32 %v4219, %v4265
        %v4281 = vmul.f32 %v4220, %v4265
        %v4282 = vmul.f32 %v4221, %v4265
        %v4283 = vmul.f32 %v4222, %v4265
        %v4284 = vmul.f32 %v4223, %v4265
        %v4285 = vmul.f32 %v4224, %v4265
        %v4286 = vmul.f32 %v4225, %v4265
        %v4287 = vmul.f32 %v4226, %v4265
        %v4288 = vmul.f32 %v4227, %v4265
        %v4289 = vmul.f32 %v4228, %v4265
        %v4314 = vrot.slane %v4266, 1
        %v4315 = vrot.slane %v4267, 1
        %v4316 = vsel %vm338, %v4314, %v4315
        %v4317 = vrot.slane %v4268, 1
        %v4318 = vsel %vm338, %v4315, %v4317
        %v4319 = vrot.slane %v4269, 1
        %v4320 = vrot.slane %v4270, 1
        %v4321 = vsel %vm338, %v4319, %v4320
        %v4322 = vrot.slane %v4271, 1
        %v4323 = vsel %vm338, %v4320, %v4322
        %v4324 = vrot.slane %v4272, 1
        %v4325 = vrot.slane %v4273, 1
        %v4326 = vsel %vm338, %v4324, %v4325
        %v4327 = vrot.slane %v4274, 1
        %v4328 = vsel %vm338, %v4325, %v4327
        %v4329 = vrot.slane %v4275, 1
        %v4330 = vrot.slane %v4276, 1
        %v4331 = vsel %vm338, %v4329, %v4330
        %v4332 = vrot.slane %v4277, 1
        %v4333 = vsel %vm338, %v4330, %v4332
        %v4334 = vrot.slane %v4278, 1
        %v4335 = vrot.slane %v4279, 1
        %v4336 = vsel %vm338, %v4334, %v4335
        %v4337 = vrot.slane %v4280, 1
        %v4338 = vsel %vm338, %v4335, %v4337
        %v4339 = vrot.slane %v4281, 1
        %v4340 = vrot.slane %v4282, 1
        %v4341 = vsel %vm338, %v4339, %v4340
        %v4342 = vrot.slane %v4283, 1
        %v4343 = vsel %vm338, %v4340, %v4342
        %v4344 = vrot.slane %v4284, 1
        %v4345 = vrot.slane %v4285, 1
        %v4346 = vsel %vm338, %v4344, %v4345
        %v4347 = vrot.slane %v4286, 1
        %v4348 = vsel %vm338, %v4345, %v4347
        %v4349 = vrot.slane %v4287, 1
        %v4350 = vrot.slane %v4288, 1
        %v4351 = vsel %vm338, %v4349, %v4350
        %v4352 = vrot.slane %v4289, 1
        %v4353 = vsel %vm338, %v4350, %v4352
        %v4370 = vadd.f32 %v4248, %v4316
        %v4371 = vadd.f32 %v4249, %v4318
        %v4372 = vadd.f32 %v4250, %v4321
        %v4373 = vadd.f32 %v4251, %v4323
        %v4374 = vadd.f32 %v4252, %v4326
        %v4375 = vadd.f32 %v4253, %v4328
        %v4376 = vadd.f32 %v4254, %v4331
        %v4377 = vadd.f32 %v4255, %v4333
        %v4378 = vadd.f32 %v4256, %v4336
        %v4379 = vadd.f32 %v4257, %v4338
        %v4380 = vadd.f32 %v4258, %v4341
        %v4381 = vadd.f32 %v4259, %v4343
        %v4382 = vadd.f32 %v4260, %v4346
        %v4383 = vadd.f32 %v4261, %v4348
        %v4384 = vadd.f32 %v4262, %v4351
        %v4385 = vadd.f32 %v4263, %v4353
        %v4386 = vld [vmem:[%s4229 + $0x2] sm:$0x1]
        %v4387 = vperm.slane %v4386, 0
        %v4388 = vmul.f32 %v4205, %v4387
        %v4389 = vmul.f32 %v4206, %v4387
        %v4390 = vmul.f32 %v4207, %v4387
        %v4391 = vmul.f32 %v4208, %v4387
        %v4392 = vmul.f32 %v4209, %v4387
        %v4393 = vmul.f32 %v4210, %v4387
        %v4394 = vmul.f32 %v4211, %v4387
        %v4395 = vmul.f32 %v4212, %v4387
        %v4396 = vmul.f32 %v4213, %v4387
        %v4397 = vmul.f32 %v4214, %v4387
        %v4398 = vmul.f32 %v4215, %v4387
        %v4399 = vmul.f32 %v4216, %v4387
        %v4400 = vmul.f32 %v4217, %v4387
        %v4401 = vmul.f32 %v4218, %v4387
        %v4402 = vmul.f32 %v4219, %v4387
        %v4403 = vmul.f32 %v4220, %v4387
        %v4404 = vmul.f32 %v4221, %v4387
        %v4405 = vmul.f32 %v4222, %v4387
        %v4406 = vmul.f32 %v4223, %v4387
        %v4407 = vmul.f32 %v4224, %v4387
        %v4408 = vmul.f32 %v4225, %v4387
        %v4409 = vmul.f32 %v4226, %v4387
        %v4410 = vmul.f32 %v4227, %v4387
        %v4411 = vmul.f32 %v4228, %v4387
        %v4436 = vrot.slane %v4388, 2
        %v4437 = vrot.slane %v4389, 2
        %v4438 = vsel %vm461, %v4436, %v4437
        %v4439 = vrot.slane %v4390, 2
        %v4440 = vsel %vm461, %v4437, %v4439
        %v4441 = vrot.slane %v4391, 2
        %v4442 = vrot.slane %v4392, 2
        %v4443 = vsel %vm461, %v4441, %v4442
        %v4444 = vrot.slane %v4393, 2
        %v4445 = vsel %vm461, %v4442, %v4444
        %v4446 = vrot.slane %v4394, 2
        %v4447 = vrot.slane %v4395, 2
        %v4448 = vsel %vm461, %v4446, %v4447
        %v4449 = vrot.slane %v4396, 2
        %v4450 = vsel %vm461, %v4447, %v4449
        %v4451 = vrot.slane %v4397, 2
        %v4452 = vrot.slane %v4398, 2
        %v4453 = vsel %vm461, %v4451, %v4452
        %v4454 = vrot.slane %v4399, 2
        %v4455 = vsel %vm461, %v4452, %v4454
        %v4456 = vrot.slane %v4400, 2
        %v4457 = vrot.slane %v4401, 2
        %v4458 = vsel %vm461, %v4456, %v4457
        %v4459 = vrot.slane %v4402, 2
        %v4460 = vsel %vm461, %v4457, %v4459
        %v4461 = vrot.slane %v4403, 2
        %v4462 = vrot.slane %v4404, 2
        %v4463 = vsel %vm461, %v4461, %v4462
        %v4464 = vrot.slane %v4405, 2
        %v4465 = vsel %vm461, %v4462, %v4464
        %v4466 = vrot.slane %v4406, 2
        %v4467 = vrot.slane %v4407, 2
        %v4468 = vsel %vm461, %v4466, %v4467
        %v4469 = vrot.slane %v4408, 2
        %v4470 = vsel %vm461, %v4467, %v4469
        %v4471 = vrot.slane %v4409, 2
        %v4472 = vrot.slane %v4410, 2
        %v4473 = vsel %vm461, %v4471, %v4472
        %v4474 = vrot.slane %v4411, 2
        %v4475 = vsel %vm461, %v4472, %v4474
        %v4492 = vadd.f32 %v4370, %v4438
        %v4493 = vadd.f32 %v4371, %v4440
        %v4494 = vadd.f32 %v4372, %v4443
        %v4495 = vadd.f32 %v4373, %v4445
        %v4496 = vadd.f32 %v4374, %v4448
        %v4497 = vadd.f32 %v4375, %v4450
        %v4498 = vadd.f32 %v4376, %v4453
        %v4499 = vadd.f32 %v4377, %v4455
        %v4500 = vadd.f32 %v4378, %v4458
        %v4501 = vadd.f32 %v4379, %v4460
        %v4502 = vadd.f32 %v4380, %v4463
        %v4503 = vadd.f32 %v4381, %v4465
        %v4504 = vadd.f32 %v4382, %v4468
        %v4505 = vadd.f32 %v4383, %v4470
        %v4506 = vadd.f32 %v4384, %v4473
        %v4507 = vadd.f32 %v4385, %v4475
        %v4508 = vld [vmem:[%s4229 + $0x3] sm:$0x1]
        %v4509 = vperm.slane %v4508, 0
        %v4510 = vmul.f32 %v4205, %v4509
        %v4511 = vmul.f32 %v4206, %v4509
        %v4512 = vmul.f32 %v4207, %v4509
        %v4513 = vmul.f32 %v4208, %v4509
        %v4514 = vmul.f32 %v4209, %v4509
        %v4515 = vmul.f32 %v4210, %v4509
        %v4516 = vmul.f32 %v4211, %v4509
        %v4517 = vmul.f32 %v4212, %v4509
        %v4518 = vmul.f32 %v4213, %v4509
        %v4519 = vmul.f32 %v4214, %v4509
        %v4520 = vmul.f32 %v4215, %v4509
        %v4521 = vmul.f32 %v4216, %v4509
        %v4522 = vmul.f32 %v4217, %v4509
        %v4523 = vmul.f32 %v4218, %v4509
        %v4524 = vmul.f32 %v4219, %v4509
        %v4525 = vmul.f32 %v4220, %v4509
        %v4526 = vmul.f32 %v4221, %v4509
        %v4527 = vmul.f32 %v4222, %v4509
        %v4528 = vmul.f32 %v4223, %v4509
        %v4529 = vmul.f32 %v4224, %v4509
        %v4530 = vmul.f32 %v4225, %v4509
        %v4531 = vmul.f32 %v4226, %v4509
        %v4532 = vmul.f32 %v4227, %v4509
        %v4533 = vmul.f32 %v4228, %v4509
        %v4558 = vrot.slane %v4510, 3
        %v4559 = vrot.slane %v4511, 3
        %v4560 = vsel %vm584, %v4558, %v4559
        %v4561 = vrot.slane %v4512, 3
        %v4562 = vsel %vm584, %v4559, %v4561
        %v4563 = vrot.slane %v4513, 3
        %v4564 = vrot.slane %v4514, 3
        %v4565 = vsel %vm584, %v4563, %v4564
        %v4566 = vrot.slane %v4515, 3
        %v4567 = vsel %vm584, %v4564, %v4566
        %v4568 = vrot.slane %v4516, 3
        %v4569 = vrot.slane %v4517, 3
        %v4570 = vsel %vm584, %v4568, %v4569
        %v4571 = vrot.slane %v4518, 3
        %v4572 = vsel %vm584, %v4569, %v4571
        %v4573 = vrot.slane %v4519, 3
        %v4574 = vrot.slane %v4520, 3
        %v4575 = vsel %vm584, %v4573, %v4574
        %v4576 = vrot.slane %v4521, 3
        %v4577 = vsel %vm584, %v4574, %v4576
        %v4578 = vrot.slane %v4522, 3
        %v4579 = vrot.slane %v4523, 3
        %v4580 = vsel %vm584, %v4578, %v4579
        %v4581 = vrot.slane %v4524, 3
        %v4582 = vsel %vm584, %v4579, %v4581
        %v4583 = vrot.slane %v4525, 3
        %v4584 = vrot.slane %v4526, 3
        %v4585 = vsel %vm584, %v4583, %v4584
        %v4586 = vrot.slane %v4527, 3
        %v4587 = vsel %vm584, %v4584, %v4586
        %v4588 = vrot.slane %v4528, 3
        %v4589 = vrot.slane %v4529, 3
        %v4590 = vsel %vm584, %v4588, %v4589
        %v4591 = vrot.slane %v4530, 3
        %v4592 = vsel %vm584, %v4589, %v4591
        %v4593 = vrot.slane %v4531, 3
        %v4594 = vrot.slane %v4532, 3
        %v4595 = vsel %vm584, %v4593, %v4594
        %v4596 = vrot.slane %v4533, 3
        %v4597 = vsel %vm584, %v4594, %v4596
        %v4614 = vadd.f32 %v4492, %v4560
        %v4615 = vadd.f32 %v4493, %v4562
        %v4616 = vadd.f32 %v4494, %v4565
        %v4617 = vadd.f32 %v4495, %v4567
        %v4618 = vadd.f32 %v4496, %v4570
        %v4619 = vadd.f32 %v4497, %v4572
        %v4620 = vadd.f32 %v4498, %v4575
        %v4621 = vadd.f32 %v4499, %v4577
        %v4622 = vadd.f32 %v4500, %v4580
        %v4623 = vadd.f32 %v4501, %v4582
        %v4624 = vadd.f32 %v4502, %v4585
        %v4625 = vadd.f32 %v4503, %v4587
        %v4626 = vadd.f32 %v4504, %v4590
        %v4627 = vadd.f32 %v4505, %v4592
        %v4628 = vadd.f32 %v4506, %v4595
        %v4629 = vadd.f32 %v4507, %v4597
        %v4630 = vld [vmem:[%s4229 + $0x4] sm:$0x1]
        %v4631 = vperm.slane %v4630, 0
        %v4632 = vmul.f32 %v4205, %v4631
        %v4633 = vmul.f32 %v4206, %v4631
        %v4634 = vmul.f32 %v4207, %v4631
        %v4635 = vmul.f32 %v4208, %v4631
        %v4636 = vmul.f32 %v4209, %v4631
        %v4637 = vmul.f32 %v4210, %v4631
        %v4638 = vmul.f32 %v4211, %v4631
        %v4639 = vmul.f32 %v4212, %v4631
        %v4640 = vmul.f32 %v4213, %v4631
        %v4641 = vmul.f32 %v4214, %v4631
        %v4642 = vmul.f32 %v4215, %v4631
        %v4643 = vmul.f32 %v4216, %v4631
        %v4644 = vmul.f32 %v4217, %v4631
        %v4645 = vmul.f32 %v4218, %v4631
        %v4646 = vmul.f32 %v4219, %v4631
        %v4647 = vmul.f32 %v4220, %v4631
        %v4648 = vmul.f32 %v4221, %v4631
        %v4649 = vmul.f32 %v4222, %v4631
        %v4650 = vmul.f32 %v4223, %v4631
        %v4651 = vmul.f32 %v4224, %v4631
        %v4652 = vmul.f32 %v4225, %v4631
        %v4653 = vmul.f32 %v4226, %v4631
        %v4654 = vmul.f32 %v4227, %v4631
        %v4655 = vmul.f32 %v4228, %v4631
        %v4680 = vrot.slane %v4632, 4
        %v4681 = vrot.slane %v4633, 4
        %v4682 = vsel %vm707, %v4680, %v4681
        %v4683 = vrot.slane %v4634, 4
        %v4684 = vsel %vm707, %v4681, %v4683
        %v4685 = vrot.slane %v4635, 4
        %v4686 = vrot.slane %v4636, 4
        %v4687 = vsel %vm707, %v4685, %v4686
        %v4688 = vrot.slane %v4637, 4
        %v4689 = vsel %vm707, %v4686, %v4688
        %v4690 = vrot.slane %v4638, 4
        %v4691 = vrot.slane %v4639, 4
        %v4692 = vsel %vm707, %v4690, %v4691
        %v4693 = vrot.slane %v4640, 4
        %v4694 = vsel %vm707, %v4691, %v4693
        %v4695 = vrot.slane %v4641, 4
        %v4696 = vrot.slane %v4642, 4
        %v4697 = vsel %vm707, %v4695, %v4696
        %v4698 = vrot.slane %v4643, 4
        %v4699 = vsel %vm707, %v4696, %v4698
        %v4700 = vrot.slane %v4644, 4
        %v4701 = vrot.slane %v4645, 4
        %v4702 = vsel %vm707, %v4700, %v4701
        %v4703 = vrot.slane %v4646, 4
        %v4704 = vsel %vm707, %v4701, %v4703
        %v4705 = vrot.slane %v4647, 4
        %v4706 = vrot.slane %v4648, 4
        %v4707 = vsel %vm707, %v4705, %v4706
        %v4708 = vrot.slane %v4649, 4
        %v4709 = vsel %vm707, %v4706, %v4708
        %v4710 = vrot.slane %v4650, 4
        %v4711 = vrot.slane %v4651, 4
        %v4712 = vsel %vm707, %v4710, %v4711
        %v4713 = vrot.slane %v4652, 4
        %v4714 = vsel %vm707, %v4711, %v4713
        %v4715 = vrot.slane %v4653, 4
        %v4716 = vrot.slane %v4654, 4
        %v4717 = vsel %vm707, %v4715, %v4716
        %v4718 = vrot.slane %v4655, 4
        %v4719 = vsel %vm707, %v4716, %v4718
        %v4736 = vadd.f32 %v4614, %v4682
        %v4737 = vadd.f32 %v4615, %v4684
        %v4738 = vadd.f32 %v4616, %v4687
        %v4739 = vadd.f32 %v4617, %v4689
        %v4740 = vadd.f32 %v4618, %v4692
        %v4741 = vadd.f32 %v4619, %v4694
        %v4742 = vadd.f32 %v4620, %v4697
        %v4743 = vadd.f32 %v4621, %v4699
        %v4744 = vadd.f32 %v4622, %v4702
        %v4745 = vadd.f32 %v4623, %v4704
        %v4746 = vadd.f32 %v4624, %v4707
        %v4747 = vadd.f32 %v4625, %v4709
        %v4748 = vadd.f32 %v4626, %v4712
        %v4749 = vadd.f32 %v4627, %v4714
        %v4750 = vadd.f32 %v4628, %v4717
        %v4751 = vadd.f32 %v4629, %v4719
        %v4752 = vld [vmem:[%s4229 + $0x5] sm:$0x1]
        %v4753 = vperm.slane %v4752, 0
        %v4754 = vmul.f32 %v4205, %v4753
        %v4755 = vmul.f32 %v4206, %v4753
        %v4756 = vmul.f32 %v4207, %v4753
        %v4757 = vmul.f32 %v4208, %v4753
        %v4758 = vmul.f32 %v4209, %v4753
        %v4759 = vmul.f32 %v4210, %v4753
        %v4760 = vmul.f32 %v4211, %v4753
        %v4761 = vmul.f32 %v4212, %v4753
        %v4762 = vmul.f32 %v4213, %v4753
        %v4763 = vmul.f32 %v4214, %v4753
        %v4764 = vmul.f32 %v4215, %v4753
        %v4765 = vmul.f32 %v4216, %v4753
        %v4766 = vmul.f32 %v4217, %v4753
        %v4767 = vmul.f32 %v4218, %v4753
        %v4768 = vmul.f32 %v4219, %v4753
        %v4769 = vmul.f32 %v4220, %v4753
        %v4770 = vmul.f32 %v4221, %v4753
        %v4771 = vmul.f32 %v4222, %v4753
        %v4772 = vmul.f32 %v4223, %v4753
        %v4773 = vmul.f32 %v4224, %v4753
        %v4774 = vmul.f32 %v4225, %v4753
        %v4775 = vmul.f32 %v4226, %v4753
        %v4776 = vmul.f32 %v4227, %v4753
        %v4777 = vmul.f32 %v4228, %v4753
        %v4802 = vrot.slane %v4754, 5
        %v4803 = vrot.slane %v4755, 5
        %v4804 = vsel %vm830, %v4802, %v4803
        %v4805 = vrot.slane %v4756, 5
        %v4806 = vsel %vm830, %v4803, %v4805
        %v4807 = vrot.slane %v4757, 5
        %v4808 = vrot.slane %v4758, 5
        %v4809 = vsel %vm830, %v4807, %v4808
        %v4810 = vrot.slane %v4759, 5
        %v4811 = vsel %vm830, %v4808, %v4810
        %v4812 = vrot.slane %v4760, 5
        %v4813 = vrot.slane %v4761, 5
        %v4814 = vsel %vm830, %v4812, %v4813
        %v4815 = vrot.slane %v4762, 5
        %v4816 = vsel %vm830, %v4813, %v4815
        %v4817 = vrot.slane %v4763, 5
        %v4818 = vrot.slane %v4764, 5
        %v4819 = vsel %vm830, %v4817, %v4818
        %v4820 = vrot.slane %v4765, 5
        %v4821 = vsel %vm830, %v4818, %v4820
        %v4822 = vrot.slane %v4766, 5
        %v4823 = vrot.slane %v4767, 5
        %v4824 = vsel %vm830, %v4822, %v4823
        %v4825 = vrot.slane %v4768, 5
        %v4826 = vsel %vm830, %v4823, %v4825
        %v4827 = vrot.slane %v4769, 5
        %v4828 = vrot.slane %v4770, 5
        %v4829 = vsel %vm830, %v4827, %v4828
        %v4830 = vrot.slane %v4771, 5
        %v4831 = vsel %vm830, %v4828, %v4830
        %v4832 = vrot.slane %v4772, 5
        %v4833 = vrot.slane %v4773, 5
        %v4834 = vsel %vm830, %v4832, %v4833
        %v4835 = vrot.slane %v4774, 5
        %v4836 = vsel %vm830, %v4833, %v4835
        %v4837 = vrot.slane %v4775, 5
        %v4838 = vrot.slane %v4776, 5
        %v4839 = vsel %vm830, %v4837, %v4838
        %v4840 = vrot.slane %v4777, 5
        %v4841 = vsel %vm830, %v4838, %v4840
        %v4858 = vadd.f32 %v4736, %v4804
        %v4859 = vadd.f32 %v4737, %v4806
        %v4860 = vadd.f32 %v4738, %v4809
        %v4861 = vadd.f32 %v4739, %v4811
        %v4862 = vadd.f32 %v4740, %v4814
        %v4863 = vadd.f32 %v4741, %v4816
        %v4864 = vadd.f32 %v4742, %v4819
        %v4865 = vadd.f32 %v4743, %v4821
        %v4866 = vadd.f32 %v4744, %v4824
        %v4867 = vadd.f32 %v4745, %v4826
        %v4868 = vadd.f32 %v4746, %v4829
        %v4869 = vadd.f32 %v4747, %v4831
        %v4870 = vadd.f32 %v4748, %v4834
        %v4871 = vadd.f32 %v4749, %v4836
        %v4872 = vadd.f32 %v4750, %v4839
        %v4873 = vadd.f32 %v4751, %v4841
        %v4874 = vld [vmem:[%s4229 + $0x6] sm:$0x1]
        %v4875 = vperm.slane %v4874, 0
        %v4876 = vmul.f32 %v4205, %v4875
        %v4877 = vmul.f32 %v4206, %v4875
        %v4878 = vmul.f32 %v4207, %v4875
        %v4879 = vmul.f32 %v4208, %v4875
        %v4880 = vmul.f32 %v4209, %v4875
        %v4881 = vmul.f32 %v4210, %v4875
        %v4882 = vmul.f32 %v4211, %v4875
        %v4883 = vmul.f32 %v4212, %v4875
        %v4884 = vmul.f32 %v4213, %v4875
        %v4885 = vmul.f32 %v4214, %v4875
        %v4886 = vmul.f32 %v4215, %v4875
        %v4887 = vmul.f32 %v4216, %v4875
        %v4888 = vmul.f32 %v4217, %v4875
        %v4889 = vmul.f32 %v4218, %v4875
        %v4890 = vmul.f32 %v4219, %v4875
        %v4891 = vmul.f32 %v4220, %v4875
        %v4892 = vmul.f32 %v4221, %v4875
        %v4893 = vmul.f32 %v4222, %v4875
        %v4894 = vmul.f32 %v4223, %v4875
        %v4895 = vmul.f32 %v4224, %v4875
        %v4896 = vmul.f32 %v4225, %v4875
        %v4897 = vmul.f32 %v4226, %v4875
        %v4898 = vmul.f32 %v4227, %v4875
        %v4899 = vmul.f32 %v4228, %v4875
        %v4924 = vrot.slane %v4876, 6
        %v4925 = vrot.slane %v4877, 6
        %v4926 = vsel %vm953, %v4924, %v4925
        %v4927 = vrot.slane %v4878, 6
        %v4928 = vsel %vm953, %v4925, %v4927
        %v4929 = vrot.slane %v4879, 6
        %v4930 = vrot.slane %v4880, 6
        %v4931 = vsel %vm953, %v4929, %v4930
        %v4932 = vrot.slane %v4881, 6
        %v4933 = vsel %vm953, %v4930, %v4932
        %v4934 = vrot.slane %v4882, 6
        %v4935 = vrot.slane %v4883, 6
        %v4936 = vsel %vm953, %v4934, %v4935
        %v4937 = vrot.slane %v4884, 6
        %v4938 = vsel %vm953, %v4935, %v4937
        %v4939 = vrot.slane %v4885, 6
        %v4940 = vrot.slane %v4886, 6
        %v4941 = vsel %vm953, %v4939, %v4940
        %v4942 = vrot.slane %v4887, 6
        %v4943 = vsel %vm953, %v4940, %v4942
        %v4944 = vrot.slane %v4888, 6
        %v4945 = vrot.slane %v4889, 6
        %v4946 = vsel %vm953, %v4944, %v4945
        %v4947 = vrot.slane %v4890, 6
        %v4948 = vsel %vm953, %v4945, %v4947
        %v4949 = vrot.slane %v4891, 6
        %v4950 = vrot.slane %v4892, 6
        %v4951 = vsel %vm953, %v4949, %v4950
        %v4952 = vrot.slane %v4893, 6
        %v4953 = vsel %vm953, %v4950, %v4952
        %v4954 = vrot.slane %v4894, 6
        %v4955 = vrot.slane %v4895, 6
        %v4956 = vsel %vm953, %v4954, %v4955
        %v4957 = vrot.slane %v4896, 6
        %v4958 = vsel %vm953, %v4955, %v4957
        %v4959 = vrot.slane %v4897, 6
        %v4960 = vrot.slane %v4898, 6
        %v4961 = vsel %vm953, %v4959, %v4960
        %v4962 = vrot.slane %v4899, 6
        %v4963 = vsel %vm953, %v4960, %v4962
        %v4980 = vadd.f32 %v4858, %v4926
        %v4981 = vadd.f32 %v4859, %v4928
        %v4982 = vadd.f32 %v4860, %v4931
        %v4983 = vadd.f32 %v4861, %v4933
        %v4984 = vadd.f32 %v4862, %v4936
        %v4985 = vadd.f32 %v4863, %v4938
        %v4986 = vadd.f32 %v4864, %v4941
        %v4987 = vadd.f32 %v4865, %v4943
        %v4988 = vadd.f32 %v4866, %v4946
        %v4989 = vadd.f32 %v4867, %v4948
        %v4990 = vadd.f32 %v4868, %v4951
        %v4991 = vadd.f32 %v4869, %v4953
        %v4992 = vadd.f32 %v4870, %v4956
        %v4993 = vadd.f32 %v4871, %v4958
        %v4994 = vadd.f32 %v4872, %v4961
        %v4995 = vadd.f32 %v4873, %v4963
        %s4996 = sadd.s32 %s223, 6
        %s4997 = smul.u32 %s4996, 24
        %s4998 = scalar_lea.vmem %s193, %s4997 [#allocation2]
        %v4999 = vld [vmem:[%s4998] sm:$0xff]
        %v5000 = vld [vmem:[%s4998 + $0x8] sm:$0xff]
        %v5001 = vld [vmem:[%s4998 + $0x10] sm:$0xff]
        %v5002 = vld [vmem:[%s4998 + $0x18] sm:$0xff]
        %v5003 = vld [vmem:[%s4998 + $0x20] sm:$0xff]
        %v5004 = vld [vmem:[%s4998 + $0x28] sm:$0xff]
        %v5005 = vld [vmem:[%s4998 + $0x30] sm:$0xff]
        %v5006 = vld [vmem:[%s4998 + $0x38] sm:$0xff]
        %v5007 = vld [vmem:[%s4998 + $0x40] sm:$0xff]
        %v5008 = vld [vmem:[%s4998 + $0x48] sm:$0xff]
        %v5009 = vld [vmem:[%s4998 + $0x50] sm:$0xff]
        %v5010 = vld [vmem:[%s4998 + $0x58] sm:$0xff]
        %v5011 = vld [vmem:[%s4998 + $0x60] sm:$0xff]
        %v5012 = vld [vmem:[%s4998 + $0x68] sm:$0xff]
        %v5013 = vld [vmem:[%s4998 + $0x70] sm:$0xff]
        %v5014 = vld [vmem:[%s4998 + $0x78] sm:$0xff]
        %v5015 = vld [vmem:[%s4998 + $0x80] sm:$0xff]
        %v5016 = vld [vmem:[%s4998 + $0x88] sm:$0xff]
        %v5017 = vld [vmem:[%s4998 + $0x90] sm:$0xff]
        %v5018 = vld [vmem:[%s4998 + $0x98] sm:$0xff]
        %v5019 = vld [vmem:[%s4998 + $0xa0] sm:$0xff]
        %v5020 = vld [vmem:[%s4998 + $0xa8] sm:$0xff]
        %v5021 = vld [vmem:[%s4998 + $0xb0] sm:$0xff]
        %v5022 = vld [vmem:[%s4998 + $0xb8] sm:$0xff]
        %s5023 = scalar_lea.vmem [#allocation5], 48
        %v5024 = vld [vmem:[%s5023] sm:$0x1]
        %v5025 = vperm.slane %v5024, 0
        %v5026 = vmul.f32 %v4999, %v5025
        %v5027 = vmul.f32 %v5000, %v5025
        %v5028 = vmul.f32 %v5002, %v5025
        %v5029 = vmul.f32 %v5003, %v5025
        %v5030 = vmul.f32 %v5005, %v5025
        %v5031 = vmul.f32 %v5006, %v5025
        %v5032 = vmul.f32 %v5008, %v5025
        %v5033 = vmul.f32 %v5009, %v5025
        %v5034 = vmul.f32 %v5011, %v5025
        %v5035 = vmul.f32 %v5012, %v5025
        %v5036 = vmul.f32 %v5014, %v5025
        %v5037 = vmul.f32 %v5015, %v5025
        %v5038 = vmul.f32 %v5017, %v5025
        %v5039 = vmul.f32 %v5018, %v5025
        %v5040 = vmul.f32 %v5020, %v5025
        %v5041 = vmul.f32 %v5021, %v5025
        %v5042 = vadd.f32 %v4980, %v5026
        %v5043 = vadd.f32 %v4981, %v5027
        %v5044 = vadd.f32 %v4982, %v5028
        %v5045 = vadd.f32 %v4983, %v5029
        %v5046 = vadd.f32 %v4984, %v5030
        %v5047 = vadd.f32 %v4985, %v5031
        %v5048 = vadd.f32 %v4986, %v5032
        %v5049 = vadd.f32 %v4987, %v5033
        %v5050 = vadd.f32 %v4988, %v5034
        %v5051 = vadd.f32 %v4989, %v5035
        %v5052 = vadd.f32 %v4990, %v5036
        %v5053 = vadd.f32 %v4991, %v5037
        %v5054 = vadd.f32 %v4992, %v5038
        %v5055 = vadd.f32 %v4993, %v5039
        %v5056 = vadd.f32 %v4994, %v5040
        %v5057 = vadd.f32 %v4995, %v5041
        %v5058 = vld [vmem:[%s5023 + $0x1] sm:$0x1]
        %v5059 = vperm.slane %v5058, 0
        %v5060 = vmul.f32 %v4999, %v5059
        %v5061 = vmul.f32 %v5000, %v5059
        %v5062 = vmul.f32 %v5001, %v5059
        %v5063 = vmul.f32 %v5002, %v5059
        %v5064 = vmul.f32 %v5003, %v5059
        %v5065 = vmul.f32 %v5004, %v5059
        %v5066 = vmul.f32 %v5005, %v5059
        %v5067 = vmul.f32 %v5006, %v5059
        %v5068 = vmul.f32 %v5007, %v5059
        %v5069 = vmul.f32 %v5008, %v5059
        %v5070 = vmul.f32 %v5009, %v5059
        %v5071 = vmul.f32 %v5010, %v5059
        %v5072 = vmul.f32 %v5011, %v5059
        %v5073 = vmul.f32 %v5012, %v5059
        %v5074 = vmul.f32 %v5013, %v5059
        %v5075 = vmul.f32 %v5014, %v5059
        %v5076 = vmul.f32 %v5015, %v5059
        %v5077 = vmul.f32 %v5016, %v5059
        %v5078 = vmul.f32 %v5017, %v5059
        %v5079 = vmul.f32 %v5018, %v5059
        %v5080 = vmul.f32 %v5019, %v5059
        %v5081 = vmul.f32 %v5020, %v5059
        %v5082 = vmul.f32 %v5021, %v5059
        %v5083 = vmul.f32 %v5022, %v5059
        %v5108 = vrot.slane %v5060, 1
        %v5109 = vrot.slane %v5061, 1
        %v5110 = vsel %vm338, %v5108, %v5109
        %v5111 = vrot.slane %v5062, 1
        %v5112 = vsel %vm338, %v5109, %v5111
        %v5113 = vrot.slane %v5063, 1
        %v5114 = vrot.slane %v5064, 1
        %v5115 = vsel %vm338, %v5113, %v5114
        %v5116 = vrot.slane %v5065, 1
        %v5117 = vsel %vm338, %v5114, %v5116
        %v5118 = vrot.slane %v5066, 1
        %v5119 = vrot.slane %v5067, 1
        %v5120 = vsel %vm338, %v5118, %v5119
        %v5121 = vrot.slane %v5068, 1
        %v5122 = vsel %vm338, %v5119, %v5121
        %v5123 = vrot.slane %v5069, 1
        %v5124 = vrot.slane %v5070, 1
        %v5125 = vsel %vm338, %v5123, %v5124
        %v5126 = vrot.slane %v5071, 1
        %v5127 = vsel %vm338, %v5124, %v5126
        %v5128 = vrot.slane %v5072, 1
        %v5129 = vrot.slane %v5073, 1
        %v5130 = vsel %vm338, %v5128, %v5129
        %v5131 = vrot.slane %v5074, 1
        %v5132 = vsel %vm338, %v5129, %v5131
        %v5133 = vrot.slane %v5075, 1
        %v5134 = vrot.slane %v5076, 1
        %v5135 = vsel %vm338, %v5133, %v5134
        %v5136 = vrot.slane %v5077, 1
        %v5137 = vsel %vm338, %v5134, %v5136
        %v5138 = vrot.slane %v5078, 1
        %v5139 = vrot.slane %v5079, 1
        %v5140 = vsel %vm338, %v5138, %v5139
        %v5141 = vrot.slane %v5080, 1
        %v5142 = vsel %vm338, %v5139, %v5141
        %v5143 = vrot.slane %v5081, 1
        %v5144 = vrot.slane %v5082, 1
        %v5145 = vsel %vm338, %v5143, %v5144
        %v5146 = vrot.slane %v5083, 1
        %v5147 = vsel %vm338, %v5144, %v5146
        %v5164 = vadd.f32 %v5042, %v5110
        %v5165 = vadd.f32 %v5043, %v5112
        %v5166 = vadd.f32 %v5044, %v5115
        %v5167 = vadd.f32 %v5045, %v5117
        %v5168 = vadd.f32 %v5046, %v5120
        %v5169 = vadd.f32 %v5047, %v5122
        %v5170 = vadd.f32 %v5048, %v5125
        %v5171 = vadd.f32 %v5049, %v5127
        %v5172 = vadd.f32 %v5050, %v5130
        %v5173 = vadd.f32 %v5051, %v5132
        %v5174 = vadd.f32 %v5052, %v5135
        %v5175 = vadd.f32 %v5053, %v5137
        %v5176 = vadd.f32 %v5054, %v5140
        %v5177 = vadd.f32 %v5055, %v5142
        %v5178 = vadd.f32 %v5056, %v5145
        %v5179 = vadd.f32 %v5057, %v5147
        %v5180 = vld [vmem:[%s5023 + $0x2] sm:$0x1]
        %v5181 = vperm.slane %v5180, 0
        %v5182 = vmul.f32 %v4999, %v5181
        %v5183 = vmul.f32 %v5000, %v5181
        %v5184 = vmul.f32 %v5001, %v5181
        %v5185 = vmul.f32 %v5002, %v5181
        %v5186 = vmul.f32 %v5003, %v5181
        %v5187 = vmul.f32 %v5004, %v5181
        %v5188 = vmul.f32 %v5005, %v5181
        %v5189 = vmul.f32 %v5006, %v5181
        %v5190 = vmul.f32 %v5007, %v5181
        %v5191 = vmul.f32 %v5008, %v5181
        %v5192 = vmul.f32 %v5009, %v5181
        %v5193 = vmul.f32 %v5010, %v5181
        %v5194 = vmul.f32 %v5011, %v5181
        %v5195 = vmul.f32 %v5012, %v5181
        %v5196 = vmul.f32 %v5013, %v5181
        %v5197 = vmul.f32 %v5014, %v5181
        %v5198 = vmul.f32 %v5015, %v5181
        %v5199 = vmul.f32 %v5016, %v5181
        %v5200 = vmul.f32 %v5017, %v5181
        %v5201 = vmul.f32 %v5018, %v5181
        %v5202 = vmul.f32 %v5019, %v5181
        %v5203 = vmul.f32 %v5020, %v5181
        %v5204 = vmul.f32 %v5021, %v5181
        %v5205 = vmul.f32 %v5022, %v5181
        %v5230 = vrot.slane %v5182, 2
        %v5231 = vrot.slane %v5183, 2
        %v5232 = vsel %vm461, %v5230, %v5231
        %v5233 = vrot.slane %v5184, 2
        %v5234 = vsel %vm461, %v5231, %v5233
        %v5235 = vrot.slane %v5185, 2
        %v5236 = vrot.slane %v5186, 2
        %v5237 = vsel %vm461, %v5235, %v5236
        %v5238 = vrot.slane %v5187, 2
        %v5239 = vsel %vm461, %v5236, %v5238
        %v5240 = vrot.slane %v5188, 2
        %v5241 = vrot.slane %v5189, 2
        %v5242 = vsel %vm461, %v5240, %v5241
        %v5243 = vrot.slane %v5190, 2
        %v5244 = vsel %vm461, %v5241, %v5243
        %v5245 = vrot.slane %v5191, 2
        %v5246 = vrot.slane %v5192, 2
        %v5247 = vsel %vm461, %v5245, %v5246
        %v5248 = vrot.slane %v5193, 2
        %v5249 = vsel %vm461, %v5246, %v5248
        %v5250 = vrot.slane %v5194, 2
        %v5251 = vrot.slane %v5195, 2
        %v5252 = vsel %vm461, %v5250, %v5251
        %v5253 = vrot.slane %v5196, 2
        %v5254 = vsel %vm461, %v5251, %v5253
        %v5255 = vrot.slane %v5197, 2
        %v5256 = vrot.slane %v5198, 2
        %v5257 = vsel %vm461, %v5255, %v5256
        %v5258 = vrot.slane %v5199, 2
        %v5259 = vsel %vm461, %v5256, %v5258
        %v5260 = vrot.slane %v5200, 2
        %v5261 = vrot.slane %v5201, 2
        %v5262 = vsel %vm461, %v5260, %v5261
        %v5263 = vrot.slane %v5202, 2
        %v5264 = vsel %vm461, %v5261, %v5263
        %v5265 = vrot.slane %v5203, 2
        %v5266 = vrot.slane %v5204, 2
        %v5267 = vsel %vm461, %v5265, %v5266
        %v5268 = vrot.slane %v5205, 2
        %v5269 = vsel %vm461, %v5266, %v5268
        %v5286 = vadd.f32 %v5164, %v5232
        %v5287 = vadd.f32 %v5165, %v5234
        %v5288 = vadd.f32 %v5166, %v5237
        %v5289 = vadd.f32 %v5167, %v5239
        %v5290 = vadd.f32 %v5168, %v5242
        %v5291 = vadd.f32 %v5169, %v5244
        %v5292 = vadd.f32 %v5170, %v5247
        %v5293 = vadd.f32 %v5171, %v5249
        %v5294 = vadd.f32 %v5172, %v5252
        %v5295 = vadd.f32 %v5173, %v5254
        %v5296 = vadd.f32 %v5174, %v5257
        %v5297 = vadd.f32 %v5175, %v5259
        %v5298 = vadd.f32 %v5176, %v5262
        %v5299 = vadd.f32 %v5177, %v5264
        %v5300 = vadd.f32 %v5178, %v5267
        %v5301 = vadd.f32 %v5179, %v5269
        %v5302 = vld [vmem:[%s5023 + $0x3] sm:$0x1]
        %v5303 = vperm.slane %v5302, 0
        %v5304 = vmul.f32 %v4999, %v5303
        %v5305 = vmul.f32 %v5000, %v5303
        %v5306 = vmul.f32 %v5001, %v5303
        %v5307 = vmul.f32 %v5002, %v5303
        %v5308 = vmul.f32 %v5003, %v5303
        %v5309 = vmul.f32 %v5004, %v5303
        %v5310 = vmul.f32 %v5005, %v5303
        %v5311 = vmul.f32 %v5006, %v5303
        %v5312 = vmul.f32 %v5007, %v5303
        %v5313 = vmul.f32 %v5008, %v5303
        %v5314 = vmul.f32 %v5009, %v5303
        %v5315 = vmul.f32 %v5010, %v5303
        %v5316 = vmul.f32 %v5011, %v5303
        %v5317 = vmul.f32 %v5012, %v5303
        %v5318 = vmul.f32 %v5013, %v5303
        %v5319 = vmul.f32 %v5014, %v5303
        %v5320 = vmul.f32 %v5015, %v5303
        %v5321 = vmul.f32 %v5016, %v5303
        %v5322 = vmul.f32 %v5017, %v5303
        %v5323 = vmul.f32 %v5018, %v5303
        %v5324 = vmul.f32 %v5019, %v5303
        %v5325 = vmul.f32 %v5020, %v5303
        %v5326 = vmul.f32 %v5021, %v5303
        %v5327 = vmul.f32 %v5022, %v5303
        %v5352 = vrot.slane %v5304, 3
        %v5353 = vrot.slane %v5305, 3
        %v5354 = vsel %vm584, %v5352, %v5353
        %v5355 = vrot.slane %v5306, 3
        %v5356 = vsel %vm584, %v5353, %v5355
        %v5357 = vrot.slane %v5307, 3
        %v5358 = vrot.slane %v5308, 3
        %v5359 = vsel %vm584, %v5357, %v5358
        %v5360 = vrot.slane %v5309, 3
        %v5361 = vsel %vm584, %v5358, %v5360
        %v5362 = vrot.slane %v5310, 3
        %v5363 = vrot.slane %v5311, 3
        %v5364 = vsel %vm584, %v5362, %v5363
        %v5365 = vrot.slane %v5312, 3
        %v5366 = vsel %vm584, %v5363, %v5365
        %v5367 = vrot.slane %v5313, 3
        %v5368 = vrot.slane %v5314, 3
        %v5369 = vsel %vm584, %v5367, %v5368
        %v5370 = vrot.slane %v5315, 3
        %v5371 = vsel %vm584, %v5368, %v5370
        %v5372 = vrot.slane %v5316, 3
        %v5373 = vrot.slane %v5317, 3
        %v5374 = vsel %vm584, %v5372, %v5373
        %v5375 = vrot.slane %v5318, 3
        %v5376 = vsel %vm584, %v5373, %v5375
        %v5377 = vrot.slane %v5319, 3
        %v5378 = vrot.slane %v5320, 3
        %v5379 = vsel %vm584, %v5377, %v5378
        %v5380 = vrot.slane %v5321, 3
        %v5381 = vsel %vm584, %v5378, %v5380
        %v5382 = vrot.slane %v5322, 3
        %v5383 = vrot.slane %v5323, 3
        %v5384 = vsel %vm584, %v5382, %v5383
        %v5385 = vrot.slane %v5324, 3
        %v5386 = vsel %vm584, %v5383, %v5385
        %v5387 = vrot.slane %v5325, 3
        %v5388 = vrot.slane %v5326, 3
        %v5389 = vsel %vm584, %v5387, %v5388
        %v5390 = vrot.slane %v5327, 3
        %v5391 = vsel %vm584, %v5388, %v5390
        %v5408 = vadd.f32 %v5286, %v5354
        %v5409 = vadd.f32 %v5287, %v5356
        %v5410 = vadd.f32 %v5288, %v5359
        %v5411 = vadd.f32 %v5289, %v5361
        %v5412 = vadd.f32 %v5290, %v5364
        %v5413 = vadd.f32 %v5291, %v5366
        %v5414 = vadd.f32 %v5292, %v5369
        %v5415 = vadd.f32 %v5293, %v5371
        %v5416 = vadd.f32 %v5294, %v5374
        %v5417 = vadd.f32 %v5295, %v5376
        %v5418 = vadd.f32 %v5296, %v5379
        %v5419 = vadd.f32 %v5297, %v5381
        %v5420 = vadd.f32 %v5298, %v5384
        %v5421 = vadd.f32 %v5299, %v5386
        %v5422 = vadd.f32 %v5300, %v5389
        %v5423 = vadd.f32 %v5301, %v5391
        %v5424 = vld [vmem:[%s5023 + $0x4] sm:$0x1]
        %v5425 = vperm.slane %v5424, 0
        %v5426 = vmul.f32 %v4999, %v5425
        %v5427 = vmul.f32 %v5000, %v5425
        %v5428 = vmul.f32 %v5001, %v5425
        %v5429 = vmul.f32 %v5002, %v5425
        %v5430 = vmul.f32 %v5003, %v5425
        %v5431 = vmul.f32 %v5004, %v5425
        %v5432 = vmul.f32 %v5005, %v5425
        %v5433 = vmul.f32 %v5006, %v5425
        %v5434 = vmul.f32 %v5007, %v5425
        %v5435 = vmul.f32 %v5008, %v5425
        %v5436 = vmul.f32 %v5009, %v5425
        %v5437 = vmul.f32 %v5010, %v5425
        %v5438 = vmul.f32 %v5011, %v5425
        %v5439 = vmul.f32 %v5012, %v5425
        %v5440 = vmul.f32 %v5013, %v5425
        %v5441 = vmul.f32 %v5014, %v5425
        %v5442 = vmul.f32 %v5015, %v5425
        %v5443 = vmul.f32 %v5016, %v5425
        %v5444 = vmul.f32 %v5017, %v5425
        %v5445 = vmul.f32 %v5018, %v5425
        %v5446 = vmul.f32 %v5019, %v5425
        %v5447 = vmul.f32 %v5020, %v5425
        %v5448 = vmul.f32 %v5021, %v5425
        %v5449 = vmul.f32 %v5022, %v5425
        %v5474 = vrot.slane %v5426, 4
        %v5475 = vrot.slane %v5427, 4
        %v5476 = vsel %vm707, %v5474, %v5475
        %v5477 = vrot.slane %v5428, 4
        %v5478 = vsel %vm707, %v5475, %v5477
        %v5479 = vrot.slane %v5429, 4
        %v5480 = vrot.slane %v5430, 4
        %v5481 = vsel %vm707, %v5479, %v5480
        %v5482 = vrot.slane %v5431, 4
        %v5483 = vsel %vm707, %v5480, %v5482
        %v5484 = vrot.slane %v5432, 4
        %v5485 = vrot.slane %v5433, 4
        %v5486 = vsel %vm707, %v5484, %v5485
        %v5487 = vrot.slane %v5434, 4
        %v5488 = vsel %vm707, %v5485, %v5487
        %v5489 = vrot.slane %v5435, 4
        %v5490 = vrot.slane %v5436, 4
        %v5491 = vsel %vm707, %v5489, %v5490
        %v5492 = vrot.slane %v5437, 4
        %v5493 = vsel %vm707, %v5490, %v5492
        %v5494 = vrot.slane %v5438, 4
        %v5495 = vrot.slane %v5439, 4
        %v5496 = vsel %vm707, %v5494, %v5495
        %v5497 = vrot.slane %v5440, 4
        %v5498 = vsel %vm707, %v5495, %v5497
        %v5499 = vrot.slane %v5441, 4
        %v5500 = vrot.slane %v5442, 4
        %v5501 = vsel %vm707, %v5499, %v5500
        %v5502 = vrot.slane %v5443, 4
        %v5503 = vsel %vm707, %v5500, %v5502
        %v5504 = vrot.slane %v5444, 4
        %v5505 = vrot.slane %v5445, 4
        %v5506 = vsel %vm707, %v5504, %v5505
        %v5507 = vrot.slane %v5446, 4
        %v5508 = vsel %vm707, %v5505, %v5507
        %v5509 = vrot.slane %v5447, 4
        %v5510 = vrot.slane %v5448, 4
        %v5511 = vsel %vm707, %v5509, %v5510
        %v5512 = vrot.slane %v5449, 4
        %v5513 = vsel %vm707, %v5510, %v5512
        %v5530 = vadd.f32 %v5408, %v5476
        %v5531 = vadd.f32 %v5409, %v5478
        %v5532 = vadd.f32 %v5410, %v5481
        %v5533 = vadd.f32 %v5411, %v5483
        %v5534 = vadd.f32 %v5412, %v5486
        %v5535 = vadd.f32 %v5413, %v5488
        %v5536 = vadd.f32 %v5414, %v5491
        %v5537 = vadd.f32 %v5415, %v5493
        %v5538 = vadd.f32 %v5416, %v5496
        %v5539 = vadd.f32 %v5417, %v5498
        %v5540 = vadd.f32 %v5418, %v5501
        %v5541 = vadd.f32 %v5419, %v5503
        %v5542 = vadd.f32 %v5420, %v5506
        %v5543 = vadd.f32 %v5421, %v5508
        %v5544 = vadd.f32 %v5422, %v5511
        %v5545 = vadd.f32 %v5423, %v5513
        %v5546 = vld [vmem:[%s5023 + $0x5] sm:$0x1]
        %v5547 = vperm.slane %v5546, 0
        %v5548 = vmul.f32 %v4999, %v5547
        %v5549 = vmul.f32 %v5000, %v5547
        %v5550 = vmul.f32 %v5001, %v5547
        %v5551 = vmul.f32 %v5002, %v5547
        %v5552 = vmul.f32 %v5003, %v5547
        %v5553 = vmul.f32 %v5004, %v5547
        %v5554 = vmul.f32 %v5005, %v5547
        %v5555 = vmul.f32 %v5006, %v5547
        %v5556 = vmul.f32 %v5007, %v5547
        %v5557 = vmul.f32 %v5008, %v5547
        %v5558 = vmul.f32 %v5009, %v5547
        %v5559 = vmul.f32 %v5010, %v5547
        %v5560 = vmul.f32 %v5011, %v5547
        %v5561 = vmul.f32 %v5012, %v5547
        %v5562 = vmul.f32 %v5013, %v5547
        %v5563 = vmul.f32 %v5014, %v5547
        %v5564 = vmul.f32 %v5015, %v5547
        %v5565 = vmul.f32 %v5016, %v5547
        %v5566 = vmul.f32 %v5017, %v5547
        %v5567 = vmul.f32 %v5018, %v5547
        %v5568 = vmul.f32 %v5019, %v5547
        %v5569 = vmul.f32 %v5020, %v5547
        %v5570 = vmul.f32 %v5021, %v5547
        %v5571 = vmul.f32 %v5022, %v5547
        %v5596 = vrot.slane %v5548, 5
        %v5597 = vrot.slane %v5549, 5
        %v5598 = vsel %vm830, %v5596, %v5597
        %v5599 = vrot.slane %v5550, 5
        %v5600 = vsel %vm830, %v5597, %v5599
        %v5601 = vrot.slane %v5551, 5
        %v5602 = vrot.slane %v5552, 5
        %v5603 = vsel %vm830, %v5601, %v5602
        %v5604 = vrot.slane %v5553, 5
        %v5605 = vsel %vm830, %v5602, %v5604
        %v5606 = vrot.slane %v5554, 5
        %v5607 = vrot.slane %v5555, 5
        %v5608 = vsel %vm830, %v5606, %v5607
        %v5609 = vrot.slane %v5556, 5
        %v5610 = vsel %vm830, %v5607, %v5609
        %v5611 = vrot.slane %v5557, 5
        %v5612 = vrot.slane %v5558, 5
        %v5613 = vsel %vm830, %v5611, %v5612
        %v5614 = vrot.slane %v5559, 5
        %v5615 = vsel %vm830, %v5612, %v5614
        %v5616 = vrot.slane %v5560, 5
        %v5617 = vrot.slane %v5561, 5
        %v5618 = vsel %vm830, %v5616, %v5617
        %v5619 = vrot.slane %v5562, 5
        %v5620 = vsel %vm830, %v5617, %v5619
        %v5621 = vrot.slane %v5563, 5
        %v5622 = vrot.slane %v5564, 5
        %v5623 = vsel %vm830, %v5621, %v5622
        %v5624 = vrot.slane %v5565, 5
        %v5625 = vsel %vm830, %v5622, %v5624
        %v5626 = vrot.slane %v5566, 5
        %v5627 = vrot.slane %v5567, 5
        %v5628 = vsel %vm830, %v5626, %v5627
        %v5629 = vrot.slane %v5568, 5
        %v5630 = vsel %vm830, %v5627, %v5629
        %v5631 = vrot.slane %v5569, 5
        %v5632 = vrot.slane %v5570, 5
        %v5633 = vsel %vm830, %v5631, %v5632
        %v5634 = vrot.slane %v5571, 5
        %v5635 = vsel %vm830, %v5632, %v5634
        %v5652 = vadd.f32 %v5530, %v5598
        %v5653 = vadd.f32 %v5531, %v5600
        %v5654 = vadd.f32 %v5532, %v5603
        %v5655 = vadd.f32 %v5533, %v5605
        %v5656 = vadd.f32 %v5534, %v5608
        %v5657 = vadd.f32 %v5535, %v5610
        %v5658 = vadd.f32 %v5536, %v5613
        %v5659 = vadd.f32 %v5537, %v5615
        %v5660 = vadd.f32 %v5538, %v5618
        %v5661 = vadd.f32 %v5539, %v5620
        %v5662 = vadd.f32 %v5540, %v5623
        %v5663 = vadd.f32 %v5541, %v5625
        %v5664 = vadd.f32 %v5542, %v5628
        %v5665 = vadd.f32 %v5543, %v5630
        %v5666 = vadd.f32 %v5544, %v5633
        %v5667 = vadd.f32 %v5545, %v5635
        %v5668 = vld [vmem:[%s5023 + $0x6] sm:$0x1]
        %v5669 = vperm.slane %v5668, 0
        %v5670 = vmul.f32 %v4999, %v5669
        %v5671 = vmul.f32 %v5000, %v5669
        %v5672 = vmul.f32 %v5001, %v5669
        %v5673 = vmul.f32 %v5002, %v5669
        %v5674 = vmul.f32 %v5003, %v5669
        %v5675 = vmul.f32 %v5004, %v5669
        %v5676 = vmul.f32 %v5005, %v5669
        %v5677 = vmul.f32 %v5006, %v5669
        %v5678 = vmul.f32 %v5007, %v5669
        %v5679 = vmul.f32 %v5008, %v5669
        %v5680 = vmul.f32 %v5009, %v5669
        %v5681 = vmul.f32 %v5010, %v5669
        %v5682 = vmul.f32 %v5011, %v5669
        %v5683 = vmul.f32 %v5012, %v5669
        %v5684 = vmul.f32 %v5013, %v5669
        %v5685 = vmul.f32 %v5014, %v5669
        %v5686 = vmul.f32 %v5015, %v5669
        %v5687 = vmul.f32 %v5016, %v5669
        %v5688 = vmul.f32 %v5017, %v5669
        %v5689 = vmul.f32 %v5018, %v5669
        %v5690 = vmul.f32 %v5019, %v5669
        %v5691 = vmul.f32 %v5020, %v5669
        %v5692 = vmul.f32 %v5021, %v5669
        %v5693 = vmul.f32 %v5022, %v5669
        %v5718 = vrot.slane %v5670, 6
        %v5719 = vrot.slane %v5671, 6
        %v5720 = vsel %vm953, %v5718, %v5719
        %v5721 = vrot.slane %v5672, 6
        %v5722 = vsel %vm953, %v5719, %v5721
        %v5723 = vrot.slane %v5673, 6
        %v5724 = vrot.slane %v5674, 6
        %v5725 = vsel %vm953, %v5723, %v5724
        %v5726 = vrot.slane %v5675, 6
        %v5727 = vsel %vm953, %v5724, %v5726
        %v5728 = vrot.slane %v5676, 6
        %v5729 = vrot.slane %v5677, 6
        %v5730 = vsel %vm953, %v5728, %v5729
        %v5731 = vrot.slane %v5678, 6
        %v5732 = vsel %vm953, %v5729, %v5731
        %v5733 = vrot.slane %v5679, 6
        %v5734 = vrot.slane %v5680, 6
        %v5735 = vsel %vm953, %v5733, %v5734
        %v5736 = vrot.slane %v5681, 6
        %v5737 = vsel %vm953, %v5734, %v5736
        %v5738 = vrot.slane %v5682, 6
        %v5739 = vrot.slane %v5683, 6
        %v5740 = vsel %vm953, %v5738, %v5739
        %v5741 = vrot.slane %v5684, 6
        %v5742 = vsel %vm953, %v5739, %v5741
        %v5743 = vrot.slane %v5685, 6
        %v5744 = vrot.slane %v5686, 6
        %v5745 = vsel %vm953, %v5743, %v5744
        %v5746 = vrot.slane %v5687, 6
        %v5747 = vsel %vm953, %v5744, %v5746
        %v5748 = vrot.slane %v5688, 6
        %v5749 = vrot.slane %v5689, 6
        %v5750 = vsel %vm953, %v5748, %v5749
        %v5751 = vrot.slane %v5690, 6
        %v5752 = vsel %vm953, %v5749, %v5751
        %v5753 = vrot.slane %v5691, 6
        %v5754 = vrot.slane %v5692, 6
        %v5755 = vsel %vm953, %v5753, %v5754
        %v5756 = vrot.slane %v5693, 6
        %v5757 = vsel %vm953, %v5754, %v5756
        %v5774 = vadd.f32 %v5652, %v5720
        %v5775 = vadd.f32 %v5653, %v5722
        %v5776 = vadd.f32 %v5654, %v5725
        %v5777 = vadd.f32 %v5655, %v5727
        %v5778 = vadd.f32 %v5656, %v5730
        %v5779 = vadd.f32 %v5657, %v5732
        %v5780 = vadd.f32 %v5658, %v5735
        %v5781 = vadd.f32 %v5659, %v5737
        %v5782 = vadd.f32 %v5660, %v5740
        %v5783 = vadd.f32 %v5661, %v5742
        %v5784 = vadd.f32 %v5662, %v5745
        %v5785 = vadd.f32 %v5663, %v5747
        %v5786 = vadd.f32 %v5664, %v5750
        %v5787 = vadd.f32 %v5665, %v5752
        %v5788 = vadd.f32 %v5666, %v5755
        %v5789 = vadd.f32 %v5667, %v5757
        %5790 = vst [vmem:[%s221] sm:$0xff] %v5774
        %5791 = vst [vmem:[%s221 + $0x8] sm:$0xff] %v5775
        %5792 = vst [vmem:[%s221 + $0x10] sm:$0xff] %v5776
        %5793 = vst [vmem:[%s221 + $0x18] sm:$0xff] %v5777
        %5794 = vst [vmem:[%s221 + $0x20] sm:$0xff] %v5778
        %5795 = vst [vmem:[%s221 + $0x28] sm:$0xff] %v5779
        %5796 = vst [vmem:[%s221 + $0x30] sm:$0xff] %v5780
        %5797 = vst [vmem:[%s221 + $0x38] sm:$0xff] %v5781
        %5798 = vst [vmem:[%s221 + $0x40] sm:$0xff] %v5782
        %5799 = vst [vmem:[%s221 + $0x48] sm:$0xff] %v5783
        %5800 = vst [vmem:[%s221 + $0x50] sm:$0xff] %v5784
        %5801 = vst [vmem:[%s221 + $0x58] sm:$0xff] %v5785
        %5802 = vst [vmem:[%s221 + $0x60] sm:$0xff] %v5786
        %5803 = vst [vmem:[%s221 + $0x68] sm:$0xff] %v5787
        %5804 = vst [vmem:[%s221 + $0x70] sm:$0xff] %v5788
        %5805 = vst [vmem:[%s221 + $0x78] sm:$0xff] %v5789
        %s5806 = sand.u32 %s111, 1
        %s5807 = scalar_lea.sflag [#allocation4], %s5806
        %s5808 = sand.u32 %s111, 1
        %s5809 = smul.addr %s5808, 128
        %s5810 = scalar_lea.vmem [#allocation7], %s5809
        // Predicated region
        $region41: #{tpu_custom_call.1} parent=31 // pred_check
          %p5811 = pneg %p121
        $region42: #{tpu_custom_call.1} parent=31 // pred_check_branch
          %5813 = sbr.rel (%p5811) target = $region44
        $region43: #{tpu_custom_call.1} parent=31 // pred_region
          %s5814 = smul.u32 8, %s26
          %5816 = vsyncadd %s5807, 0
          %s5817 = smul.addr %s5814, 2
          %s5818 = smul.addr %s25, 32
          %s5819 = sadd.s32 %s5817, %s5818
          %s5820 = smul.addr %s5819, 8
          %s5821 = scalar_lea.hbm %s3, %s5820
          %s5822 = sshll.u32 %s5810, 4
          %s5823 = int_to_ptr.vmem [resolvable:$true] %s5822
          %s5824 = sshll.u32 %s5821, 4
          %s5825 = int_to_ptr.hbm [resolvable:$true] %s5824
          %5830 = dma.vmem_to_hbm [thread:$0]  %s5823, 2048, %s5825, %s5807, 128, 128, 8
        $region44: #{tpu_custom_call.1} parent=31 // pred_fallthru
          _
      $region32: #{tpu_custom_call.1} parent=5 // pred_fallthru
        _
      %p5831 = scmp.le.s32.totalorder 2, %s16
      // Predicated region
      $region45: #{tpu_custom_call.1} parent=5 // pred_check
        %p5832 = pneg %p5831
      $region46: #{tpu_custom_call.1} parent=5 // pred_check_branch
        %5834 = sbr.rel (%p5832) target = $region48
      $region47: #{tpu_custom_call.1} parent=5 // pred_region
        %s5835 = ssub.s32 %s16, 2
        // Predicated region
        $region49: #{tpu_custom_call.1} parent=47 // pred_check
          %p5836 = pneg %p127
        $region50: #{tpu_custom_call.1} parent=47 // pred_check_branch
          %5838 = sbr.rel (%p5836) target = $region52
        $region51: #{tpu_custom_call.1} parent=47 // pred_region
          %s5839 = sand.u32 %s112, 1
          %s5840 = scalar_lea.sflag [#allocation4], %s5839
          %s5841 = sand.u32 %s112, 1
          %s5842 = smul.addr %s5841, 128
          %s5843 = scalar_lea.vmem [#allocation7], %s5842
          %5845 = dma.done %s5840, 2048
        $region52: #{tpu_custom_call.1} parent=47 // pred_fallthru
          _
      $region48: #{tpu_custom_call.1} parent=5 // pred_fallthru
        _
    $region6: #{tpu_custom_call.1} parent=1 // loop_footer
      %s20 = sadd.s32 1, %s16
    $region7: #{tpu_custom_call.1} parent=1 // loop_footer_branch
      %15 = sbr.rel target = $region3
    $region8: #{tpu_custom_call.1} parent=1 // loop_exit
      _
    %5846 = vsyncpa [#allocation3], 1
    %s5847 = scalar_lea.sflag [#allocation3], 1
    %5848 = vsyncpa %s5847, 1
    %5849 = vsyncpa [#allocation6], 1
    %5850 = vsyncpa [#allocation4], 1
    %s5851 = scalar_lea.sflag [#allocation4], 1
    %5852 = vsyncpa %s5851, 1

</llo_original>
